<compile_context>
chip_gen: v5e
topology: v5e:2x2
jax: 0.10.0
libtpu: 0.0.40
codegen_flags: <defaults>
</compile_context>

<pallas_src>
import functools
import math

import jax
import jax.numpy as jnp
from jax.experimental import pallas as pl
from jax.experimental.pallas import tpu as pltpu

_EPS = 1e-5
# Safe on every generation: v5e/v6e have 128 MiB physical VMEM, v7x has 64 MiB.
_VMEM_LIMIT_BYTES = 32 * 1024 * 1024


def _ln(x, w, b, eps=_EPS):
    """LayerNorm over the last axis on in-register values (torch biased-variance)."""
    u = jnp.mean(x, axis=-1, keepdims=True)
    d = x - u
    s = jnp.mean(d * d, axis=-1, keepdims=True)
    return d * jax.lax.rsqrt(s + eps) * w + b


# --------------------------------------------------------------------------- front block
def _front_kernel(x_ref, cw_ref, cb_ref, w1_ref, vec_ref, o_ref):
    """conv1d(k=1) + mlp1(Linear->LN->ReLU) + residual, one batch row per grid step.

    x_ref: (1, T, C); cw: (C, H); cb: (1, H); w1: (H, H); vec: (3, H)=[b1, ln_w, ln_b].
    """
    xb = x_ref[0].astype(jnp.float32)                       # (T, C)
    cw = cw_ref[...].astype(jnp.float32)                    # (C, H)
    C = cw.shape[0]
    # K == C == 2: keep it off the MXU (the systolic array would pad K to 128/256);
    # it is just C lane-broadcast multiply-adds on the VPU.
    acc = xb[:, 0:1] * cw[0:1, :]
    for c in range(1, C):
        acc = acc + xb[:, c:c + 1] * cw[c:c + 1, :]
    xd = acc + cb_ref[...].astype(jnp.float32)              # (T, H)

    vec = vec_ref[...].astype(jnp.float32)
    h = jnp.dot(xd, w1_ref[...].astype(jnp.float32),
                preferred_element_type=jnp.float32) + vec[0:1, :]
    h = jnp.maximum(_ln(h, vec[1:2, :], vec[2:3, :]), 0.0)
    o_ref[0] = (h + xd).astype(o_ref.dtype)                 # fused residual


def front_block(x_btc, params):
    """x_btc: (B, T, C) -> x_dense (B, T, H)."""
    B, T, C = x_btc.shape
    H = params["conv_w_t"].shape[1]
    vec = jnp.stack([params["mlp1"]["b"], params["mlp1"]["ln_w"], params["mlp1"]["ln_b"]], 0)
    full = lambda b: (0, 0)
    return pl.pallas_call(
        _front_kernel,
        out_shape=jax.ShapeDtypeStruct((B, T, H), x_btc.dtype),
        grid_spec=pltpu.PrefetchScalarGridSpec(
            num_scalar_prefetch=0,
            grid=(B,),
            in_specs=[
                pl.BlockSpec((1, T, C), lambda b: (b, 0, 0)),
                pl.BlockSpec((C, H), full),
                pl.BlockSpec((1, H), full),
                pl.BlockSpec((H, H), full),
                pl.BlockSpec((3, H), full),
            ],
            out_specs=pl.BlockSpec((1, T, H), lambda b: (b, 0, 0)),
        ),
        compiler_params=pltpu.CompilerParams(
            dimension_semantics=("parallel",),               # batch rows split across TCs (v7x)
            vmem_limit_bytes=_VMEM_LIMIT_BYTES,
        ),
    )(x_btc, params["conv_w_t"], params["conv_b"].reshape(1, H),
      params["mlp1"]["w_t"], vec)


# --------------------------------------------------------------------------- transformer layer
def _layer_kernel(x_ref, inw_ref, inb_ref, outw_ref, outb_ref,
                  w1_ref, b1_ref, w2_ref, b2_ref, norms_ref, o_ref, *, nhead):
    """One full post-norm TransformerEncoderLayer for one batch row, all in VMEM."""
    xb = x_ref[0].astype(jnp.float32)                       # (T, H)
    T, H = xb.shape
    dh = H // nhead
    scale = 1.0 / math.sqrt(dh)

    qkv = jnp.dot(xb, inw_ref[...].astype(jnp.float32),
                  preferred_element_type=jnp.float32) + inb_ref[...].astype(jnp.float32)
    outw = outw_ref[...].astype(jnp.float32)                # (H, H)

    # concat(heads) @ W_out  ==  sum_h  o_h @ W_out[h*dh:(h+1)*dh, :]
    sa = outb_ref[...].astype(jnp.float32)                  # (1, H), broadcasts over T
    for h in range(nhead):                                  # static unroll over heads
        q = qkv[:, h * dh:(h + 1) * dh]
        k = qkv[:, H + h * dh:H + (h + 1) * dh]
        v = qkv[:, 2 * H + h * dh:2 * H + (h + 1) * dh]
        s = jax.lax.dot_general(q, k, (((1,), (1,)), ((), ())),
                                preferred_element_type=jnp.float32) * scale   # (T, T)
        s = s - jnp.max(s, axis=-1, keepdims=True)
        p = jnp.exp(s)
        p = p / jnp.sum(p, axis=-1, keepdims=True)
        o_h = jnp.dot(p, v, preferred_element_type=jnp.float32)               # (T, dh)
        sa = sa + jnp.dot(o_h, outw[h * dh:(h + 1) * dh, :],
                          preferred_element_type=jnp.float32)

    norms = norms_ref[...].astype(jnp.float32)               # (4, H): n1w, n1b, n2w, n2b
    x1 = _ln(xb + sa, norms[0:1, :], norms[1:2, :])
    ff = jnp.maximum(jnp.dot(x1, w1_ref[...].astype(jnp.float32),
                             preferred_element_type=jnp.float32)
                     + b1_ref[...].astype(jnp.float32), 0.0)
    ff = jnp.dot(ff, w2_ref[...].astype(jnp.float32),
                 preferred_element_type=jnp.float32) + b2_ref[...].astype(jnp.float32)
    o_ref[0] = _ln(x1 + ff, norms[2:3, :], norms[3:4, :]).astype(o_ref.dtype)


def transformer_layer(x, p, nhead):
    B, T, H = x.shape
    norms = jnp.stack([p["norm1_w"], p["norm1_b"], p["norm2_w"], p["norm2_b"]], 0)
    full = lambda b: (0, 0)
    kern = functools.partial(_layer_kernel, nhead=nhead)
    return pl.pallas_call(
        kern,
        out_shape=jax.ShapeDtypeStruct((B, T, H), x.dtype),
        grid_spec=pltpu.PrefetchScalarGridSpec(
            num_scalar_prefetch=0,
            grid=(B,),
            in_specs=[
                pl.BlockSpec((1, T, H), lambda b: (b, 0, 0)),
                pl.BlockSpec((H, 3 * H), full),
                pl.BlockSpec((1, 3 * H), full),
                pl.BlockSpec((H, H), full),
                pl.BlockSpec((1, H), full),
                pl.BlockSpec((H, H), full),
                pl.BlockSpec((1, H), full),
                pl.BlockSpec((H, H), full),
                pl.BlockSpec((1, H), full),
                pl.BlockSpec((4, H), full),
            ],
            out_specs=pl.BlockSpec((1, T, H), lambda b: (b, 0, 0)),
        ),
        compiler_params=pltpu.CompilerParams(
            dimension_semantics=("parallel",),
            vmem_limit_bytes=_VMEM_LIMIT_BYTES,
        ),
    )(x, p["in_proj_w_t"], p["in_proj_b"].reshape(1, 3 * H),
      p["out_proj_w_t"], p["out_proj_b"].reshape(1, H),
      p["lin1_w_t"], p["lin1_b"].reshape(1, H),
      p["lin2_w_t"], p["lin2_b"].reshape(1, H), norms)


# --------------------------------------------------------------------------- GRU + final MLP
def _gru_tail_kernel(xe_ref, xd_ref, wih_ref, whh_ref, bb_ref, mw_ref, mv_ref,
                     o_ref, st_ref, gx_scr, out_scr):
    """Fused (xe + xd) residual -> GRU recurrence -> mlp(Linear->LN->ReLU) + residual.

    One batch row per grid step. gx for all timesteps is one MXU pass; the recurrence
    runs as an unrolled in-kernel fori_loop (no per-timestep grid/launch overhead).
    """
    _, T, H = o_ref.shape
    x = xe_ref[0].astype(jnp.float32) + xd_ref[0].astype(jnp.float32)   # (T, H) residual
    wih = wih_ref[...].astype(jnp.float32)                  # (H, 3H)
    whh = whh_ref[...].astype(jnp.float32)                  # (H, 3H)
    bih = bb_ref[0:1, :].astype(jnp.float32)                # (1, 3H)
    bhh = bb_ref[1:2, :].astype(jnp.float32)

    # All timesteps' input gates at once: x @ W_ih^T + b_ih  (torch gate order r,z,n).
    gx_scr[...] = jnp.dot(x, wih, preferred_element_type=jnp.float32) + bih   # (T, 3H)

    def step(t, h):                                         # h: (1, H) f32 carry
        gxt = gx_scr[pl.ds(t, 1), :]                        # (1, 3H)
        gh = jnp.dot(h, whh, preferred_element_type=jnp.float32) + bhh
        r = jax.nn.sigmoid(gxt[:, 0:H] + gh[:, 0:H])
        z = jax.nn.sigmoid(gxt[:, H:2 * H] + gh[:, H:2 * H])
        n = jnp.tanh(gxt[:, 2 * H:3 * H] + r * gh[:, 2 * H:3 * H])
        h_new = (1.0 - z) * n + z * h
        out_scr[pl.ds(t, 1), :] = h_new
        return h_new

    h_last = jax.lax.fori_loop(0, T, step, jnp.zeros((1, H), jnp.float32), unroll=True)
    st_ref[0] = h_last.astype(st_ref.dtype)                 # hn.squeeze(0) == last output

    out = out_scr[...]                                      # (T, H) f32 GRU outputs
    mv = mv_ref[...].astype(jnp.float32)                    # (3, H): [b, ln_w, ln_b]
    mh = jnp.dot(out, mw_ref[...].astype(jnp.float32),
                 preferred_element_type=jnp.float32) + mv[0:1, :]
    mh = jnp.maximum(_ln(mh, mv[1:2, :], mv[2:3, :]), 0.0)
    o_ref[0] = (mh + out).astype(o_ref.dtype)               # fused residual


def gru_mlp_block(xe, xd, gp, mp):
    """(xe + xd) -> GRU -> mlp + residual. Returns (x_encoded (B,T,H), x_state (B,H))."""
    B, T, H = xe.shape
    bb = jnp.stack([gp["b_ih"], gp["b_hh"]], 0)             # (2, 3H)
    mv = jnp.stack([mp["b"], mp["ln_w"], mp["ln_b"]], 0)    # (3, H)
    full = lambda b: (0, 0)
    enc, st = pl.pallas_call(
        _gru_tail_kernel,
        out_shape=(jax.ShapeDtypeStruct((B, T, H), xe.dtype),
                   jax.ShapeDtypeStruct((B, 1, H), xe.dtype)),
        grid_spec=pltpu.PrefetchScalarGridSpec(
            num_scalar_prefetch=0,
            grid=(B,),
            in_specs=[
                pl.BlockSpec((1, T, H), lambda b: (b, 0, 0)),
                pl.BlockSpec((1, T, H), lambda b: (b, 0, 0)),
                pl.BlockSpec((H, 3 * H), full),
                pl.BlockSpec((H, 3 * H), full),
                pl.BlockSpec((2, 3 * H), full),
                pl.BlockSpec((H, H), full),
                pl.BlockSpec((3, H), full),
            ],
            out_specs=(pl.BlockSpec((1, T, H), lambda b: (b, 0, 0)),
                       pl.BlockSpec((1, 1, H), lambda b: (b, 0, 0))),
            scratch_shapes=[pltpu.VMEM((T, 3 * H), jnp.float32),
                            pltpu.VMEM((T, H), jnp.float32)],
        ),
        compiler_params=pltpu.CompilerParams(
            dimension_semantics=("parallel",),               # batch recurrences are independent
            vmem_limit_bytes=_VMEM_LIMIT_BYTES,
        ),
    )(xe, xd, gp["w_ih_t"], gp["w_hh_t"], bb, mp["w_t"], mv)
    return enc, st[:, 0, :]


# --------------------------------------------------------------------------- module forward
def temperal_encoder_forward(x, params, nhead):
    """Pallas forward of Temperal_Encoder: x (B, 2, T) -> (x_encoded (B,T,H), x_state (B,H))."""
    # conv1d(k=1) acts per-(b,t) on the 2 channels; present the (tiny) input channel-last.
    x_btc = jnp.transpose(x, (0, 2, 1))                     # (B, T, 2)
    xd = front_block(x_btc, params)                         # conv + mlp1 + residual
    xe = xd
    for lp in params["layers"]:
        xe = transformer_layer(xe, lp, nhead)               # one fused kernel per layer
    # The (xe + xd) residual is fused into the GRU kernel.
    return gru_mlp_block(xe, xd, params["gru"], params["mlp"])
    # TODO(synk): with hidden=32 every store uses <=32 of 128 lanes; a lane-dense repack
    # (folding 4 row-groups into lanes) would further speed the store path for larger models.


# --------------------------------------------------------------------------- pure-JAX reference
def _layer_norm_ref(x, w, b, eps=_EPS):
    u = jnp.mean(x, axis=-1, keepdims=True)
    s = jnp.mean((x - u) ** 2, axis=-1, keepdims=True)
    return w * ((x - u) / jnp.sqrt(s + eps)) + b


def _mlp_ref(x, p):
    h = x @ p["w_t"] + p["b"]
    return jnp.maximum(_layer_norm_ref(h, p["ln_w"], p["ln_b"]), 0.0)


def _transformer_layer_ref(x, p, nhead):
    B, T, H = x.shape
    dh = H // nhead
    qkv = x @ p["in_proj_w_t"] + p["in_proj_b"]
    q, k, v = jnp.split(qkv, 3, axis=-1)

    def sh(a):
        return a.reshape(B, T, nhead, dh).transpose(0, 2, 1, 3)

    q, k, v = sh(q), sh(k), sh(v)
    s = jnp.einsum("bhtd,bhsd->bhts", q, k) / math.sqrt(dh)
    s = s - jnp.max(s, axis=-1, keepdims=True)
    pw = jnp.exp(s)
    pw = pw / jnp.sum(pw, axis=-1, keepdims=True)
    o = jnp.einsum("bhts,bhsd->bhtd", pw, v)
    o = o.transpose(0, 2, 1, 3).reshape(B, T, H)
    sa = o @ p["out_proj_w_t"] + p["out_proj_b"]
    x = _layer_norm_ref(x + sa, p["norm1_w"], p["norm1_b"])
    h = jnp.maximum(x @ p["lin1_w_t"] + p["lin1_b"], 0.0)
    h = h @ p["lin2_w_t"] + p["lin2_b"]
    return _layer_norm_ref(x + h, p["norm2_w"], p["norm2_b"])


def _gru_ref(x_bth, g):
    B, T, H = x_bth.shape

    def step(h, x_t):
        gx = x_t @ g["w_ih_t"] + g["b_ih"]
        gh = h @ g["w_hh_t"] + g["b_hh"]
        r = jax.nn.sigmoid(gx[:, 0:H] + gh[:, 0:H])
        z = jax.nn.sigmoid(gx[:, H:2 * H] + gh[:, H:2 * H])
        n = jnp.tanh(gx[:, 2 * H:3 * H] + r * gh[:, 2 * H:3 * H])
        h_new = (1.0 - z) * n + z * h
        return h_new, h_new

    h_t, ys = jax.lax.scan(step, jnp.zeros((B, H), x_bth.dtype), x_bth.transpose(1, 0, 2))
    return ys.transpose(1, 0, 2), h_t


def temperal_encoder_ref(x, params, nhead):
    xd = jnp.einsum("bct,ch->bth", x, params["conv_w_t"]) + params["conv_b"]
    xd = _mlp_ref(xd, params["mlp1"]) + xd
    xe = xd
    for lp in params["layers"]:
        xe = _transformer_layer_ref(xe, lp, nhead)
    x_in = xe + xd
    out, h_t = _gru_ref(x_in, params["gru"])
    return _mlp_ref(out, params["mlp"]) + out, h_t


# --------------------------------------------------------------------------- params
def init_params(key, hidden, nhead, nlayers, in_channels=2):
    # TODO(synk): torch's kaiming/xavier/orthogonal initializers are replaced by simple
    # deterministic jax.random scaled normals (forward semantics are parameter-agnostic).
    def nrm(k, shape, scale):
        return scale * jax.random.normal(k, shape, jnp.float32)

    keys = jax.random.split(key, 8 + 4 * nlayers)
    ki = iter(keys)

    def mlp_params(k):
        k1, k2, k3, k4 = jax.random.split(k, 4)
        return {
            "w_t": nrm(k1, (hidden, hidden), 1.0 / math.sqrt(hidden)),
            "b": nrm(k2, (hidden,), 0.05),
            "ln_w": 1.0 + nrm(k3, (hidden,), 0.05),
            "ln_b": nrm(k4, (hidden,), 0.05),
        }

    def layer_params(k):
        ks = jax.random.split(k, 12)
        s = 1.0 / math.sqrt(hidden)
        return {
            "in_proj_w_t": nrm(ks[0], (hidden, 3 * hidden), s),
            "in_proj_b": nrm(ks[1], (3 * hidden,), 0.05),
            "out_proj_w_t": nrm(ks[2], (hidden, hidden), s),
            "out_proj_b": nrm(ks[3], (hidden,), 0.05),
            "lin1_w_t": nrm(ks[4], (hidden, hidden), s),
            "lin1_b": nrm(ks[5], (hidden,), 0.05),
            "lin2_w_t": nrm(ks[6], (hidden, hidden), s),
            "lin2_b": nrm(ks[7], (hidden,), 0.05),
            "norm1_w": 1.0 + nrm(ks[8], (hidden,), 0.05),
            "norm1_b": nrm(ks[9], (hidden,), 0.05),
            "norm2_w": 1.0 + nrm(ks[10], (hidden,), 0.05),
            "norm2_b": nrm(ks[11], (hidden,), 0.05),
        }

    return {
        "conv_w_t": nrm(next(ki), (in_channels, hidden), math.sqrt(2.0 / hidden)),
        "conv_b": jnp.zeros((hidden,), jnp.float32),
        "mlp1": mlp_params(next(ki)),
        "mlp": mlp_params(next(ki)),
        "layers": [layer_params(next(ki)) for _ in range(nlayers)],
        "gru": {
            "w_ih_t": nrm(next(ki), (hidden, 3 * hidden), 1.0 / math.sqrt(hidden)),
            "w_hh_t": nrm(next(ki), (hidden, 3 * hidden), 1.0 / math.sqrt(hidden)),
            "b_ih": nrm(next(ki), (3 * hidden,), 0.05),
            "b_hh": nrm(next(ki), (3 * hidden,), 0.05),
        },
    }


if __name__ == "__main__":
    # Small shapes consistent with Temperal_Encoder.forward: x is (batch, 2, seq_len).
    batch, in_channels, seq_len = 2, 2, 8
    hidden, nhead, nlayers = 32, 2, 1

    key = jax.random.PRNGKey(0)
    kx, kp = jax.random.split(key)
    x = jax.random.normal(kx, (batch, in_channels, seq_len), dtype=jnp.float32)
    params = init_params(kp, hidden, nhead, nlayers, in_channels)

    fwd = jax.jit(functools.partial(temperal_encoder_forward, nhead=nhead))
    x_encoded, x_state = fwd(x, params)
    x_encoded = jax.block_until_ready(x_encoded)
    x_state = jax.block_until_ready(x_state)

    ref_encoded, ref_state = temperal_encoder_ref(x, params, nhead)

    assert x_encoded.shape == (batch, seq_len, hidden) and x_encoded.dtype == jnp.float32
    assert x_state.shape == (batch, hidden)
    err1 = float(jnp.max(jnp.abs(x_encoded - ref_encoded)))
    err2 = float(jnp.max(jnp.abs(x_state - ref_state)))
    assert err1 < 2e-3 and err2 < 2e-3, (err1, err2)

    print("KERNEL_OK")
</pallas_src>

<mosaic_0001>
module attributes {stable_mosaic.version = 11 : i64} {
  func.func @_front_kernel(%arg0: i32, %arg1: memref<1x8x2xf32, #tpu.memory_space<vmem>>, %arg2: memref<2x32xf32, #tpu.memory_space<vmem>>, %arg3: memref<1x32xf32, #tpu.memory_space<vmem>>, %arg4: memref<32x32xf32, #tpu.memory_space<vmem>>, %arg5: memref<3x32xf32, #tpu.memory_space<vmem>>, %arg6: memref<1x8x32xf32, #tpu.memory_space<vmem>>) attributes {dimension_semantics = [#tpu.dimension_semantics<parallel>], iteration_bounds = array<i64: 2>, scalar_prefetch = 0 : i64, scratch_operands = 0 : i64, tpu.core_type = #tpu.core_type<tc>, window_params = [{transform_indices = @transform_0, window_bounds = array<i64: 1, 8, 2>}, {pipeline_mode = #tpu.pipeline_mode<synchronous>, transform_indices = @transform_1, window_bounds = array<i64: 2, 32>}, {pipeline_mode = #tpu.pipeline_mode<synchronous>, transform_indices = @transform_2, window_bounds = array<i64: 1, 32>}, {pipeline_mode = #tpu.pipeline_mode<synchronous>, transform_indices = @transform_3, window_bounds = array<i64: 32, 32>}, {pipeline_mode = #tpu.pipeline_mode<synchronous>, transform_indices = @transform_4, window_bounds = array<i64: 3, 32>}, {transform_indices = @transform_5, window_bounds = array<i64: 1, 8, 32>}]} {
    %c0 = arith.constant 0 : index
    %c0_0 = arith.constant 0 : index
    %c0_1 = arith.constant 0 : index
    %0 = vector.load %arg1[%c0, %c0_0, %c0_1] : memref<1x8x2xf32, #tpu.memory_space<vmem>>, vector<1x8x2xf32>
    %1 = vector.shape_cast %0 : vector<1x8x2xf32> to vector<8x2xf32>
    %c0_2 = arith.constant 0 : index
    %c0_3 = arith.constant 0 : index
    %2 = vector.load %arg2[%c0_2, %c0_3] : memref<2x32xf32, #tpu.memory_space<vmem>>, vector<2x32xf32>
    %3 = vector.extract_strided_slice %1 {offsets = [0, 0], sizes = [8, 1], strides = [1, 1]} : vector<8x2xf32> to vector<8x1xf32>
    %4 = vector.extract_strided_slice %2 {offsets = [0, 0], sizes = [1, 32], strides = [1, 1]} : vector<2x32xf32> to vector<1x32xf32>
    %5 = vector.broadcast %3 : vector<8x1xf32> to vector<8x32xf32>
    %6 = vector.broadcast %4 : vector<1x32xf32> to vector<8x32xf32>
    %7 = arith.mulf %5, %6 : vector<8x32xf32>
    %8 = vector.extract_strided_slice %1 {offsets = [0, 1], sizes = [8, 1], strides = [1, 1]} : vector<8x2xf32> to vector<8x1xf32>
    %9 = vector.extract_strided_slice %2 {offsets = [1, 0], sizes = [1, 32], strides = [1, 1]} : vector<2x32xf32> to vector<1x32xf32>
    %10 = vector.broadcast %8 : vector<8x1xf32> to vector<8x32xf32>
    %11 = vector.broadcast %9 : vector<1x32xf32> to vector<8x32xf32>
    %12 = arith.mulf %10, %11 : vector<8x32xf32>
    %13 = arith.addf %7, %12 : vector<8x32xf32>
    %c0_4 = arith.constant 0 : index
    %c0_5 = arith.constant 0 : index
    %14 = vector.load %arg3[%c0_4, %c0_5] : memref<1x32xf32, #tpu.memory_space<vmem>>, vector<1x32xf32>
    %15 = vector.broadcast %14 : vector<1x32xf32> to vector<8x32xf32>
    %16 = arith.addf %13, %15 : vector<8x32xf32>
    %c0_6 = arith.constant 0 : index
    %c0_7 = arith.constant 0 : index
    %17 = vector.load %arg5[%c0_6, %c0_7] : memref<3x32xf32, #tpu.memory_space<vmem>>, vector<3x32xf32>
    %c0_8 = arith.constant 0 : index
    %c0_9 = arith.constant 0 : index
    %18 = vector.load %arg4[%c0_8, %c0_9] : memref<32x32xf32, #tpu.memory_space<vmem>>, vector<32x32xf32>
    %cst = arith.constant dense<0.000000e+00> : vector<8x32xf32>
    %19 = tpu.matmul %16, %18, %cst {dimension_numbers = #tpu.dot_dimension_numbers<[1], [0], [0], [1], [0, 0, 1, 1], [], []>} : vector<8x32xf32>, vector<32x32xf32>, vector<8x32xf32> -> vector<8x32xf32>
    %20 = vector.extract_strided_slice %17 {offsets = [0, 0], sizes = [1, 32], strides = [1, 1]} : vector<3x32xf32> to vector<1x32xf32>
    %21 = vector.broadcast %20 : vector<1x32xf32> to vector<8x32xf32>
    %22 = arith.addf %19, %21 : vector<8x32xf32>
    %23 = vector.extract_strided_slice %17 {offsets = [1, 0], sizes = [1, 32], strides = [1, 1]} : vector<3x32xf32> to vector<1x32xf32>
    %24 = vector.extract_strided_slice %17 {offsets = [2, 0], sizes = [1, 32], strides = [1, 1]} : vector<3x32xf32> to vector<1x32xf32>
    %cst_10 = arith.constant dense<0.000000e+00> : vector<8xf32>
    %25 = vector.multi_reduction <add>, %22, %cst_10 [1] : vector<8x32xf32> to vector<8xf32>
    %26 = vector.shape_cast %25 : vector<8xf32> to vector<8x1xf32>
    %cst_11 = arith.constant 3.200000e+01 : f32
    %27 = vector.broadcast %cst_11 : f32 to vector<8x1xf32>
    %28 = arith.divf %26, %27 : vector<8x1xf32>
    %29 = vector.broadcast %28 : vector<8x1xf32> to vector<8x32xf32>
    %30 = arith.subf %22, %29 : vector<8x32xf32>
    %31 = arith.mulf %30, %30 : vector<8x32xf32>
    %cst_12 = arith.constant dense<0.000000e+00> : vector<8xf32>
    %32 = vector.multi_reduction <add>, %31, %cst_12 [1] : vector<8x32xf32> to vector<8xf32>
    %33 = vector.shape_cast %32 : vector<8xf32> to vector<8x1xf32>
    %cst_13 = arith.constant 3.200000e+01 : f32
    %34 = vector.broadcast %cst_13 : f32 to vector<8x1xf32>
    %35 = arith.divf %33, %34 : vector<8x1xf32>
    %cst_14 = arith.constant 9.99999974E-6 : f32
    %36 = vector.broadcast %cst_14 : f32 to vector<8x1xf32>
    %37 = arith.addf %35, %36 : vector<8x1xf32>
    %38 = math.rsqrt %37 : vector<8x1xf32>
    %39 = vector.broadcast %38 : vector<8x1xf32> to vector<8x32xf32>
    %40 = arith.mulf %30, %39 : vector<8x32xf32>
    %41 = vector.broadcast %23 : vector<1x32xf32> to vector<8x32xf32>
    %42 = arith.mulf %40, %41 : vector<8x32xf32>
    %43 = vector.broadcast %24 : vector<1x32xf32> to vector<8x32xf32>
    %44 = arith.addf %42, %43 : vector<8x32xf32>
    %cst_15 = arith.constant 0.000000e+00 : f32
    %45 = vector.broadcast %cst_15 : f32 to vector<8x32xf32>
    %46 = arith.maximumf %44, %45 : vector<8x32xf32>
    %47 = arith.addf %46, %16 : vector<8x32xf32>
    %c0_16 = arith.constant 0 : index
    %c0_17 = arith.constant 0 : index
    %c0_18 = arith.constant 0 : index
    %48 = vector.load %arg6[%c0_16, %c0_17, %c0_18] : memref<1x8x32xf32, #tpu.memory_space<vmem>>, vector<1x8x32xf32>
    %49 = vector.shape_cast %48 : vector<1x8x32xf32> to vector<8x32xf32>
    %50 = vector.shape_cast %47 : vector<8x32xf32> to vector<1x8x32xf32>
    tpu.vector_store %arg6[%c0_16, %c0_17, %c0_18], %50 {strides = array<i32>} : memref<1x8x32xf32, #tpu.memory_space<vmem>>, vector<1x8x32xf32>,
    return
  }
  func.func @transform_0(%arg0: i32) -> (i32, i32, i32) {
    %c0_i32 = arith.constant 0 : i32
    %c0_i32_0 = arith.constant 0 : i32
    %c0_i32_1 = arith.constant 0 : i32
    return %arg0, %c0_i32, %c0_i32_0 : i32, i32, i32
  }
  func.func @transform_1(%arg0: i32) -> (i32, i32) {
    %c0_i32 = arith.constant 0 : i32
    %c0_i32_0 = arith.constant 0 : i32
    %c0_i32_1 = arith.constant 0 : i32
    return %c0_i32, %c0_i32_0 : i32, i32
  }
  func.func @transform_2(%arg0: i32) -> (i32, i32) {
    %c0_i32 = arith.constant 0 : i32
    %c0_i32_0 = arith.constant 0 : i32
    %c0_i32_1 = arith.constant 0 : i32
    return %c0_i32, %c0_i32_0 : i32, i32
  }
  func.func @transform_3(%arg0: i32) -> (i32, i32) {
    %c0_i32 = arith.constant 0 : i32
    %c0_i32_0 = arith.constant 0 : i32
    %c0_i32_1 = arith.constant 0 : i32
    return %c0_i32, %c0_i32_0 : i32, i32
  }
  func.func @transform_4(%arg0: i32) -> (i32, i32) {
    %c0_i32 = arith.constant 0 : i32
    %c0_i32_0 = arith.constant 0 : i32
    %c0_i32_1 = arith.constant 0 : i32
    return %c0_i32, %c0_i32_0 : i32, i32
  }
  func.func @transform_5(%arg0: i32) -> (i32, i32, i32) {
    %c0_i32 = arith.constant 0 : i32
    %c0_i32_0 = arith.constant 0 : i32
    %c0_i32_1 = arith.constant 0 : i32
    return %arg0, %c0_i32, %c0_i32_0 : i32, i32, i32
  }
}

module attributes {stable_mosaic.version = 11 : i64} {
  func.func @_layer_kernel(%arg0: i32, %arg1: memref<1x8x32xf32, #tpu.memory_space<vmem>>, %arg2: memref<32x96xf32, #tpu.memory_space<vmem>>, %arg3: memref<1x96xf32, #tpu.memory_space<vmem>>, %arg4: memref<32x32xf32, #tpu.memory_space<vmem>>, %arg5: memref<1x32xf32, #tpu.memory_space<vmem>>, %arg6: memref<32x32xf32, #tpu.memory_space<vmem>>, %arg7: memref<1x32xf32, #tpu.memory_space<vmem>>, %arg8: memref<32x32xf32, #tpu.memory_space<vmem>>, %arg9: memref<1x32xf32, #tpu.memory_space<vmem>>, %arg10: memref<4x32xf32, #tpu.memory_space<vmem>>, %arg11: memref<1x8x32xf32, #tpu.memory_space<vmem>>) attributes {dimension_semantics = [#tpu.dimension_semantics<parallel>], iteration_bounds = array<i64: 2>, scalar_prefetch = 0 : i64, scratch_operands = 0 : i64, tpu.core_type = #tpu.core_type<tc>, window_params = [{transform_indices = @transform_0, window_bounds = array<i64: 1, 8, 32>}, {pipeline_mode = #tpu.pipeline_mode<synchronous>, transform_indices = @transform_1, window_bounds = array<i64: 32, 96>}, {pipeline_mode = #tpu.pipeline_mode<synchronous>, transform_indices = @transform_2, window_bounds = array<i64: 1, 96>}, {pipeline_mode = #tpu.pipeline_mode<synchronous>, transform_indices = @transform_3, window_bounds = array<i64: 32, 32>}, {pipeline_mode = #tpu.pipeline_mode<synchronous>, transform_indices = @transform_4, window_bounds = array<i64: 1, 32>}, {pipeline_mode = #tpu.pipeline_mode<synchronous>, transform_indices = @transform_5, window_bounds = array<i64: 32, 32>}, {pipeline_mode = #tpu.pipeline_mode<synchronous>, transform_indices = @transform_6, window_bounds = array<i64: 1, 32>}, {pipeline_mode = #tpu.pipeline_mode<synchronous>, transform_indices = @transform_7, window_bounds = array<i64: 32, 32>}, {pipeline_mode = #tpu.pipeline_mode<synchronous>, transform_indices = @transform_8, window_bounds = array<i64: 1, 32>}, {pipeline_mode = #tpu.pipeline_mode<synchronous>, transform_indices = @transform_9, window_bounds = array<i64: 4, 32>}, {transform_indices = @transform_10, window_bounds = array<i64: 1, 8, 32>}]} {
    %c0 = arith.constant 0 : index
    %c0_0 = arith.constant 0 : index
    %c0_1 = arith.constant 0 : index
    %0 = vector.load %arg1[%c0, %c0_0, %c0_1] : memref<1x8x32xf32, #tpu.memory_space<vmem>>, vector<1x8x32xf32>
    %1 = vector.shape_cast %0 : vector<1x8x32xf32> to vector<8x32xf32>
    %c0_2 = arith.constant 0 : index
    %c0_3 = arith.constant 0 : index
    %2 = vector.load %arg2[%c0_2, %c0_3] : memref<32x96xf32, #tpu.memory_space<vmem>>, vector<32x96xf32>
    %cst = arith.constant dense<0.000000e+00> : vector<8x96xf32>
    %3 = tpu.matmul %1, %2, %cst {dimension_numbers = #tpu.dot_dimension_numbers<[1], [0], [0], [1], [0, 0, 1, 1], [], []>} : vector<8x32xf32>, vector<32x96xf32>, vector<8x96xf32> -> vector<8x96xf32>
    %c0_4 = arith.constant 0 : index
    %c0_5 = arith.constant 0 : index
    %4 = vector.load %arg3[%c0_4, %c0_5] : memref<1x96xf32, #tpu.memory_space<vmem>>, vector<1x96xf32>
    %5 = vector.broadcast %4 : vector<1x96xf32> to vector<8x96xf32>
    %6 = arith.addf %3, %5 : vector<8x96xf32>
    %c0_6 = arith.constant 0 : index
    %c0_7 = arith.constant 0 : index
    %7 = vector.load %arg4[%c0_6, %c0_7] : memref<32x32xf32, #tpu.memory_space<vmem>>, vector<32x32xf32>
    %c0_8 = arith.constant 0 : index
    %c0_9 = arith.constant 0 : index
    %8 = vector.load %arg5[%c0_8, %c0_9] : memref<1x32xf32, #tpu.memory_space<vmem>>, vector<1x32xf32>
    %9 = vector.extract_strided_slice %6 {offsets = [0, 0], sizes = [8, 16], strides = [1, 1]} : vector<8x96xf32> to vector<8x16xf32>
    %10 = vector.extract_strided_slice %6 {offsets = [0, 32], sizes = [8, 16], strides = [1, 1]} : vector<8x96xf32> to vector<8x16xf32>
    %11 = vector.extract_strided_slice %6 {offsets = [0, 64], sizes = [8, 16], strides = [1, 1]} : vector<8x96xf32> to vector<8x16xf32>
    %cst_10 = arith.constant dense<0.000000e+00> : vector<8x8xf32>
    %12 = tpu.matmul %9, %10, %cst_10 {dimension_numbers = #tpu.dot_dimension_numbers<[1], [1], [0], [0], [0, 0, 1, 0], [], []>} : vector<8x16xf32>, vector<8x16xf32>, vector<8x8xf32> -> vector<8x8xf32>
    %cst_11 = arith.constant 2.500000e-01 : f32
    %13 = vector.broadcast %cst_11 : f32 to vector<8x8xf32>
    %14 = arith.mulf %12, %13 : vector<8x8xf32>
    %cst_12 = arith.constant dense<0xFF800000> : vector<8xf32>
    %15 = vector.multi_reduction <maximumf>, %14, %cst_12 [1] : vector<8x8xf32> to vector<8xf32>
    %16 = vector.shape_cast %15 : vector<8xf32> to vector<8x1xf32>
    %17 = vector.broadcast %16 : vector<8x1xf32> to vector<8x8xf32>
    %18 = arith.subf %14, %17 : vector<8x8xf32>
    %19 = math.exp %18 : vector<8x8xf32>
    %cst_13 = arith.constant dense<0.000000e+00> : vector<8xf32>
    %20 = vector.multi_reduction <add>, %19, %cst_13 [1] : vector<8x8xf32> to vector<8xf32>
    %21 = vector.shape_cast %20 : vector<8xf32> to vector<8x1xf32>
    %22 = vector.broadcast %21 : vector<8x1xf32> to vector<8x8xf32>
    %23 = arith.divf %19, %22 : vector<8x8xf32>
    %cst_14 = arith.constant dense<0.000000e+00> : vector<8x16xf32>
    %24 = tpu.matmul %23, %11, %cst_14 {dimension_numbers = #tpu.dot_dimension_numbers<[1], [0], [0], [1], [0, 0, 1, 1], [], []>} : vector<8x8xf32>, vector<8x16xf32>, vector<8x16xf32> -> vector<8x16xf32>
    %25 = vector.extract_strided_slice %7 {offsets = [0, 0], sizes = [16, 32], strides = [1, 1]} : vector<32x32xf32> to vector<16x32xf32>
    %cst_15 = arith.constant dense<0.000000e+00> : vector<8x32xf32>
    %26 = tpu.matmul %24, %25, %cst_15 {dimension_numbers = #tpu.dot_dimension_numbers<[1], [0], [0], [1], [0, 0, 1, 1], [], []>} : vector<8x16xf32>, vector<16x32xf32>, vector<8x32xf32> -> vector<8x32xf32>
    %27 = vector.broadcast %8 : vector<1x32xf32> to vector<8x32xf32>
    %28 = arith.addf %27, %26 : vector<8x32xf32>
    %29 = vector.extract_strided_slice %6 {offsets = [0, 16], sizes = [8, 16], strides = [1, 1]} : vector<8x96xf32> to vector<8x16xf32>
    %30 = vector.extract_strided_slice %6 {offsets = [0, 48], sizes = [8, 16], strides = [1, 1]} : vector<8x96xf32> to vector<8x16xf32>
    %31 = vector.extract_strided_slice %6 {offsets = [0, 80], sizes = [8, 16], strides = [1, 1]} : vector<8x96xf32> to vector<8x16xf32>
    %cst_16 = arith.constant dense<0.000000e+00> : vector<8x8xf32>
    %32 = tpu.matmul %29, %30, %cst_16 {dimension_numbers = #tpu.dot_dimension_numbers<[1], [1], [0], [0], [0, 0, 1, 0], [], []>} : vector<8x16xf32>, vector<8x16xf32>, vector<8x8xf32> -> vector<8x8xf32>
    %cst_17 = arith.constant 2.500000e-01 : f32
    %33 = vector.broadcast %cst_17 : f32 to vector<8x8xf32>
    %34 = arith.mulf %32, %33 : vector<8x8xf32>
    %cst_18 = arith.constant dense<0xFF800000> : vector<8xf32>
    %35 = vector.multi_reduction <maximumf>, %34, %cst_18 [1] : vector<8x8xf32> to vector<8xf32>
    %36 = vector.shape_cast %35 : vector<8xf32> to vector<8x1xf32>
    %37 = vector.broadcast %36 : vector<8x1xf32> to vector<8x8xf32>
    %38 = arith.subf %34, %37 : vector<8x8xf32>
    %39 = math.exp %38 : vector<8x8xf32>
    %cst_19 = arith.constant dense<0.000000e+00> : vector<8xf32>
    %40 = vector.multi_reduction <add>, %39, %cst_19 [1] : vector<8x8xf32> to vector<8xf32>
    %41 = vector.shape_cast %40 : vector<8xf32> to vector<8x1xf32>
    %42 = vector.broadcast %41 : vector<8x1xf32> to vector<8x8xf32>
    %43 = arith.divf %39, %42 : vector<8x8xf32>
    %cst_20 = arith.constant dense<0.000000e+00> : vector<8x16xf32>
    %44 = tpu.matmul %43, %31, %cst_20 {dimension_numbers = #tpu.dot_dimension_numbers<[1], [0], [0], [1], [0, 0, 1, 1], [], []>} : vector<8x8xf32>, vector<8x16xf32>, vector<8x16xf32> -> vector<8x16xf32>
    %45 = vector.extract_strided_slice %7 {offsets = [16, 0], sizes = [16, 32], strides = [1, 1]} : vector<32x32xf32> to vector<16x32xf32>
    %cst_21 = arith.constant dense<0.000000e+00> : vector<8x32xf32>
    %46 = tpu.matmul %44, %45, %cst_21 {dimension_numbers = #tpu.dot_dimension_numbers<[1], [0], [0], [1], [0, 0, 1, 1], [], []>} : vector<8x16xf32>, vector<16x32xf32>, vector<8x32xf32> -> vector<8x32xf32>
    %47 = arith.addf %28, %46 : vector<8x32xf32>
    %c0_22 = arith.constant 0 : index
    %c0_23 = arith.constant 0 : index
    %48 = vector.load %arg10[%c0_22, %c0_23] : memref<4x32xf32, #tpu.memory_space<vmem>>, vector<4x32xf32>
    %49 = arith.addf %1, %47 : vector<8x32xf32>
    %50 = vector.extract_strided_slice %48 {offsets = [0, 0], sizes = [1, 32], strides = [1, 1]} : vector<4x32xf32> to vector<1x32xf32>
    %51 = vector.extract_strided_slice %48 {offsets = [1, 0], sizes = [1, 32], strides = [1, 1]} : vector<4x32xf32> to vector<1x32xf32>
    %cst_24 = arith.constant dense<0.000000e+00> : vector<8xf32>
    %52 = vector.multi_reduction <add>, %49, %cst_24 [1] : vector<8x32xf32> to vector<8xf32>
    %53 = vector.shape_cast %52 : vector<8xf32> to vector<8x1xf32>
    %cst_25 = arith.constant 3.200000e+01 : f32
    %54 = vector.broadcast %cst_25 : f32 to vector<8x1xf32>
    %55 = arith.divf %53, %54 : vector<8x1xf32>
    %56 = vector.broadcast %55 : vector<8x1xf32> to vector<8x32xf32>
    %57 = arith.subf %49, %56 : vector<8x32xf32>
    %58 = arith.mulf %57, %57 : vector<8x32xf32>
    %cst_26 = arith.constant dense<0.000000e+00> : vector<8xf32>
    %59 = vector.multi_reduction <add>, %58, %cst_26 [1] : vector<8x32xf32> to vector<8xf32>
    %60 = vector.shape_cast %59 : vector<8xf32> to vector<8x1xf32>
    %cst_27 = arith.constant 3.200000e+01 : f32
    %61 = vector.broadcast %cst_27 : f32 to vector<8x1xf32>
    %62 = arith.divf %60, %61 : vector<8x1xf32>
    %cst_28 = arith.constant 9.99999974E-6 : f32
    %63 = vector.broadcast %cst_28 : f32 to vector<8x1xf32>
    %64 = arith.addf %62, %63 : vector<8x1xf32>
    %65 = math.rsqrt %64 : vector<8x1xf32>
    %66 = vector.broadcast %65 : vector<8x1xf32> to vector<8x32xf32>
    %67 = arith.mulf %57, %66 : vector<8x32xf32>
    %68 = vector.broadcast %50 : vector<1x32xf32> to vector<8x32xf32>
    %69 = arith.mulf %67, %68 : vector<8x32xf32>
    %70 = vector.broadcast %51 : vector<1x32xf32> to vector<8x32xf32>
    %71 = arith.addf %69, %70 : vector<8x32xf32>
    %c0_29 = arith.constant 0 : index
    %c0_30 = arith.constant 0 : index
    %72 = vector.load %arg6[%c0_29, %c0_30] : memref<32x32xf32, #tpu.memory_space<vmem>>, vector<32x32xf32>
    %cst_31 = arith.constant dense<0.000000e+00> : vector<8x32xf32>
    %73 = tpu.matmul %71, %72, %cst_31 {dimension_numbers = #tpu.dot_dimension_numbers<[1], [0], [0], [1], [0, 0, 1, 1], [], []>} : vector<8x32xf32>, vector<32x32xf32>, vector<8x32xf32> -> vector<8x32xf32>
    %c0_32 = arith.constant 0 : index
    %c0_33 = arith.constant 0 : index
    %74 = vector.load %arg7[%c0_32, %c0_33] : memref<1x32xf32, #tpu.memory_space<vmem>>, vector<1x32xf32>
    %75 = vector.broadcast %74 : vector<1x32xf32> to vector<8x32xf32>
    %76 = arith.addf %73, %75 : vector<8x32xf32>
    %cst_34 = arith.constant 0.000000e+00 : f32
    %77 = vector.broadcast %cst_34 : f32 to vector<8x32xf32>
    %78 = arith.maximumf %76, %77 : vector<8x32xf32>
    %c0_35 = arith.constant 0 : index
    %c0_36 = arith.constant 0 : index
    %79 = vector.load %arg8[%c0_35, %c0_36] : memref<32x32xf32, #tpu.memory_space<vmem>>, vector<32x32xf32>
    %cst_37 = arith.constant dense<0.000000e+00> : vector<8x32xf32>
    %80 = tpu.matmul %78, %79, %cst_37 {dimension_numbers = #tpu.dot_dimension_numbers<[1], [0], [0], [1], [0, 0, 1, 1], [], []>} : vector<8x32xf32>, vector<32x32xf32>, vector<8x32xf32> -> vector<8x32xf32>
    %c0_38 = arith.constant 0 : index
    %c0_39 = arith.constant 0 : index
    %81 = vector.load %arg9[%c0_38, %c0_39] : memref<1x32xf32, #tpu.memory_space<vmem>>, vector<1x32xf32>
    %82 = vector.broadcast %81 : vector<1x32xf32> to vector<8x32xf32>
    %83 = arith.addf %80, %82 : vector<8x32xf32>
    %84 = arith.addf %71, %83 : vector<8x32xf32>
    %85 = vector.extract_strided_slice %48 {offsets = [2, 0], sizes = [1, 32], strides = [1, 1]} : vector<4x32xf32> to vector<1x32xf32>
    %86 = vector.extract_strided_slice %48 {offsets = [3, 0], sizes = [1, 32], strides = [1, 1]} : vector<4x32xf32> to vector<1x32xf32>
    %cst_40 = arith.constant dense<0.000000e+00> : vector<8xf32>
    %87 = vector.multi_reduction <add>, %84, %cst_40 [1] : vector<8x32xf32> to vector<8xf32>
    %88 = vector.shape_cast %87 : vector<8xf32> to vector<8x1xf32>
    %cst_41 = arith.constant 3.200000e+01 : f32
    %89 = vector.broadcast %cst_41 : f32 to vector<8x1xf32>
    %90 = arith.divf %88, %89 : vector<8x1xf32>
    %91 = vector.broadcast %90 : vector<8x1xf32> to vector<8x32xf32>
    %92 = arith.subf %84, %91 : vector<8x32xf32>
    %93 = arith.mulf %92, %92 : vector<8x32xf32>
    %cst_42 = arith.constant dense<0.000000e+00> : vector<8xf32>
    %94 = vector.multi_reduction <add>, %93, %cst_42 [1] : vector<8x32xf32> to vector<8xf32>
    %95 = vector.shape_cast %94 : vector<8xf32> to vector<8x1xf32>
    %cst_43 = arith.constant 3.200000e+01 : f32
    %96 = vector.broadcast %cst_43 : f32 to vector<8x1xf32>
    %97 = arith.divf %95, %96 : vector<8x1xf32>
    %cst_44 = arith.constant 9.99999974E-6 : f32
    %98 = vector.broadcast %cst_44 : f32 to vector<8x1xf32>
    %99 = arith.addf %97, %98 : vector<8x1xf32>
    %100 = math.rsqrt %99 : vector<8x1xf32>
    %101 = vector.broadcast %100 : vector<8x1xf32> to vector<8x32xf32>
    %102 = arith.mulf %92, %101 : vector<8x32xf32>
    %103 = vector.broadcast %85 : vector<1x32xf32> to vector<8x32xf32>
    %104 = arith.mulf %102, %103 : vector<8x32xf32>
    %105 = vector.broadcast %86 : vector<1x32xf32> to vector<8x32xf32>
    %106 = arith.addf %104, %105 : vector<8x32xf32>
    %c0_45 = arith.constant 0 : index
    %c0_46 = arith.constant 0 : index
    %c0_47 = arith.constant 0 : index
    %107 = vector.load %arg11[%c0_45, %c0_46, %c0_47] : memref<1x8x32xf32, #tpu.memory_space<vmem>>, vector<1x8x32xf32>
    %108 = vector.shape_cast %107 : vector<1x8x32xf32> to vector<8x32xf32>
    %109 = vector.shape_cast %106 : vector<8x32xf32> to vector<1x8x32xf32>
    tpu.vector_store %arg11[%c0_45, %c0_46, %c0_47], %109 {strides = array<i32>} : memref<1x8x32xf32, #tpu.memory_space<vmem>>, vector<1x8x32xf32>,
    return
  }
  func.func @transform_0(%arg0: i32) -> (i32, i32, i32) {
    %c0_i32 = arith.constant 0 : i32
    %c0_i32_0 = arith.constant 0 : i32
    %c0_i32_1 = arith.constant 0 : i32
    return %arg0, %c0_i32, %c0_i32_0 : i32, i32, i32
  }
  func.func @transform_1(%arg0: i32) -> (i32, i32) {
    %c0_i32 = arith.constant 0 : i32
    %c0_i32_0 = arith.constant 0 : i32
    %c0_i32_1 = arith.constant 0 : i32
    return %c0_i32, %c0_i32_0 : i32, i32
  }
  func.func @transform_2(%arg0: i32) -> (i32, i32) {
    %c0_i32 = arith.constant 0 : i32
    %c0_i32_0 = arith.constant 0 : i32
    %c0_i32_1 = arith.constant 0 : i32
    return %c0_i32, %c0_i32_0 : i32, i32
  }
  func.func @transform_3(%arg0: i32) -> (i32, i32) {
    %c0_i32 = arith.constant 0 : i32
    %c0_i32_0 = arith.constant 0 : i32
    %c0_i32_1 = arith.constant 0 : i32
    return %c0_i32, %c0_i32_0 : i32, i32
  }
  func.func @transform_4(%arg0: i32) -> (i32, i32) {
    %c0_i32 = arith.constant 0 : i32
    %c0_i32_0 = arith.constant 0 : i32
    %c0_i32_1 = arith.constant 0 : i32
    return %c0_i32, %c0_i32_0 : i32, i32
  }
  func.func @transform_5(%arg0: i32) -> (i32, i32) {
    %c0_i32 = arith.constant 0 : i32
    %c0_i32_0 = arith.constant 0 : i32
    %c0_i32_1 = arith.constant 0 : i32
    return %c0_i32, %c0_i32_0 : i32, i32
  }
  func.func @transform_6(%arg0: i32) -> (i32, i32) {
    %c0_i32 = arith.constant 0 : i32
    %c0_i32_0 = arith.constant 0 : i32
    %c0_i32_1 = arith.constant 0 : i32
    return %c0_i32, %c0_i32_0 : i32, i32
  }
  func.func @transform_7(%arg0: i32) -> (i32, i32) {
    %c0_i32 = arith.constant 0 : i32
    %c0_i32_0 = arith.constant 0 : i32
    %c0_i32_1 = arith.constant 0 : i32
    return %c0_i32, %c0_i32_0 : i32, i32
  }
  func.func @transform_8(%arg0: i32) -> (i32, i32) {
    %c0_i32 = arith.constant 0 : i32
    %c0_i32_0 = arith.constant 0 : i32
    %c0_i32_1 = arith.constant 0 : i32
    return %c0_i32, %c0_i32_0 : i32, i32
  }
  func.func @transform_9(%arg0: i32) -> (i32, i32) {
    %c0_i32 = arith.constant 0 : i32
    %c0_i32_0 = arith.constant 0 : i32
    %c0_i32_1 = arith.constant 0 : i32
    return %c0_i32, %c0_i32_0 : i32, i32
  }
  func.func @transform_10(%arg0: i32) -> (i32, i32, i32) {
    %c0_i32 = arith.constant 0 : i32
    %c0_i32_0 = arith.constant 0 : i32
    %c0_i32_1 = arith.constant 0 : i32
    return %arg0, %c0_i32, %c0_i32_0 : i32, i32, i32
  }
}

module attributes {stable_mosaic.version = 11 : i64} {
  func.func @_gru_tail_kernel(%arg0: i32, %arg1: memref<1x8x32xf32, #tpu.memory_space<vmem>>, %arg2: memref<1x8x32xf32, #tpu.memory_space<vmem>>, %arg3: memref<32x96xf32, #tpu.memory_space<vmem>>, %arg4: memref<32x96xf32, #tpu.memory_space<vmem>>, %arg5: memref<2x96xf32, #tpu.memory_space<vmem>>, %arg6: memref<32x32xf32, #tpu.memory_space<vmem>>, %arg7: memref<3x32xf32, #tpu.memory_space<vmem>>, %arg8: memref<1x8x32xf32, #tpu.memory_space<vmem>>, %arg9: memref<1x1x32xf32, #tpu.memory_space<vmem>>, %arg10: memref<8x96xf32, #tpu.memory_space<vmem>>, %arg11: memref<8x32xf32, #tpu.memory_space<vmem>>) attributes {dimension_semantics = [#tpu.dimension_semantics<parallel>], iteration_bounds = array<i64: 2>, scalar_prefetch = 0 : i64, scratch_operands = 2 : i64, tpu.core_type = #tpu.core_type<tc>, window_params = [{transform_indices = @transform_0, window_bounds = array<i64: 1, 8, 32>}, {transform_indices = @transform_1, window_bounds = array<i64: 1, 8, 32>}, {pipeline_mode = #tpu.pipeline_mode<synchronous>, transform_indices = @transform_2, window_bounds = array<i64: 32, 96>}, {pipeline_mode = #tpu.pipeline_mode<synchronous>, transform_indices = @transform_3, window_bounds = array<i64: 32, 96>}, {pipeline_mode = #tpu.pipeline_mode<synchronous>, transform_indices = @transform_4, window_bounds = array<i64: 2, 96>}, {pipeline_mode = #tpu.pipeline_mode<synchronous>, transform_indices = @transform_5, window_bounds = array<i64: 32, 32>}, {pipeline_mode = #tpu.pipeline_mode<synchronous>, transform_indices = @transform_6, window_bounds = array<i64: 3, 32>}, {transform_indices = @transform_7, window_bounds = array<i64: 1, 8, 32>}, {transform_indices = @transform_8, window_bounds = array<i64: 1, 1, 32>}]} {
    %c0 = arith.constant 0 : index
    %c0_0 = arith.constant 0 : index
    %c0_1 = arith.constant 0 : index
    %0 = vector.load %arg1[%c0, %c0_0, %c0_1] : memref<1x8x32xf32, #tpu.memory_space<vmem>>, vector<1x8x32xf32>
    %1 = vector.shape_cast %0 : vector<1x8x32xf32> to vector<8x32xf32>
    %c0_2 = arith.constant 0 : index
    %c0_3 = arith.constant 0 : index
    %c0_4 = arith.constant 0 : index
    %2 = vector.load %arg2[%c0_2, %c0_3, %c0_4] : memref<1x8x32xf32, #tpu.memory_space<vmem>>, vector<1x8x32xf32>
    %3 = vector.shape_cast %2 : vector<1x8x32xf32> to vector<8x32xf32>
    %4 = arith.addf %1, %3 : vector<8x32xf32>
    %c0_5 = arith.constant 0 : index
    %c0_6 = arith.constant 0 : index
    %5 = vector.load %arg3[%c0_5, %c0_6] : memref<32x96xf32, #tpu.memory_space<vmem>>, vector<32x96xf32>
    %c0_7 = arith.constant 0 : index
    %c0_8 = arith.constant 0 : index
    %6 = vector.load %arg4[%c0_7, %c0_8] : memref<32x96xf32, #tpu.memory_space<vmem>>, vector<32x96xf32>
    %c0_9 = arith.constant 0 : index
    %c0_10 = arith.constant 0 : index
    %7 = vector.load %arg5[%c0_9, %c0_10] : memref<2x96xf32, #tpu.memory_space<vmem>>, vector<1x96xf32>
    %c1 = arith.constant 1 : index
    %c0_11 = arith.constant 0 : index
    %8 = vector.load %arg5[%c1, %c0_11] : memref<2x96xf32, #tpu.memory_space<vmem>>, vector<1x96xf32>
    %cst = arith.constant dense<0.000000e+00> : vector<8x96xf32>
    %9 = tpu.matmul %4, %5, %cst {dimension_numbers = #tpu.dot_dimension_numbers<[1], [0], [0], [1], [0, 0, 1, 1], [], []>} : vector<8x32xf32>, vector<32x96xf32>, vector<8x96xf32> -> vector<8x96xf32>
    %10 = vector.broadcast %7 : vector<1x96xf32> to vector<8x96xf32>
    %11 = arith.addf %9, %10 : vector<8x96xf32>
    %c0_12 = arith.constant 0 : index
    %c0_13 = arith.constant 0 : index
    %12 = vector.load %arg10[%c0_12, %c0_13] : memref<8x96xf32, #tpu.memory_space<vmem>>, vector<8x96xf32>
    tpu.vector_store %arg10[%c0_12, %c0_13], %11 {strides = array<i32>} : memref<8x96xf32, #tpu.memory_space<vmem>>, vector<8x96xf32>,
    %cst_14 = arith.constant 0.000000e+00 : f32
    %13 = vector.broadcast %cst_14 : f32 to vector<1x32xf32>
    %c0_i32 = arith.constant 0 : i32
    %14 = arith.index_cast %c0_i32 : i32 to index
    %c0_15 = arith.constant 0 : index
    %15 = vector.load %arg10[%14, %c0_15] : memref<8x96xf32, #tpu.memory_space<vmem>>, vector<1x96xf32>
    %cst_16 = arith.constant dense<0.000000e+00> : vector<1x96xf32>
    %16 = tpu.matmul %13, %6, %cst_16 {dimension_numbers = #tpu.dot_dimension_numbers<[1], [0], [0], [1], [0, 0, 1, 1], [], []>} : vector<1x32xf32>, vector<32x96xf32>, vector<1x96xf32> -> vector<1x96xf32>
    %17 = arith.addf %16, %8 : vector<1x96xf32>
    %18 = vector.extract_strided_slice %15 {offsets = [0, 0], sizes = [1, 32], strides = [1, 1]} : vector<1x96xf32> to vector<1x32xf32>
    %19 = vector.extract_strided_slice %17 {offsets = [0, 0], sizes = [1, 32], strides = [1, 1]} : vector<1x96xf32> to vector<1x32xf32>
    %20 = arith.addf %18, %19 : vector<1x32xf32>
    %21 = arith.negf %20 : vector<1x32xf32>
    %22 = math.exp %21 : vector<1x32xf32>
    %cst_17 = arith.constant 1.000000e+00 : f32
    %23 = vector.broadcast %cst_17 : f32 to vector<1x32xf32>
    %24 = arith.addf %23, %22 : vector<1x32xf32>
    %25 = arith.divf %23, %24 : vector<1x32xf32>
    %26 = vector.extract_strided_slice %15 {offsets = [0, 32], sizes = [1, 32], strides = [1, 1]} : vector<1x96xf32> to vector<1x32xf32>
    %27 = vector.extract_strided_slice %17 {offsets = [0, 32], sizes = [1, 32], strides = [1, 1]} : vector<1x96xf32> to vector<1x32xf32>
    %28 = arith.addf %26, %27 : vector<1x32xf32>
    %29 = arith.negf %28 : vector<1x32xf32>
    %30 = math.exp %29 : vector<1x32xf32>
    %cst_18 = arith.constant 1.000000e+00 : f32
    %31 = vector.broadcast %cst_18 : f32 to vector<1x32xf32>
    %32 = arith.addf %31, %30 : vector<1x32xf32>
    %33 = arith.divf %31, %32 : vector<1x32xf32>
    %34 = vector.extract_strided_slice %15 {offsets = [0, 64], sizes = [1, 32], strides = [1, 1]} : vector<1x96xf32> to vector<1x32xf32>
    %35 = vector.extract_strided_slice %17 {offsets = [0, 64], sizes = [1, 32], strides = [1, 1]} : vector<1x96xf32> to vector<1x32xf32>
    %36 = arith.mulf %25, %35 : vector<1x32xf32>
    %37 = arith.addf %34, %36 : vector<1x32xf32>
    %38 = math.tanh %37 : vector<1x32xf32>
    %cst_19 = arith.constant 1.000000e+00 : f32
    %39 = vector.broadcast %cst_19 : f32 to vector<1x32xf32>
    %40 = arith.subf %39, %33 : vector<1x32xf32>
    %41 = arith.mulf %40, %38 : vector<1x32xf32>
    %42 = arith.mulf %33, %13 : vector<1x32xf32>
    %43 = arith.addf %41, %42 : vector<1x32xf32>
    %44 = arith.index_cast %c0_i32 : i32 to index
    %c0_20 = arith.constant 0 : index
    %45 = vector.load %arg11[%44, %c0_20] : memref<8x32xf32, #tpu.memory_space<vmem>>, vector<1x32xf32>
    tpu.vector_store %arg11[%44, %c0_20], %43 {strides = array<i32>} : memref<8x32xf32, #tpu.memory_space<vmem>>, vector<1x32xf32>,
    %c1_i32 = arith.constant 1 : i32
    %46 = arith.index_cast %c1_i32 : i32 to index
    %c0_21 = arith.constant 0 : index
    %47 = vector.load %arg10[%46, %c0_21] : memref<8x96xf32, #tpu.memory_space<vmem>>, vector<1x96xf32>
    %cst_22 = arith.constant dense<0.000000e+00> : vector<1x96xf32>
    %48 = tpu.matmul %43, %6, %cst_22 {dimension_numbers = #tpu.dot_dimension_numbers<[1], [0], [0], [1], [0, 0, 1, 1], [], []>} : vector<1x32xf32>, vector<32x96xf32>, vector<1x96xf32> -> vector<1x96xf32>
    %49 = arith.addf %48, %8 : vector<1x96xf32>
    %50 = vector.extract_strided_slice %47 {offsets = [0, 0], sizes = [1, 32], strides = [1, 1]} : vector<1x96xf32> to vector<1x32xf32>
    %51 = vector.extract_strided_slice %49 {offsets = [0, 0], sizes = [1, 32], strides = [1, 1]} : vector<1x96xf32> to vector<1x32xf32>
    %52 = arith.addf %50, %51 : vector<1x32xf32>
    %53 = arith.negf %52 : vector<1x32xf32>
    %54 = math.exp %53 : vector<1x32xf32>
    %cst_23 = arith.constant 1.000000e+00 : f32
    %55 = vector.broadcast %cst_23 : f32 to vector<1x32xf32>
    %56 = arith.addf %55, %54 : vector<1x32xf32>
    %57 = arith.divf %55, %56 : vector<1x32xf32>
    %58 = vector.extract_strided_slice %47 {offsets = [0, 32], sizes = [1, 32], strides = [1, 1]} : vector<1x96xf32> to vector<1x32xf32>
    %59 = vector.extract_strided_slice %49 {offsets = [0, 32], sizes = [1, 32], strides = [1, 1]} : vector<1x96xf32> to vector<1x32xf32>
    %60 = arith.addf %58, %59 : vector<1x32xf32>
    %61 = arith.negf %60 : vector<1x32xf32>
    %62 = math.exp %61 : vector<1x32xf32>
    %cst_24 = arith.constant 1.000000e+00 : f32
    %63 = vector.broadcast %cst_24 : f32 to vector<1x32xf32>
    %64 = arith.addf %63, %62 : vector<1x32xf32>
    %65 = arith.divf %63, %64 : vector<1x32xf32>
    %66 = vector.extract_strided_slice %47 {offsets = [0, 64], sizes = [1, 32], strides = [1, 1]} : vector<1x96xf32> to vector<1x32xf32>
    %67 = vector.extract_strided_slice %49 {offsets = [0, 64], sizes = [1, 32], strides = [1, 1]} : vector<1x96xf32> to vector<1x32xf32>
    %68 = arith.mulf %57, %67 : vector<1x32xf32>
    %69 = arith.addf %66, %68 : vector<1x32xf32>
    %70 = math.tanh %69 : vector<1x32xf32>
    %cst_25 = arith.constant 1.000000e+00 : f32
    %71 = vector.broadcast %cst_25 : f32 to vector<1x32xf32>
    %72 = arith.subf %71, %65 : vector<1x32xf32>
    %73 = arith.mulf %72, %70 : vector<1x32xf32>
    %74 = arith.mulf %65, %43 : vector<1x32xf32>
    %75 = arith.addf %73, %74 : vector<1x32xf32>
    %76 = arith.index_cast %c1_i32 : i32 to index
    %c0_26 = arith.constant 0 : index
    %77 = vector.load %arg11[%76, %c0_26] : memref<8x32xf32, #tpu.memory_space<vmem>>, vector<1x32xf32>
    tpu.vector_store %arg11[%76, %c0_26], %75 {strides = array<i32>} : memref<8x32xf32, #tpu.memory_space<vmem>>, vector<1x32xf32>,
    %c2_i32 = arith.constant 2 : i32
    %78 = arith.index_cast %c2_i32 : i32 to index
    %c0_27 = arith.constant 0 : index
    %79 = vector.load %arg10[%78, %c0_27] : memref<8x96xf32, #tpu.memory_space<vmem>>, vector<1x96xf32>
    %cst_28 = arith.constant dense<0.000000e+00> : vector<1x96xf32>
    %80 = tpu.matmul %75, %6, %cst_28 {dimension_numbers = #tpu.dot_dimension_numbers<[1], [0], [0], [1], [0, 0, 1, 1], [], []>} : vector<1x32xf32>, vector<32x96xf32>, vector<1x96xf32> -> vector<1x96xf32>
    %81 = arith.addf %80, %8 : vector<1x96xf32>
    %82 = vector.extract_strided_slice %79 {offsets = [0, 0], sizes = [1, 32], strides = [1, 1]} : vector<1x96xf32> to vector<1x32xf32>
    %83 = vector.extract_strided_slice %81 {offsets = [0, 0], sizes = [1, 32], strides = [1, 1]} : vector<1x96xf32> to vector<1x32xf32>
    %84 = arith.addf %82, %83 : vector<1x32xf32>
    %85 = arith.negf %84 : vector<1x32xf32>
    %86 = math.exp %85 : vector<1x32xf32>
    %cst_29 = arith.constant 1.000000e+00 : f32
    %87 = vector.broadcast %cst_29 : f32 to vector<1x32xf32>
    %88 = arith.addf %87, %86 : vector<1x32xf32>
    %89 = arith.divf %87, %88 : vector<1x32xf32>
    %90 = vector.extract_strided_slice %79 {offsets = [0, 32], sizes = [1, 32], strides = [1, 1]} : vector<1x96xf32> to vector<1x32xf32>
    %91 = vector.extract_strided_slice %81 {offsets = [0, 32], sizes = [1, 32], strides = [1, 1]} : vector<1x96xf32> to vector<1x32xf32>
    %92 = arith.addf %90, %91 : vector<1x32xf32>
    %93 = arith.negf %92 : vector<1x32xf32>
    %94 = math.exp %93 : vector<1x32xf32>
    %cst_30 = arith.constant 1.000000e+00 : f32
    %95 = vector.broadcast %cst_30 : f32 to vector<1x32xf32>
    %96 = arith.addf %95, %94 : vector<1x32xf32>
    %97 = arith.divf %95, %96 : vector<1x32xf32>
    %98 = vector.extract_strided_slice %79 {offsets = [0, 64], sizes = [1, 32], strides = [1, 1]} : vector<1x96xf32> to vector<1x32xf32>
    %99 = vector.extract_strided_slice %81 {offsets = [0, 64], sizes = [1, 32], strides = [1, 1]} : vector<1x96xf32> to vector<1x32xf32>
    %100 = arith.mulf %89, %99 : vector<1x32xf32>
    %101 = arith.addf %98, %100 : vector<1x32xf32>
    %102 = math.tanh %101 : vector<1x32xf32>
    %cst_31 = arith.constant 1.000000e+00 : f32
    %103 = vector.broadcast %cst_31 : f32 to vector<1x32xf32>
    %104 = arith.subf %103, %97 : vector<1x32xf32>
    %105 = arith.mulf %104, %102 : vector<1x32xf32>
    %106 = arith.mulf %97, %75 : vector<1x32xf32>
    %107 = arith.addf %105, %106 : vector<1x32xf32>
    %108 = arith.index_cast %c2_i32 : i32 to index
    %c0_32 = arith.constant 0 : index
    %109 = vector.load %arg11[%108, %c0_32] : memref<8x32xf32, #tpu.memory_space<vmem>>, vector<1x32xf32>
    tpu.vector_store %arg11[%108, %c0_32], %107 {strides = array<i32>} : memref<8x32xf32, #tpu.memory_space<vmem>>, vector<1x32xf32>,
    %c3_i32 = arith.constant 3 : i32
    %110 = arith.index_cast %c3_i32 : i32 to index
    %c0_33 = arith.constant 0 : index
    %111 = vector.load %arg10[%110, %c0_33] : memref<8x96xf32, #tpu.memory_space<vmem>>, vector<1x96xf32>
    %cst_34 = arith.constant dense<0.000000e+00> : vector<1x96xf32>
    %112 = tpu.matmul %107, %6, %cst_34 {dimension_numbers = #tpu.dot_dimension_numbers<[1], [0], [0], [1], [0, 0, 1, 1], [], []>} : vector<1x32xf32>, vector<32x96xf32>, vector<1x96xf32> -> vector<1x96xf32>
    %113 = arith.addf %112, %8 : vector<1x96xf32>
    %114 = vector.extract_strided_slice %111 {offsets = [0, 0], sizes = [1, 32], strides = [1, 1]} : vector<1x96xf32> to vector<1x32xf32>
    %115 = vector.extract_strided_slice %113 {offsets = [0, 0], sizes = [1, 32], strides = [1, 1]} : vector<1x96xf32> to vector<1x32xf32>
    %116 = arith.addf %114, %115 : vector<1x32xf32>
    %117 = arith.negf %116 : vector<1x32xf32>
    %118 = math.exp %117 : vector<1x32xf32>
    %cst_35 = arith.constant 1.000000e+00 : f32
    %119 = vector.broadcast %cst_35 : f32 to vector<1x32xf32>
    %120 = arith.addf %119, %118 : vector<1x32xf32>
    %121 = arith.divf %119, %120 : vector<1x32xf32>
    %122 = vector.extract_strided_slice %111 {offsets = [0, 32], sizes = [1, 32], strides = [1, 1]} : vector<1x96xf32> to vector<1x32xf32>
    %123 = vector.extract_strided_slice %113 {offsets = [0, 32], sizes = [1, 32], strides = [1, 1]} : vector<1x96xf32> to vector<1x32xf32>
    %124 = arith.addf %122, %123 : vector<1x32xf32>
    %125 = arith.negf %124 : vector<1x32xf32>
    %126 = math.exp %125 : vector<1x32xf32>
    %cst_36 = arith.constant 1.000000e+00 : f32
    %127 = vector.broadcast %cst_36 : f32 to vector<1x32xf32>
    %128 = arith.addf %127, %126 : vector<1x32xf32>
    %129 = arith.divf %127, %128 : vector<1x32xf32>
    %130 = vector.extract_strided_slice %111 {offsets = [0, 64], sizes = [1, 32], strides = [1, 1]} : vector<1x96xf32> to vector<1x32xf32>
    %131 = vector.extract_strided_slice %113 {offsets = [0, 64], sizes = [1, 32], strides = [1, 1]} : vector<1x96xf32> to vector<1x32xf32>
    %132 = arith.mulf %121, %131 : vector<1x32xf32>
    %133 = arith.addf %130, %132 : vector<1x32xf32>
    %134 = math.tanh %133 : vector<1x32xf32>
    %cst_37 = arith.constant 1.000000e+00 : f32
    %135 = vector.broadcast %cst_37 : f32 to vector<1x32xf32>
    %136 = arith.subf %135, %129 : vector<1x32xf32>
    %137 = arith.mulf %136, %134 : vector<1x32xf32>
    %138 = arith.mulf %129, %107 : vector<1x32xf32>
    %139 = arith.addf %137, %138 : vector<1x32xf32>
    %140 = arith.index_cast %c3_i32 : i32 to index
    %c0_38 = arith.constant 0 : index
    %141 = vector.load %arg11[%140, %c0_38] : memref<8x32xf32, #tpu.memory_space<vmem>>, vector<1x32xf32>
    tpu.vector_store %arg11[%140, %c0_38], %139 {strides = array<i32>} : memref<8x32xf32, #tpu.memory_space<vmem>>, vector<1x32xf32>,
    %c4_i32 = arith.constant 4 : i32
    %142 = arith.index_cast %c4_i32 : i32 to index
    %c0_39 = arith.constant 0 : index
    %143 = vector.load %arg10[%142, %c0_39] : memref<8x96xf32, #tpu.memory_space<vmem>>, vector<1x96xf32>
    %cst_40 = arith.constant dense<0.000000e+00> : vector<1x96xf32>
    %144 = tpu.matmul %139, %6, %cst_40 {dimension_numbers = #tpu.dot_dimension_numbers<[1], [0], [0], [1], [0, 0, 1, 1], [], []>} : vector<1x32xf32>, vector<32x96xf32>, vector<1x96xf32> -> vector<1x96xf32>
    %145 = arith.addf %144, %8 : vector<1x96xf32>
    %146 = vector.extract_strided_slice %143 {offsets = [0, 0], sizes = [1, 32], strides = [1, 1]} : vector<1x96xf32> to vector<1x32xf32>
    %147 = vector.extract_strided_slice %145 {offsets = [0, 0], sizes = [1, 32], strides = [1, 1]} : vector<1x96xf32> to vector<1x32xf32>
    %148 = arith.addf %146, %147 : vector<1x32xf32>
    %149 = arith.negf %148 : vector<1x32xf32>
    %150 = math.exp %149 : vector<1x32xf32>
    %cst_41 = arith.constant 1.000000e+00 : f32
    %151 = vector.broadcast %cst_41 : f32 to vector<1x32xf32>
    %152 = arith.addf %151, %150 : vector<1x32xf32>
    %153 = arith.divf %151, %152 : vector<1x32xf32>
    %154 = vector.extract_strided_slice %143 {offsets = [0, 32], sizes = [1, 32], strides = [1, 1]} : vector<1x96xf32> to vector<1x32xf32>
    %155 = vector.extract_strided_slice %145 {offsets = [0, 32], sizes = [1, 32], strides = [1, 1]} : vector<1x96xf32> to vector<1x32xf32>
    %156 = arith.addf %154, %155 : vector<1x32xf32>
    %157 = arith.negf %156 : vector<1x32xf32>
    %158 = math.exp %157 : vector<1x32xf32>
    %cst_42 = arith.constant 1.000000e+00 : f32
    %159 = vector.broadcast %cst_42 : f32 to vector<1x32xf32>
    %160 = arith.addf %159, %158 : vector<1x32xf32>
    %161 = arith.divf %159, %160 : vector<1x32xf32>
    %162 = vector.extract_strided_slice %143 {offsets = [0, 64], sizes = [1, 32], strides = [1, 1]} : vector<1x96xf32> to vector<1x32xf32>
    %163 = vector.extract_strided_slice %145 {offsets = [0, 64], sizes = [1, 32], strides = [1, 1]} : vector<1x96xf32> to vector<1x32xf32>
    %164 = arith.mulf %153, %163 : vector<1x32xf32>
    %165 = arith.addf %162, %164 : vector<1x32xf32>
    %166 = math.tanh %165 : vector<1x32xf32>
    %cst_43 = arith.constant 1.000000e+00 : f32
    %167 = vector.broadcast %cst_43 : f32 to vector<1x32xf32>
    %168 = arith.subf %167, %161 : vector<1x32xf32>
    %169 = arith.mulf %168, %166 : vector<1x32xf32>
    %170 = arith.mulf %161, %139 : vector<1x32xf32>
    %171 = arith.addf %169, %170 : vector<1x32xf32>
    %172 = arith.index_cast %c4_i32 : i32 to index
    %c0_44 = arith.constant 0 : index
    %173 = vector.load %arg11[%172, %c0_44] : memref<8x32xf32, #tpu.memory_space<vmem>>, vector<1x32xf32>
    tpu.vector_store %arg11[%172, %c0_44], %171 {strides = array<i32>} : memref<8x32xf32, #tpu.memory_space<vmem>>, vector<1x32xf32>,
    %c5_i32 = arith.constant 5 : i32
    %174 = arith.index_cast %c5_i32 : i32 to index
    %c0_45 = arith.constant 0 : index
    %175 = vector.load %arg10[%174, %c0_45] : memref<8x96xf32, #tpu.memory_space<vmem>>, vector<1x96xf32>
    %cst_46 = arith.constant dense<0.000000e+00> : vector<1x96xf32>
    %176 = tpu.matmul %171, %6, %cst_46 {dimension_numbers = #tpu.dot_dimension_numbers<[1], [0], [0], [1], [0, 0, 1, 1], [], []>} : vector<1x32xf32>, vector<32x96xf32>, vector<1x96xf32> -> vector<1x96xf32>
    %177 = arith.addf %176, %8 : vector<1x96xf32>
    %178 = vector.extract_strided_slice %175 {offsets = [0, 0], sizes = [1, 32], strides = [1, 1]} : vector<1x96xf32> to vector<1x32xf32>
    %179 = vector.extract_strided_slice %177 {offsets = [0, 0], sizes = [1, 32], strides = [1, 1]} : vector<1x96xf32> to vector<1x32xf32>
    %180 = arith.addf %178, %179 : vector<1x32xf32>
    %181 = arith.negf %180 : vector<1x32xf32>
    %182 = math.exp %181 : vector<1x32xf32>
    %cst_47 = arith.constant 1.000000e+00 : f32
    %183 = vector.broadcast %cst_47 : f32 to vector<1x32xf32>
    %184 = arith.addf %183, %182 : vector<1x32xf32>
    %185 = arith.divf %183, %184 : vector<1x32xf32>
    %186 = vector.extract_strided_slice %175 {offsets = [0, 32], sizes = [1, 32], strides = [1, 1]} : vector<1x96xf32> to vector<1x32xf32>
    %187 = vector.extract_strided_slice %177 {offsets = [0, 32], sizes = [1, 32], strides = [1, 1]} : vector<1x96xf32> to vector<1x32xf32>
    %188 = arith.addf %186, %187 : vector<1x32xf32>
    %189 = arith.negf %188 : vector<1x32xf32>
    %190 = math.exp %189 : vector<1x32xf32>
    %cst_48 = arith.constant 1.000000e+00 : f32
    %191 = vector.broadcast %cst_48 : f32 to vector<1x32xf32>
    %192 = arith.addf %191, %190 : vector<1x32xf32>
    %193 = arith.divf %191, %192 : vector<1x32xf32>
    %194 = vector.extract_strided_slice %175 {offsets = [0, 64], sizes = [1, 32], strides = [1, 1]} : vector<1x96xf32> to vector<1x32xf32>
    %195 = vector.extract_strided_slice %177 {offsets = [0, 64], sizes = [1, 32], strides = [1, 1]} : vector<1x96xf32> to vector<1x32xf32>
    %196 = arith.mulf %185, %195 : vector<1x32xf32>
    %197 = arith.addf %194, %196 : vector<1x32xf32>
    %198 = math.tanh %197 : vector<1x32xf32>
    %cst_49 = arith.constant 1.000000e+00 : f32
    %199 = vector.broadcast %cst_49 : f32 to vector<1x32xf32>
    %200 = arith.subf %199, %193 : vector<1x32xf32>
    %201 = arith.mulf %200, %198 : vector<1x32xf32>
    %202 = arith.mulf %193, %171 : vector<1x32xf32>
    %203 = arith.addf %201, %202 : vector<1x32xf32>
    %204 = arith.index_cast %c5_i32 : i32 to index
    %c0_50 = arith.constant 0 : index
    %205 = vector.load %arg11[%204, %c0_50] : memref<8x32xf32, #tpu.memory_space<vmem>>, vector<1x32xf32>
    tpu.vector_store %arg11[%204, %c0_50], %203 {strides = array<i32>} : memref<8x32xf32, #tpu.memory_space<vmem>>, vector<1x32xf32>,
    %c6_i32 = arith.constant 6 : i32
    %206 = arith.index_cast %c6_i32 : i32 to index
    %c0_51 = arith.constant 0 : index
    %207 = vector.load %arg10[%206, %c0_51] : memref<8x96xf32, #tpu.memory_space<vmem>>, vector<1x96xf32>
    %cst_52 = arith.constant dense<0.000000e+00> : vector<1x96xf32>
    %208 = tpu.matmul %203, %6, %cst_52 {dimension_numbers = #tpu.dot_dimension_numbers<[1], [0], [0], [1], [0, 0, 1, 1], [], []>} : vector<1x32xf32>, vector<32x96xf32>, vector<1x96xf32> -> vector<1x96xf32>
    %209 = arith.addf %208, %8 : vector<1x96xf32>
    %210 = vector.extract_strided_slice %207 {offsets = [0, 0], sizes = [1, 32], strides = [1, 1]} : vector<1x96xf32> to vector<1x32xf32>
    %211 = vector.extract_strided_slice %209 {offsets = [0, 0], sizes = [1, 32], strides = [1, 1]} : vector<1x96xf32> to vector<1x32xf32>
    %212 = arith.addf %210, %211 : vector<1x32xf32>
    %213 = arith.negf %212 : vector<1x32xf32>
    %214 = math.exp %213 : vector<1x32xf32>
    %cst_53 = arith.constant 1.000000e+00 : f32
    %215 = vector.broadcast %cst_53 : f32 to vector<1x32xf32>
    %216 = arith.addf %215, %214 : vector<1x32xf32>
    %217 = arith.divf %215, %216 : vector<1x32xf32>
    %218 = vector.extract_strided_slice %207 {offsets = [0, 32], sizes = [1, 32], strides = [1, 1]} : vector<1x96xf32> to vector<1x32xf32>
    %219 = vector.extract_strided_slice %209 {offsets = [0, 32], sizes = [1, 32], strides = [1, 1]} : vector<1x96xf32> to vector<1x32xf32>
    %220 = arith.addf %218, %219 : vector<1x32xf32>
    %221 = arith.negf %220 : vector<1x32xf32>
    %222 = math.exp %221 : vector<1x32xf32>
    %cst_54 = arith.constant 1.000000e+00 : f32
    %223 = vector.broadcast %cst_54 : f32 to vector<1x32xf32>
    %224 = arith.addf %223, %222 : vector<1x32xf32>
    %225 = arith.divf %223, %224 : vector<1x32xf32>
    %226 = vector.extract_strided_slice %207 {offsets = [0, 64], sizes = [1, 32], strides = [1, 1]} : vector<1x96xf32> to vector<1x32xf32>
    %227 = vector.extract_strided_slice %209 {offsets = [0, 64], sizes = [1, 32], strides = [1, 1]} : vector<1x96xf32> to vector<1x32xf32>
    %228 = arith.mulf %217, %227 : vector<1x32xf32>
    %229 = arith.addf %226, %228 : vector<1x32xf32>
    %230 = math.tanh %229 : vector<1x32xf32>
    %cst_55 = arith.constant 1.000000e+00 : f32
    %231 = vector.broadcast %cst_55 : f32 to vector<1x32xf32>
    %232 = arith.subf %231, %225 : vector<1x32xf32>
    %233 = arith.mulf %232, %230 : vector<1x32xf32>
    %234 = arith.mulf %225, %203 : vector<1x32xf32>
    %235 = arith.addf %233, %234 : vector<1x32xf32>
    %236 = arith.index_cast %c6_i32 : i32 to index
    %c0_56 = arith.constant 0 : index
    %237 = vector.load %arg11[%236, %c0_56] : memref<8x32xf32, #tpu.memory_space<vmem>>, vector<1x32xf32>
    tpu.vector_store %arg11[%236, %c0_56], %235 {strides = array<i32>} : memref<8x32xf32, #tpu.memory_space<vmem>>, vector<1x32xf32>,
    %c7_i32 = arith.constant 7 : i32
    %238 = arith.index_cast %c7_i32 : i32 to index
    %c0_57 = arith.constant 0 : index
    %239 = vector.load %arg10[%238, %c0_57] : memref<8x96xf32, #tpu.memory_space<vmem>>, vector<1x96xf32>
    %cst_58 = arith.constant dense<0.000000e+00> : vector<1x96xf32>
    %240 = tpu.matmul %235, %6, %cst_58 {dimension_numbers = #tpu.dot_dimension_numbers<[1], [0], [0], [1], [0, 0, 1, 1], [], []>} : vector<1x32xf32>, vector<32x96xf32>, vector<1x96xf32> -> vector<1x96xf32>
    %241 = arith.addf %240, %8 : vector<1x96xf32>
    %242 = vector.extract_strided_slice %239 {offsets = [0, 0], sizes = [1, 32], strides = [1, 1]} : vector<1x96xf32> to vector<1x32xf32>
    %243 = vector.extract_strided_slice %241 {offsets = [0, 0], sizes = [1, 32], strides = [1, 1]} : vector<1x96xf32> to vector<1x32xf32>
    %244 = arith.addf %242, %243 : vector<1x32xf32>
    %245 = arith.negf %244 : vector<1x32xf32>
    %246 = math.exp %245 : vector<1x32xf32>
    %cst_59 = arith.constant 1.000000e+00 : f32
    %247 = vector.broadcast %cst_59 : f32 to vector<1x32xf32>
    %248 = arith.addf %247, %246 : vector<1x32xf32>
    %249 = arith.divf %247, %248 : vector<1x32xf32>
    %250 = vector.extract_strided_slice %239 {offsets = [0, 32], sizes = [1, 32], strides = [1, 1]} : vector<1x96xf32> to vector<1x32xf32>
    %251 = vector.extract_strided_slice %241 {offsets = [0, 32], sizes = [1, 32], strides = [1, 1]} : vector<1x96xf32> to vector<1x32xf32>
    %252 = arith.addf %250, %251 : vector<1x32xf32>
    %253 = arith.negf %252 : vector<1x32xf32>
    %254 = math.exp %253 : vector<1x32xf32>
    %cst_60 = arith.constant 1.000000e+00 : f32
    %255 = vector.broadcast %cst_60 : f32 to vector<1x32xf32>
    %256 = arith.addf %255, %254 : vector<1x32xf32>
    %257 = arith.divf %255, %256 : vector<1x32xf32>
    %258 = vector.extract_strided_slice %239 {offsets = [0, 64], sizes = [1, 32], strides = [1, 1]} : vector<1x96xf32> to vector<1x32xf32>
    %259 = vector.extract_strided_slice %241 {offsets = [0, 64], sizes = [1, 32], strides = [1, 1]} : vector<1x96xf32> to vector<1x32xf32>
    %260 = arith.mulf %249, %259 : vector<1x32xf32>
    %261 = arith.addf %258, %260 : vector<1x32xf32>
    %262 = math.tanh %261 : vector<1x32xf32>
    %cst_61 = arith.constant 1.000000e+00 : f32
    %263 = vector.broadcast %cst_61 : f32 to vector<1x32xf32>
    %264 = arith.subf %263, %257 : vector<1x32xf32>
    %265 = arith.mulf %264, %262 : vector<1x32xf32>
    %266 = arith.mulf %257, %235 : vector<1x32xf32>
    %267 = arith.addf %265, %266 : vector<1x32xf32>
    %268 = arith.index_cast %c7_i32 : i32 to index
    %c0_62 = arith.constant 0 : index
    %269 = vector.load %arg11[%268, %c0_62] : memref<8x32xf32, #tpu.memory_space<vmem>>, vector<1x32xf32>
    tpu.vector_store %arg11[%268, %c0_62], %267 {strides = array<i32>} : memref<8x32xf32, #tpu.memory_space<vmem>>, vector<1x32xf32>,
    %c8_i32 = arith.constant 8 : i32
    %c0_63 = arith.constant 0 : index
    %c0_64 = arith.constant 0 : index
    %c0_65 = arith.constant 0 : index
    %270 = vector.load %arg9[%c0_63, %c0_64, %c0_65] : memref<1x1x32xf32, #tpu.memory_space<vmem>>, vector<1x1x32xf32>
    %271 = vector.shape_cast %270 : vector<1x1x32xf32> to vector<1x32xf32>
    %272 = vector.shape_cast %267 : vector<1x32xf32> to vector<1x1x32xf32>
    tpu.vector_store %arg9[%c0_63, %c0_64, %c0_65], %272 {strides = array<i32>} : memref<1x1x32xf32, #tpu.memory_space<vmem>>, vector<1x1x32xf32>,
    %c0_66 = arith.constant 0 : index
    %c0_67 = arith.constant 0 : index
    %273 = vector.load %arg11[%c0_66, %c0_67] : memref<8x32xf32, #tpu.memory_space<vmem>>, vector<8x32xf32>
    %c0_68 = arith.constant 0 : index
    %c0_69 = arith.constant 0 : index
    %274 = vector.load %arg7[%c0_68, %c0_69] : memref<3x32xf32, #tpu.memory_space<vmem>>, vector<3x32xf32>
    %c0_70 = arith.constant 0 : index
    %c0_71 = arith.constant 0 : index
    %275 = vector.load %arg6[%c0_70, %c0_71] : memref<32x32xf32, #tpu.memory_space<vmem>>, vector<32x32xf32>
    %cst_72 = arith.constant dense<0.000000e+00> : vector<8x32xf32>
    %276 = tpu.matmul %273, %275, %cst_72 {dimension_numbers = #tpu.dot_dimension_numbers<[1], [0], [0], [1], [0, 0, 1, 1], [], []>} : vector<8x32xf32>, vector<32x32xf32>, vector<8x32xf32> -> vector<8x32xf32>
    %277 = vector.extract_strided_slice %274 {offsets = [0, 0], sizes = [1, 32], strides = [1, 1]} : vector<3x32xf32> to vector<1x32xf32>
    %278 = vector.broadcast %277 : vector<1x32xf32> to vector<8x32xf32>
    %279 = arith.addf %276, %278 : vector<8x32xf32>
    %280 = vector.extract_strided_slice %274 {offsets = [1, 0], sizes = [1, 32], strides = [1, 1]} : vector<3x32xf32> to vector<1x32xf32>
    %281 = vector.extract_strided_slice %274 {offsets = [2, 0], sizes = [1, 32], strides = [1, 1]} : vector<3x32xf32> to vector<1x32xf32>
    %cst_73 = arith.constant dense<0.000000e+00> : vector<8xf32>
    %282 = vector.multi_reduction <add>, %279, %cst_73 [1] : vector<8x32xf32> to vector<8xf32>
    %283 = vector.shape_cast %282 : vector<8xf32> to vector<8x1xf32>
    %cst_74 = arith.constant 3.200000e+01 : f32
    %284 = vector.broadcast %cst_74 : f32 to vector<8x1xf32>
    %285 = arith.divf %283, %284 : vector<8x1xf32>
    %286 = vector.broadcast %285 : vector<8x1xf32> to vector<8x32xf32>
    %287 = arith.subf %279, %286 : vector<8x32xf32>
    %288 = arith.mulf %287, %287 : vector<8x32xf32>
    %cst_75 = arith.constant dense<0.000000e+00> : vector<8xf32>
    %289 = vector.multi_reduction <add>, %288, %cst_75 [1] : vector<8x32xf32> to vector<8xf32>
    %290 = vector.shape_cast %289 : vector<8xf32> to vector<8x1xf32>
    %cst_76 = arith.constant 3.200000e+01 : f32
    %291 = vector.broadcast %cst_76 : f32 to vector<8x1xf32>
    %292 = arith.divf %290, %291 : vector<8x1xf32>
    %cst_77 = arith.constant 9.99999974E-6 : f32
    %293 = vector.broadcast %cst_77 : f32 to vector<8x1xf32>
    %294 = arith.addf %292, %293 : vector<8x1xf32>
    %295 = math.rsqrt %294 : vector<8x1xf32>
    %296 = vector.broadcast %295 : vector<8x1xf32> to vector<8x32xf32>
    %297 = arith.mulf %287, %296 : vector<8x32xf32>
    %298 = vector.broadcast %280 : vector<1x32xf32> to vector<8x32xf32>
    %299 = arith.mulf %297, %298 : vector<8x32xf32>
    %300 = vector.broadcast %281 : vector<1x32xf32> to vector<8x32xf32>
    %301 = arith.addf %299, %300 : vector<8x32xf32>
    %cst_78 = arith.constant 0.000000e+00 : f32
    %302 = vector.broadcast %cst_78 : f32 to vector<8x32xf32>
    %303 = arith.maximumf %301, %302 : vector<8x32xf32>
    %304 = arith.addf %303, %273 : vector<8x32xf32>
    %c0_79 = arith.constant 0 : index
    %c0_80 = arith.constant 0 : index
    %c0_81 = arith.constant 0 : index
    %305 = vector.load %arg8[%c0_79, %c0_80, %c0_81] : memref<1x8x32xf32, #tpu.memory_space<vmem>>, vector<1x8x32xf32>
    %306 = vector.shape_cast %305 : vector<1x8x32xf32> to vector<8x32xf32>
    %307 = vector.shape_cast %304 : vector<8x32xf32> to vector<1x8x32xf32>
    tpu.vector_store %arg8[%c0_79, %c0_80, %c0_81], %307 {strides = array<i32>} : memref<1x8x32xf32, #tpu.memory_space<vmem>>, vector<1x8x32xf32>,
    return
  }
  func.func @transform_0(%arg0: i32) -> (i32, i32, i32) {
    %c0_i32 = arith.constant 0 : i32
    %c0_i32_0 = arith.constant 0 : i32
    %c0_i32_1 = arith.constant 0 : i32
    return %arg0, %c0_i32, %c0_i32_0 : i32, i32, i32
  }
  func.func @transform_1(%arg0: i32) -> (i32, i32, i32) {
    %c0_i32 = arith.constant 0 : i32
    %c0_i32_0 = arith.constant 0 : i32
    %c0_i32_1 = arith.constant 0 : i32
    return %arg0, %c0_i32, %c0_i32_0 : i32, i32, i32
  }
  func.func @transform_2(%arg0: i32) -> (i32, i32) {
    %c0_i32 = arith.constant 0 : i32
    %c0_i32_0 = arith.constant 0 : i32
    %c0_i32_1 = arith.constant 0 : i32
    return %c0_i32, %c0_i32_0 : i32, i32
  }
  func.func @transform_3(%arg0: i32) -> (i32, i32) {
    %c0_i32 = arith.constant 0 : i32
    %c0_i32_0 = arith.constant 0 : i32
    %c0_i32_1 = arith.constant 0 : i32
    return %c0_i32, %c0_i32_0 : i32, i32
  }
  func.func @transform_4(%arg0: i32) -> (i32, i32) {
    %c0_i32 = arith.constant 0 : i32
    %c0_i32_0 = arith.constant 0 : i32
    %c0_i32_1 = arith.constant 0 : i32
    return %c0_i32, %c0_i32_0 : i32, i32
  }
  func.func @transform_5(%arg0: i32) -> (i32, i32) {
    %c0_i32 = arith.constant 0 : i32
    %c0_i32_0 = arith.constant 0 : i32
    %c0_i32_1 = arith.constant 0 : i32
    return %c0_i32, %c0_i32_0 : i32, i32
  }
  func.func @transform_6(%arg0: i32) -> (i32, i32) {
    %c0_i32 = arith.constant 0 : i32
    %c0_i32_0 = arith.constant 0 : i32
    %c0_i32_1 = arith.constant 0 : i32
    return %c0_i32, %c0_i32_0 : i32, i32
  }
  func.func @transform_7(%arg0: i32) -> (i32, i32, i32) {
    %c0_i32 = arith.constant 0 : i32
    %c0_i32_0 = arith.constant 0 : i32
    %c0_i32_1 = arith.constant 0 : i32
    return %arg0, %c0_i32, %c0_i32_0 : i32, i32, i32
  }
  func.func @transform_8(%arg0: i32) -> (i32, i32, i32) {
    %c0_i32 = arith.constant 0 : i32
    %c0_i32_0 = arith.constant 0 : i32
    %c0_i32_1 = arith.constant 0 : i32
    return %arg0, %c0_i32, %c0_i32_0 : i32, i32, i32
  }
}

</mosaic_0001>

<llo_original>
// kernel: temperal_encoder_forward.3
$region0: #{temperal_encoder_forward.3}
  #allocation0 [shape = 'u32[]', space=smem, size = 0x4, offset = 0x4, fixed_abs, tag = 'smem constant byte address 0x4 - core index']
  #allocation1 [shape = 'u32[72,128]{1,0:T(1,128)}', space=vmem, size = 0x9000, scoped, tag = 'internal scratch']
  %s0 = inlined_call_operand.vmem [shape: f32[2,8,2], index: 0, kind: input, shape index: {}]
  %s1 = inlined_call_operand.vmem [shape: f32[2,32], index: 1, kind: input, shape index: {}]
  %s2 = inlined_call_operand.vmem [shape: f32[1,32], index: 2, kind: input, shape index: {}]
  %s3 = inlined_call_operand.vmem [shape: f32[32,32], index: 3, kind: input, shape index: {}]
  %s4 = inlined_call_operand.vmem [shape: f32[3,32], index: 4, kind: input, shape index: {}]
  %s5 = inlined_call_operand.vmem [shape: f32[2,8,32], index: 5, kind: output, shape index: {}]
  %s6 = sld [smem:[#allocation0]]
  $region53: #{temperal_encoder_forward.3} parent=0
    _
  %s8 = ssub.s32 1, %s6
  %s9 = scalar_select 0, %s8, %s6
  loop: start=0, step=1, limit=4
  $region2: #{temperal_encoder_forward.3} parent=0 // loop_pre_header
    _
  $region3: #{temperal_encoder_forward.3} parent=0 // loop_header
    %s11 = sphi 0, %s15
    %p12 = scmp.ge.s32.totalorder %s11, 4
    %s21 = sphi 0, %s23
    %s24 = sphi 0, %s21
    %s25 = sphi 0, %s24
    %s41 = sphi 0, %s25
    %s45 = sphi 0, %s45
    %s47 = sphi 0, %s45
    %s48 = sphi 0, %s47
    %s62 = sphi 0, %s48
    %s66 = sphi 0, %s66
    %s68 = sphi 0, %s66
    %s69 = sphi 0, %s68
    %s83 = sphi 0, %s69
    %s87 = sphi 0, %s87
    %s89 = sphi 0, %s87
    %s90 = sphi 0, %s89
    %s104 = sphi 0, %s90
    %s108 = sphi 0, %s108
    %s110 = sphi 0, %s108
    %s111 = sphi 0, %s110
    %s125 = sphi 0, %s111
    %s131 = sphi 0, %s133
    %s134 = sphi 0, %s131
    %s135 = sphi 0, %s134
    %s151 = sphi 0, %s135
  $region4: #{temperal_encoder_forward.3} parent=0 // loop_header_branch
    %14 = sbr.rel (%p12) target = $region8
  $region5: #{temperal_encoder_forward.3} parent=0 // loop_body
    %s16 = ssub.s32 %s11, 1
    %s17 = ssub.s32 %s11, 2
    %s18 = sadd.s32 %s11, 1
    %s19 = ssub.s32 %s11, %s18
    %p20 = scmp.eq.s32.totalorder %s19, 0
    %s22 = sadd.s32 %s21, 1
    %s23 = scalar_select %p20, %s21, %s22
    %p26 = pneg %p20
    %p27 = scmp.eq.s32.totalorder %s11, 1
    %p28 = por %p26, %p27
    %p29 = scmp.ne.s32.totalorder %s21, %s24
    %p30 = scmp.eq.s32.totalorder %s11, 0
    %p31 = por %p29, %p30
    %p32 = scmp.ne.s32.totalorder %s21, %s24
    %p33 = scmp.eq.s32.totalorder %s16, 1
    %p34 = por %p32, %p33
    %p35 = scmp.ne.s32.totalorder %s24, %s25
    %p36 = scmp.eq.s32.totalorder %s16, 0
    %p37 = por %p35, %p36
    %p38 = scmp.ne.s32.totalorder %s24, %s25
    %p39 = scmp.eq.s32.totalorder %s17, 1
    %p40 = por %p38, %p39
    %p42 = scmp.ne.s32.totalorder %s25, %s41
    %p43 = scmp.eq.s32.totalorder %s17, 0
    %p44 = por %p42, %p43
    %s46 = sadd.s32 %s45, 1
    %p49 = scmp.eq.s32.totalorder %s11, 1
    %p50 = scmp.ne.s32.totalorder %s45, %s47
    %p51 = scmp.eq.s32.totalorder %s11, 0
    %p52 = por %p50, %p51
    %p53 = scmp.ne.s32.totalorder %s45, %s47
    %p54 = scmp.eq.s32.totalorder %s16, 1
    %p55 = por %p53, %p54
    %p56 = scmp.ne.s32.totalorder %s47, %s48
    %p57 = scmp.eq.s32.totalorder %s16, 0
    %p58 = por %p56, %p57
    %p59 = scmp.ne.s32.totalorder %s47, %s48
    %p60 = scmp.eq.s32.totalorder %s17, 1
    %p61 = por %p59, %p60
    %p63 = scmp.ne.s32.totalorder %s48, %s62
    %p64 = scmp.eq.s32.totalorder %s17, 0
    %p65 = por %p63, %p64
    %s67 = sadd.s32 %s66, 1
    %p70 = scmp.eq.s32.totalorder %s11, 1
    %p71 = scmp.ne.s32.totalorder %s66, %s68
    %p72 = scmp.eq.s32.totalorder %s11, 0
    %p73 = por %p71, %p72
    %p74 = scmp.ne.s32.totalorder %s66, %s68
    %p75 = scmp.eq.s32.totalorder %s16, 1
    %p76 = por %p74, %p75
    %p77 = scmp.ne.s32.totalorder %s68, %s69
    %p78 = scmp.eq.s32.totalorder %s16, 0
    %p79 = por %p77, %p78
    %p80 = scmp.ne.s32.totalorder %s68, %s69
    %p81 = scmp.eq.s32.totalorder %s17, 1
    %p82 = por %p80, %p81
    %p84 = scmp.ne.s32.totalorder %s69, %s83
    %p85 = scmp.eq.s32.totalorder %s17, 0
    %p86 = por %p84, %p85
    %s88 = sadd.s32 %s87, 1
    %p91 = scmp.eq.s32.totalorder %s11, 1
    %p92 = scmp.ne.s32.totalorder %s87, %s89
    %p93 = scmp.eq.s32.totalorder %s11, 0
    %p94 = por %p92, %p93
    %p95 = scmp.ne.s32.totalorder %s87, %s89
    %p96 = scmp.eq.s32.totalorder %s16, 1
    %p97 = por %p95, %p96
    %p98 = scmp.ne.s32.totalorder %s89, %s90
    %p99 = scmp.eq.s32.totalorder %s16, 0
    %p100 = por %p98, %p99
    %p101 = scmp.ne.s32.totalorder %s89, %s90
    %p102 = scmp.eq.s32.totalorder %s17, 1
    %p103 = por %p101, %p102
    %p105 = scmp.ne.s32.totalorder %s90, %s104
    %p106 = scmp.eq.s32.totalorder %s17, 0
    %p107 = por %p105, %p106
    %s109 = sadd.s32 %s108, 1
    %p112 = scmp.eq.s32.totalorder %s11, 1
    %p113 = scmp.ne.s32.totalorder %s108, %s110
    %p114 = scmp.eq.s32.totalorder %s11, 0
    %p115 = por %p113, %p114
    %p116 = scmp.ne.s32.totalorder %s108, %s110
    %p117 = scmp.eq.s32.totalorder %s16, 1
    %p118 = por %p116, %p117
    %p119 = scmp.ne.s32.totalorder %s110, %s111
    %p120 = scmp.eq.s32.totalorder %s16, 0
    %p121 = por %p119, %p120
    %p122 = scmp.ne.s32.totalorder %s110, %s111
    %p123 = scmp.eq.s32.totalorder %s17, 1
    %p124 = por %p122, %p123
    %p126 = scmp.ne.s32.totalorder %s111, %s125
    %p127 = scmp.eq.s32.totalorder %s17, 0
    %p128 = por %p126, %p127
    %s129 = ssub.s32 %s11, %s18
    %p130 = scmp.eq.s32.totalorder %s129, 0
    %s132 = sadd.s32 %s131, 1
    %s133 = scalar_select %p130, %s131, %s132
    %p136 = pneg %p130
    %p137 = scmp.eq.s32.totalorder %s11, 1
    %p138 = por %p136, %p137
    %p139 = scmp.ne.s32.totalorder %s131, %s134
    %p140 = scmp.eq.s32.totalorder %s11, 0
    %p141 = por %p139, %p140
    %p142 = scmp.ne.s32.totalorder %s131, %s134
    %p143 = scmp.eq.s32.totalorder %s16, 1
    %p144 = por %p142, %p143
    %p145 = scmp.ne.s32.totalorder %s134, %s135
    %p146 = scmp.eq.s32.totalorder %s16, 0
    %p147 = por %p145, %p146
    %p148 = scmp.ne.s32.totalorder %s134, %s135
    %p149 = scmp.eq.s32.totalorder %s17, 1
    %p150 = por %p148, %p149
    %p152 = scmp.ne.s32.totalorder %s135, %s151
    %p153 = scmp.eq.s32.totalorder %s17, 0
    %p154 = por %p152, %p153
    %p155 = scmp.le.s32.totalorder 1, %s11
    %p156 = scmp.lt.s32.totalorder %s11, 3
    %p157 = pnand %p155, %p156
    %p158 = pneg %p157
    // Predicated region
    $region9: #{temperal_encoder_forward.3} parent=5 // pred_check
      _
    $region10: #{temperal_encoder_forward.3} parent=5 // pred_check_branch
      %160 = sbr.rel (%p157) target = $region12
    $region11: #{temperal_encoder_forward.3} parent=5 // pred_region
      %s161 = ssub.s32 %s11, 1
      // Predicated region
      $region13: #{temperal_encoder_forward.3} parent=11 // pred_check
        %p162 = pneg %p58
      $region14: #{temperal_encoder_forward.3} parent=11 // pred_check_branch
        %164 = sbr.rel (%p162) target = $region16
      $region15: #{temperal_encoder_forward.3} parent=11 // pred_region
        _
      $region16: #{temperal_encoder_forward.3} parent=11 // pred_fallthru
        _
      // Predicated region
      $region17: #{temperal_encoder_forward.3} parent=11 // pred_check
        %p165 = pneg %p79
      $region18: #{temperal_encoder_forward.3} parent=11 // pred_check_branch
        %167 = sbr.rel (%p165) target = $region20
      $region19: #{temperal_encoder_forward.3} parent=11 // pred_region
        _
      $region20: #{temperal_encoder_forward.3} parent=11 // pred_fallthru
        _
      // Predicated region
      $region21: #{temperal_encoder_forward.3} parent=11 // pred_check
        %p168 = pneg %p100
      $region22: #{temperal_encoder_forward.3} parent=11 // pred_check_branch
        %170 = sbr.rel (%p168) target = $region24
      $region23: #{temperal_encoder_forward.3} parent=11 // pred_region
        _
      $region24: #{temperal_encoder_forward.3} parent=11 // pred_fallthru
        _
      // Predicated region
      $region25: #{temperal_encoder_forward.3} parent=11 // pred_check
        %p171 = pneg %p121
      $region26: #{temperal_encoder_forward.3} parent=11 // pred_check_branch
        %173 = sbr.rel (%p171) target = $region28
      $region27: #{temperal_encoder_forward.3} parent=11 // pred_region
        _
      $region28: #{temperal_encoder_forward.3} parent=11 // pred_fallthru
        _
    $region12: #{temperal_encoder_forward.3} parent=5 // pred_fallthru
      _
    %p174 = scmp.lt.s32.totalorder %s11, 2
    // Predicated region
    $region29: #{temperal_encoder_forward.3} parent=5 // pred_check
      %p175 = pneg %p174
    $region30: #{temperal_encoder_forward.3} parent=5 // pred_check_branch
      %177 = sbr.rel (%p175) target = $region32
    $region31: #{temperal_encoder_forward.3} parent=5 // pred_region
      // Predicated region
      $region33: #{temperal_encoder_forward.3} parent=31 // pred_check
        %p178 = pneg %p31
      $region34: #{temperal_encoder_forward.3} parent=31 // pred_check_branch
        %180 = sbr.rel (%p178) target = $region36
      $region35: #{temperal_encoder_forward.3} parent=31 // pred_region
        %p181 = scmp.lt.s32.totalorder %s11, 1
        %s182 = scalar_select %p181, %s11, 1
        %s183 = smul.addr %s182, 8
        %s184 = scalar_lea.vmem %s0, %s183
      $region36: #{temperal_encoder_forward.3} parent=31 // pred_fallthru
        _
    $region32: #{temperal_encoder_forward.3} parent=5 // pred_fallthru
      _
    %p185 = scmp.le.s32.totalorder 1, %s11
    %p186 = scmp.lt.s32.totalorder %s11, 3
    %p187 = pnand %p185, %p186
    %p188 = pneg %p187
    // Predicated region
    $region37: #{temperal_encoder_forward.3} parent=5 // pred_check
      _
    $region38: #{temperal_encoder_forward.3} parent=5 // pred_check_branch
      %190 = sbr.rel (%p187) target = $region40
    $region39: #{temperal_encoder_forward.3} parent=5 // pred_region
      %s191 = ssub.s32 %s11, 1
      %p192 = scmp.lt.s32.totalorder %s16, 1
      %s193 = scalar_select %p192, %s16, 1
      %s194 = smul.addr %s193, 8
      %s195 = scalar_lea.vmem %s0, %s194
      %p196 = pneg %p37
      %p197 = pneg %p34
      %p198 = pneg %p58
      %p199 = pneg %p55
      %p200 = pneg %p79
      %p201 = pneg %p76
      %p202 = pneg %p100
      %p203 = pneg %p97
      %p204 = pneg %p121
      %p205 = pneg %p118
      %p206 = pneg %p147
      %p207 = pneg %p144
      %p208 = scmp.lt.s32.totalorder %s16, 1
      %s209 = scalar_select %p208, %s16, 1
      %s210 = smul.addr %s209, 8
      %s211 = scalar_lea.vmem %s5, %s210
      %p212 = scmp.lt.s32.totalorder %s16, 1
      %s213 = scalar_select %p212, %s16, 1
      %s214 = smul.addr %s213, 8
      %s215 = scalar_lea.vmem %s0, %s214
      %p216 = scmp.lt.s32.totalorder %s16, 1
      %s217 = scalar_select %p216, %s16, 1
      %s218 = smul.addr %s217, 8
      %s219 = scalar_lea.vmem %s5, %s218
      %v220 = vld [vmem:[%s215] sm:$0xff]
      %v221 = vld [vmem:[%s1] sm:$0x3]
      %223 = vset.pattern.permute.xlu0 0
      %224 = vperm.xlu0 %223, %v220
      %v225 = vpop.permute.xlu0 %224
      %v227 = vperm.slane %v221, 0
      %v228 = vmul.f32 %v225, %v227
      %229 = vset.pattern.permute.xlu0 1
      %230 = vperm.xlu0 %229, %v220
      %v231 = vpop.permute.xlu0 %230
      %v233 = vperm.slane %v221, 1
      %v234 = vmul.f32 %v231, %v233
      %v235 = vadd.f32 %v228, %v234
      %v236 = vld [vmem:[%s2] sm:$0x1]
      %v238 = vperm.slane %v236, 0
      %v240 = vadd.f32 %v235, %v238
      %v241 = vld [vmem:[%s4] sm:$0x7]
      %v242 = vld [vmem:[%s3] sm:$0xff]
      %v243 = vld [vmem:[%s3 + $0x8] sm:$0xff]
      %v244 = vld [vmem:[%s3 + $0x10] sm:$0xff]
      %v245 = vld [vmem:[%s3 + $0x18] sm:$0xff]
      %v246 = vperm.slane %v241, 0
      %vm247 = vcmask 261120
      %v249 = vsel %vm247, %v240, 0
      %251 = vmatpush.msra.mxu0 0.0
      %252 = vmatpush.msra.mxu0 0.0
      %253 = vmatpush.msra.mxu0 0.0
      %254 = vmatpush.msra.mxu0 0.0
      %255 = vmatpush.msra.mxu0 0.0
      %256 = vmatpush.msra.mxu0 0.0
      %257 = vmatpush.msra.mxu0 0.0
      %258 = vmatpush.msra.mxu0 0.0
      %259 = vmatpush.msra.mxu0 0.0
      %260 = vmatpush.msra.mxu0 0.0
      %261 = vmatpush.msra.mxu0 0.0
      %262 = vmatpush.msra.mxu0 0.0
      %263 = vmatpush.msra.mxu0 %v245
      %264 = vmatpush.msra.mxu0 %v244
      %265 = vmatpush.msra.mxu0 %v243
      %266 = vmatpush.msra.mxu0 %v242
      %267 = vmatmul.f32.gmra.mxu0 %v249
      %v268 = vpop.f32.mrf.mxu0
      %v269 = vadd.f32 %v246, %v268
      %270 = vdwg.mxu0
      %v271 = vsel %vm247, %v269, 0.0
      %272 = vadd.xlane.f32.xlu0 %v271
      %v273 = vpop.xlane.xlu0 %272
      %v274 = vrcp.pop 32.0
      %v275 = vmul.f32 32.0, %v274
      %v276 = vsub.f32 1.0, %v275
      %v277 = vmul.f32 %v274, %v276
      %v278 = vadd.f32 %v274, %v277
      %vm279 = vweird.f32 %v274
      %v280 = vsel %vm279, %v274, %v278
      %v281 = vmul.f32 %v273, %v280
      %v282 = vsub.f32 %v269, %v281
      %v283 = vmul.f32 %v282, %v282
      %v284 = vsel %vm247, %v283, 0.0
      %285 = vadd.xlane.f32.xlu0 %v284
      %v286 = vpop.xlane.xlu0 %285
      %v287 = vmul.f32 %v286, %v280
      %v288 = vadd.f32 %v287, 1e-05
      %v289 = vrsqrt.pop %v288
      %v290 = vmul.f32 %v289, %v288
      %v291 = vmul.f32 %v290, %v289
      %v292 = vmul.f32 0.5, %v291
      %v293 = vsub.f32 1.5, %v292
      %v294 = vmul.f32 %v289, %v293
      %vm295 = vweird.f32 %v288
      %vm296 = vweird.f32 %v289
      %vm297 = vmor %vm295, %vm296
      %v298 = vsel %vm297, %v289, %v294
      %v299 = vmul.f32 %v282, %v298
      %v300 = vperm.slane %v241, 1
      %v301 = vmul.f32 %v299, %v300
      %v302 = vperm.slane %v241, 2
      %v303 = vadd.f32 %v301, %v302
      %v304 = vmax.f32 %v303, 0.0
      %v305 = vadd.f32 %v304, %v240
      %306 = vst.msk [vmem:[%s219] sm:$0xff] %vm247, %v305
      %p307 = scmp.lt.s32.totalorder %s16, 1
      %s308 = scalar_select %p307, %s16, 1
      %s309 = smul.addr %s308, 8
      %s310 = scalar_lea.vmem %s5, %s309
      // Predicated region
      $region41: #{temperal_encoder_forward.3} parent=39 // pred_check
        %p311 = pneg %p144
      $region42: #{temperal_encoder_forward.3} parent=39 // pred_check_branch
        %313 = sbr.rel (%p311) target = $region44
      $region43: #{temperal_encoder_forward.3} parent=39 // pred_region
        _
      $region44: #{temperal_encoder_forward.3} parent=39 // pred_fallthru
        _
    $region40: #{temperal_encoder_forward.3} parent=5 // pred_fallthru
      _
    %p314 = scmp.le.s32.totalorder 2, %s11
    // Predicated region
    $region45: #{temperal_encoder_forward.3} parent=5 // pred_check
      %p315 = pneg %p314
    $region46: #{temperal_encoder_forward.3} parent=5 // pred_check_branch
      %317 = sbr.rel (%p315) target = $region48
    $region47: #{temperal_encoder_forward.3} parent=5 // pred_region
      %s318 = ssub.s32 %s11, 2
      // Predicated region
      $region49: #{temperal_encoder_forward.3} parent=47 // pred_check
        %p319 = pneg %p150
      $region50: #{temperal_encoder_forward.3} parent=47 // pred_check_branch
        %321 = sbr.rel (%p319) target = $region52
      $region51: #{temperal_encoder_forward.3} parent=47 // pred_region
        %p322 = scmp.lt.s32.totalorder %s17, 1
        %s323 = scalar_select %p322, %s17, 1
        %s324 = smul.addr %s323, 8
        %s325 = scalar_lea.vmem %s5, %s324
      $region52: #{temperal_encoder_forward.3} parent=47 // pred_fallthru
        _
    $region48: #{temperal_encoder_forward.3} parent=5 // pred_fallthru
      _
  $region6: #{temperal_encoder_forward.3} parent=0 // loop_footer
    %s15 = sadd.s32 1, %s11
  $region7: #{temperal_encoder_forward.3} parent=0 // loop_footer_branch
    %10 = sbr.rel target = $region3
  $region8: #{temperal_encoder_forward.3} parent=0 // loop_exit
    _

// kernel: temperal_encoder_forward.4
$region0: #{temperal_encoder_forward.4}
  #allocation0 [shape = 'u32[]', space=smem, size = 0x4, offset = 0x4, fixed_abs, tag = 'smem constant byte address 0x4 - core index']
  #allocation1 [shape = 'u32[72,128]{1,0:T(1,128)}', space=vmem, size = 0x9000, scoped, tag = 'internal scratch']
  %s0 = inlined_call_operand.vmem [shape: f32[2,8,32], index: 0, kind: input, shape index: {}]
  %s1 = inlined_call_operand.hbm [shape: f32[32,96], index: 1, kind: input, shape index: {}]
  %s2 = inlined_call_operand.vmem [shape: f32[1,96], index: 2, kind: input, shape index: {}]
  %s3 = inlined_call_operand.hbm [shape: f32[32,32], index: 3, kind: input, shape index: {}]
  %s4 = inlined_call_operand.vmem [shape: f32[1,32], index: 4, kind: input, shape index: {}]
  %s5 = inlined_call_operand.hbm [shape: f32[32,32], index: 5, kind: input, shape index: {}]
  %s6 = inlined_call_operand.vmem [shape: f32[1,32], index: 6, kind: input, shape index: {}]
  %s7 = inlined_call_operand.hbm [shape: f32[32,32], index: 7, kind: input, shape index: {}]
  %s8 = inlined_call_operand.vmem [shape: f32[1,32], index: 8, kind: input, shape index: {}]
  %s9 = inlined_call_operand.vmem [shape: f32[4,32], index: 9, kind: input, shape index: {}]
  %s10 = inlined_call_operand.vmem [shape: f32[2,8,32], index: 10, kind: output, shape index: {}]
  %s11 = sld [smem:[#allocation0]]
  $region89: #{temperal_encoder_forward.4} parent=0
    _
  %s13 = ssub.s32 1, %s11
  %s14 = scalar_select 0, %s13, %s11
  $region1: #{temperal_encoder_forward.4} parent=0
    #allocation2 [shape = 'u8[16384]{0}', space=vmem, size = 0x4000, scoped, tag = 'input window, operand 1, single buffered']
    #allocation3 [shape = 's32[2]{0}', space=sflag, size = 0x8, scoped, tag = 'scoped memory for temperal_encoder_forward.4']
    #allocation4 [shape = 'u8[16384]{0}', space=vmem, size = 0x4000, scoped, tag = 'input window, operand 3, single buffered']
    #allocation5 [shape = 's32[1]{0}', space=sflag, size = 0x4, scoped, tag = 'scoped memory for temperal_encoder_forward.4']
    #allocation6 [shape = 'u8[16384]{0}', space=vmem, size = 0x4000, scoped, tag = 'input window, operand 5, single buffered']
    #allocation7 [shape = 'u8[16384]{0}', space=vmem, size = 0x4000, scoped, tag = 'input window, operand 7, single buffered']
    #allocation8 [shape = 's32[1]{0}', space=sflag, size = 0x4, scoped, tag = 'scoped memory for temperal_encoder_forward.4']
    %15 = vsyncpa [#allocation3], 0
    %16 = vsyncpa [#allocation5], 0
    %17 = vsyncpa [#allocation8], 0
    loop: start=0, step=1, limit=4
    $region2: #{temperal_encoder_forward.4} parent=1 // loop_pre_header
      _
    $region3: #{temperal_encoder_forward.4} parent=1 // loop_header
      %s19 = sphi 0, %s23
      %p20 = scmp.ge.s32.totalorder %s19, 4
      %s29 = sphi 0, %s31
      %s32 = sphi 0, %s29
      %s33 = sphi 0, %s32
      %s49 = sphi 0, %s33
      %s53 = sphi 0, %s53
      %s55 = sphi 0, %s53
      %s56 = sphi 0, %s55
      %s70 = sphi 0, %s56
      %s74 = sphi 0, %s74
      %s76 = sphi 0, %s74
      %s77 = sphi 0, %s76
      %s91 = sphi 0, %s77
      %s95 = sphi 0, %s95
      %s97 = sphi 0, %s95
      %s98 = sphi 0, %s97
      %s112 = sphi 0, %s98
      %s116 = sphi 0, %s116
      %s118 = sphi 0, %s116
      %s119 = sphi 0, %s118
      %s133 = sphi 0, %s119
      %s137 = sphi 0, %s137
      %s139 = sphi 0, %s137
      %s140 = sphi 0, %s139
      %s154 = sphi 0, %s140
      %s158 = sphi 0, %s158
      %s160 = sphi 0, %s158
      %s161 = sphi 0, %s160
      %s175 = sphi 0, %s161
      %s179 = sphi 0, %s179
      %s181 = sphi 0, %s179
      %s182 = sphi 0, %s181
      %s196 = sphi 0, %s182
      %s200 = sphi 0, %s200
      %s202 = sphi 0, %s200
      %s203 = sphi 0, %s202
      %s217 = sphi 0, %s203
      %s221 = sphi 0, %s221
      %s223 = sphi 0, %s221
      %s224 = sphi 0, %s223
      %s238 = sphi 0, %s224
      %s244 = sphi 0, %s246
      %s247 = sphi 0, %s244
      %s248 = sphi 0, %s247
      %s264 = sphi 0, %s248
    $region4: #{temperal_encoder_forward.4} parent=1 // loop_header_branch
      %22 = sbr.rel (%p20) target = $region8
    $region5: #{temperal_encoder_forward.4} parent=1 // loop_body
      %s24 = ssub.s32 %s19, 1
      %s25 = ssub.s32 %s19, 2
      %s26 = sadd.s32 %s19, 1
      %s27 = ssub.s32 %s19, %s26
      %p28 = scmp.eq.s32.totalorder %s27, 0
      %s30 = sadd.s32 %s29, 1
      %s31 = scalar_select %p28, %s29, %s30
      %p34 = pneg %p28
      %p35 = scmp.eq.s32.totalorder %s19, 1
      %p36 = por %p34, %p35
      %p37 = scmp.ne.s32.totalorder %s29, %s32
      %p38 = scmp.eq.s32.totalorder %s19, 0
      %p39 = por %p37, %p38
      %p40 = scmp.ne.s32.totalorder %s29, %s32
      %p41 = scmp.eq.s32.totalorder %s24, 1
      %p42 = por %p40, %p41
      %p43 = scmp.ne.s32.totalorder %s32, %s33
      %p44 = scmp.eq.s32.totalorder %s24, 0
      %p45 = por %p43, %p44
      %p46 = scmp.ne.s32.totalorder %s32, %s33
      %p47 = scmp.eq.s32.totalorder %s25, 1
      %p48 = por %p46, %p47
      %p50 = scmp.ne.s32.totalorder %s33, %s49
      %p51 = scmp.eq.s32.totalorder %s25, 0
      %p52 = por %p50, %p51
      %s54 = sadd.s32 %s53, 1
      %p57 = scmp.eq.s32.totalorder %s19, 1
      %p58 = scmp.ne.s32.totalorder %s53, %s55
      %p59 = scmp.eq.s32.totalorder %s19, 0
      %p60 = por %p58, %p59
      %p61 = scmp.ne.s32.totalorder %s53, %s55
      %p62 = scmp.eq.s32.totalorder %s24, 1
      %p63 = por %p61, %p62
      %p64 = scmp.ne.s32.totalorder %s55, %s56
      %p65 = scmp.eq.s32.totalorder %s24, 0
      %p66 = por %p64, %p65
      %p67 = scmp.ne.s32.totalorder %s55, %s56
      %p68 = scmp.eq.s32.totalorder %s25, 1
      %p69 = por %p67, %p68
      %p71 = scmp.ne.s32.totalorder %s56, %s70
      %p72 = scmp.eq.s32.totalorder %s25, 0
      %p73 = por %p71, %p72
      %s75 = sadd.s32 %s74, 1
      %p78 = scmp.eq.s32.totalorder %s19, 1
      %p79 = scmp.ne.s32.totalorder %s74, %s76
      %p80 = scmp.eq.s32.totalorder %s19, 0
      %p81 = por %p79, %p80
      %p82 = scmp.ne.s32.totalorder %s74, %s76
      %p83 = scmp.eq.s32.totalorder %s24, 1
      %p84 = por %p82, %p83
      %p85 = scmp.ne.s32.totalorder %s76, %s77
      %p86 = scmp.eq.s32.totalorder %s24, 0
      %p87 = por %p85, %p86
      %p88 = scmp.ne.s32.totalorder %s76, %s77
      %p89 = scmp.eq.s32.totalorder %s25, 1
      %p90 = por %p88, %p89
      %p92 = scmp.ne.s32.totalorder %s77, %s91
      %p93 = scmp.eq.s32.totalorder %s25, 0
      %p94 = por %p92, %p93
      %s96 = sadd.s32 %s95, 1
      %p99 = scmp.eq.s32.totalorder %s19, 1
      %p100 = scmp.ne.s32.totalorder %s95, %s97
      %p101 = scmp.eq.s32.totalorder %s19, 0
      %p102 = por %p100, %p101
      %p103 = scmp.ne.s32.totalorder %s95, %s97
      %p104 = scmp.eq.s32.totalorder %s24, 1
      %p105 = por %p103, %p104
      %p106 = scmp.ne.s32.totalorder %s97, %s98
      %p107 = scmp.eq.s32.totalorder %s24, 0
      %p108 = por %p106, %p107
      %p109 = scmp.ne.s32.totalorder %s97, %s98
      %p110 = scmp.eq.s32.totalorder %s25, 1
      %p111 = por %p109, %p110
      %p113 = scmp.ne.s32.totalorder %s98, %s112
      %p114 = scmp.eq.s32.totalorder %s25, 0
      %p115 = por %p113, %p114
      %s117 = sadd.s32 %s116, 1
      %p120 = scmp.eq.s32.totalorder %s19, 1
      %p121 = scmp.ne.s32.totalorder %s116, %s118
      %p122 = scmp.eq.s32.totalorder %s19, 0
      %p123 = por %p121, %p122
      %p124 = scmp.ne.s32.totalorder %s116, %s118
      %p125 = scmp.eq.s32.totalorder %s24, 1
      %p126 = por %p124, %p125
      %p127 = scmp.ne.s32.totalorder %s118, %s119
      %p128 = scmp.eq.s32.totalorder %s24, 0
      %p129 = por %p127, %p128
      %p130 = scmp.ne.s32.totalorder %s118, %s119
      %p131 = scmp.eq.s32.totalorder %s25, 1
      %p132 = por %p130, %p131
      %p134 = scmp.ne.s32.totalorder %s119, %s133
      %p135 = scmp.eq.s32.totalorder %s25, 0
      %p136 = por %p134, %p135
      %s138 = sadd.s32 %s137, 1
      %p141 = scmp.eq.s32.totalorder %s19, 1
      %p142 = scmp.ne.s32.totalorder %s137, %s139
      %p143 = scmp.eq.s32.totalorder %s19, 0
      %p144 = por %p142, %p143
      %p145 = scmp.ne.s32.totalorder %s137, %s139
      %p146 = scmp.eq.s32.totalorder %s24, 1
      %p147 = por %p145, %p146
      %p148 = scmp.ne.s32.totalorder %s139, %s140
      %p149 = scmp.eq.s32.totalorder %s24, 0
      %p150 = por %p148, %p149
      %p151 = scmp.ne.s32.totalorder %s139, %s140
      %p152 = scmp.eq.s32.totalorder %s25, 1
      %p153 = por %p151, %p152
      %p155 = scmp.ne.s32.totalorder %s140, %s154
      %p156 = scmp.eq.s32.totalorder %s25, 0
      %p157 = por %p155, %p156
      %s159 = sadd.s32 %s158, 1
      %p162 = scmp.eq.s32.totalorder %s19, 1
      %p163 = scmp.ne.s32.totalorder %s158, %s160
      %p164 = scmp.eq.s32.totalorder %s19, 0
      %p165 = por %p163, %p164
      %p166 = scmp.ne.s32.totalorder %s158, %s160
      %p167 = scmp.eq.s32.totalorder %s24, 1
      %p168 = por %p166, %p167
      %p169 = scmp.ne.s32.totalorder %s160, %s161
      %p170 = scmp.eq.s32.totalorder %s24, 0
      %p171 = por %p169, %p170
      %p172 = scmp.ne.s32.totalorder %s160, %s161
      %p173 = scmp.eq.s32.totalorder %s25, 1
      %p174 = por %p172, %p173
      %p176 = scmp.ne.s32.totalorder %s161, %s175
      %p177 = scmp.eq.s32.totalorder %s25, 0
      %p178 = por %p176, %p177
      %s180 = sadd.s32 %s179, 1
      %p183 = scmp.eq.s32.totalorder %s19, 1
      %p184 = scmp.ne.s32.totalorder %s179, %s181
      %p185 = scmp.eq.s32.totalorder %s19, 0
      %p186 = por %p184, %p185
      %p187 = scmp.ne.s32.totalorder %s179, %s181
      %p188 = scmp.eq.s32.totalorder %s24, 1
      %p189 = por %p187, %p188
      %p190 = scmp.ne.s32.totalorder %s181, %s182
      %p191 = scmp.eq.s32.totalorder %s24, 0
      %p192 = por %p190, %p191
      %p193 = scmp.ne.s32.totalorder %s181, %s182
      %p194 = scmp.eq.s32.totalorder %s25, 1
      %p195 = por %p193, %p194
      %p197 = scmp.ne.s32.totalorder %s182, %s196
      %p198 = scmp.eq.s32.totalorder %s25, 0
      %p199 = por %p197, %p198
      %s201 = sadd.s32 %s200, 1
      %p204 = scmp.eq.s32.totalorder %s19, 1
      %p205 = scmp.ne.s32.totalorder %s200, %s202
      %p206 = scmp.eq.s32.totalorder %s19, 0
      %p207 = por %p205, %p206
      %p208 = scmp.ne.s32.totalorder %s200, %s202
      %p209 = scmp.eq.s32.totalorder %s24, 1
      %p210 = por %p208, %p209
      %p211 = scmp.ne.s32.totalorder %s202, %s203
      %p212 = scmp.eq.s32.totalorder %s24, 0
      %p213 = por %p211, %p212
      %p214 = scmp.ne.s32.totalorder %s202, %s203
      %p215 = scmp.eq.s32.totalorder %s25, 1
      %p216 = por %p214, %p215
      %p218 = scmp.ne.s32.totalorder %s203, %s217
      %p219 = scmp.eq.s32.totalorder %s25, 0
      %p220 = por %p218, %p219
      %s222 = sadd.s32 %s221, 1
      %p225 = scmp.eq.s32.totalorder %s19, 1
      %p226 = scmp.ne.s32.totalorder %s221, %s223
      %p227 = scmp.eq.s32.totalorder %s19, 0
      %p228 = por %p226, %p227
      %p229 = scmp.ne.s32.totalorder %s221, %s223
      %p230 = scmp.eq.s32.totalorder %s24, 1
      %p231 = por %p229, %p230
      %p232 = scmp.ne.s32.totalorder %s223, %s224
      %p233 = scmp.eq.s32.totalorder %s24, 0
      %p234 = por %p232, %p233
      %p235 = scmp.ne.s32.totalorder %s223, %s224
      %p236 = scmp.eq.s32.totalorder %s25, 1
      %p237 = por %p235, %p236
      %p239 = scmp.ne.s32.totalorder %s224, %s238
      %p240 = scmp.eq.s32.totalorder %s25, 0
      %p241 = por %p239, %p240
      %s242 = ssub.s32 %s19, %s26
      %p243 = scmp.eq.s32.totalorder %s242, 0
      %s245 = sadd.s32 %s244, 1
      %s246 = scalar_select %p243, %s244, %s245
      %p249 = pneg %p243
      %p250 = scmp.eq.s32.totalorder %s19, 1
      %p251 = por %p249, %p250
      %p252 = scmp.ne.s32.totalorder %s244, %s247
      %p253 = scmp.eq.s32.totalorder %s19, 0
      %p254 = por %p252, %p253
      %p255 = scmp.ne.s32.totalorder %s244, %s247
      %p256 = scmp.eq.s32.totalorder %s24, 1
      %p257 = por %p255, %p256
      %p258 = scmp.ne.s32.totalorder %s247, %s248
      %p259 = scmp.eq.s32.totalorder %s24, 0
      %p260 = por %p258, %p259
      %p261 = scmp.ne.s32.totalorder %s247, %s248
      %p262 = scmp.eq.s32.totalorder %s25, 1
      %p263 = por %p261, %p262
      %p265 = scmp.ne.s32.totalorder %s248, %s264
      %p266 = scmp.eq.s32.totalorder %s25, 0
      %p267 = por %p265, %p266
      %p268 = scmp.le.s32.totalorder 1, %s19
      %p269 = scmp.lt.s32.totalorder %s19, 3
      %p270 = pnand %p268, %p269
      %p271 = pneg %p270
      // Predicated region
      $region9: #{temperal_encoder_forward.4} parent=5 // pred_check
        _
      $region10: #{temperal_encoder_forward.4} parent=5 // pred_check_branch
        %273 = sbr.rel (%p270) target = $region12
      $region11: #{temperal_encoder_forward.4} parent=5 // pred_region
        %s274 = ssub.s32 %s19, 1
        // Predicated region
        $region13: #{temperal_encoder_forward.4} parent=11 // pred_check
          %p275 = pneg %p66
        $region14: #{temperal_encoder_forward.4} parent=11 // pred_check_branch
          %277 = sbr.rel (%p275) target = $region16
        $region15: #{temperal_encoder_forward.4} parent=11 // pred_region
          %279 = vsyncadd [#allocation3], 0
          %s280 = sshll.u32 %s1, 4
          %s281 = int_to_ptr.hbm [resolvable:$true] %s280
          %s282 = sshll.u32 [#allocation2], 4
          %s283 = int_to_ptr.vmem [resolvable:$true] %s282
          %288 = dma.hbm_to_vmem [thread:$0]  %s281, 512, %s283, [#allocation3], 128, 128, 8
        $region16: #{temperal_encoder_forward.4} parent=11 // pred_fallthru
          _
        // Predicated region
        $region17: #{temperal_encoder_forward.4} parent=11 // pred_check
          %p289 = pneg %p87
        $region18: #{temperal_encoder_forward.4} parent=11 // pred_check_branch
          %291 = sbr.rel (%p289) target = $region20
        $region19: #{temperal_encoder_forward.4} parent=11 // pred_region
          _
        $region20: #{temperal_encoder_forward.4} parent=11 // pred_fallthru
          _
        // Predicated region
        $region21: #{temperal_encoder_forward.4} parent=11 // pred_check
          %p292 = pneg %p108
        $region22: #{temperal_encoder_forward.4} parent=11 // pred_check_branch
          %294 = sbr.rel (%p292) target = $region24
        $region23: #{temperal_encoder_forward.4} parent=11 // pred_region
          %296 = vsyncadd [#allocation5], 0
          %s297 = sshll.u32 %s3, 4
          %s298 = int_to_ptr.hbm [resolvable:$true] %s297
          %s299 = sshll.u32 [#allocation4], 4
          %s300 = int_to_ptr.vmem [resolvable:$true] %s299
          %305 = dma.hbm_to_vmem [thread:$0]  %s298, 512, %s300, [#allocation5], 128, 128, 8
        $region24: #{temperal_encoder_forward.4} parent=11 // pred_fallthru
          _
        // Predicated region
        $region25: #{temperal_encoder_forward.4} parent=11 // pred_check
          %p306 = pneg %p129
        $region26: #{temperal_encoder_forward.4} parent=11 // pred_check_branch
          %308 = sbr.rel (%p306) target = $region28
        $region27: #{temperal_encoder_forward.4} parent=11 // pred_region
          _
        $region28: #{temperal_encoder_forward.4} parent=11 // pred_fallthru
          _
        // Predicated region
        $region29: #{temperal_encoder_forward.4} parent=11 // pred_check
          %p309 = pneg %p150
        $region30: #{temperal_encoder_forward.4} parent=11 // pred_check_branch
          %311 = sbr.rel (%p309) target = $region32
        $region31: #{temperal_encoder_forward.4} parent=11 // pred_region
          %313 = vsyncadd [#allocation5], 0
          %s314 = sshll.u32 %s5, 4
          %s315 = int_to_ptr.hbm [resolvable:$true] %s314
          %s316 = sshll.u32 [#allocation6], 4
          %s317 = int_to_ptr.vmem [resolvable:$true] %s316
          %322 = dma.hbm_to_vmem [thread:$0]  %s315, 512, %s317, [#allocation5], 128, 128, 8
        $region32: #{temperal_encoder_forward.4} parent=11 // pred_fallthru
          _
        // Predicated region
        $region33: #{temperal_encoder_forward.4} parent=11 // pred_check
          %p323 = pneg %p171
        $region34: #{temperal_encoder_forward.4} parent=11 // pred_check_branch
          %325 = sbr.rel (%p323) target = $region36
        $region35: #{temperal_encoder_forward.4} parent=11 // pred_region
          _
        $region36: #{temperal_encoder_forward.4} parent=11 // pred_fallthru
          _
        // Predicated region
        $region37: #{temperal_encoder_forward.4} parent=11 // pred_check
          %p326 = pneg %p192
        $region38: #{temperal_encoder_forward.4} parent=11 // pred_check_branch
          %328 = sbr.rel (%p326) target = $region40
        $region39: #{temperal_encoder_forward.4} parent=11 // pred_region
          %330 = vsyncadd [#allocation8], 0
          %s331 = sshll.u32 %s7, 4
          %s332 = int_to_ptr.hbm [resolvable:$true] %s331
          %s333 = sshll.u32 [#allocation7], 4
          %s334 = int_to_ptr.vmem [resolvable:$true] %s333
          %339 = dma.hbm_to_vmem [thread:$0]  %s332, 512, %s334, [#allocation8], 128, 128, 8
        $region40: #{temperal_encoder_forward.4} parent=11 // pred_fallthru
          _
        // Predicated region
        $region41: #{temperal_encoder_forward.4} parent=11 // pred_check
          %p340 = pneg %p213
        $region42: #{temperal_encoder_forward.4} parent=11 // pred_check_branch
          %342 = sbr.rel (%p340) target = $region44
        $region43: #{temperal_encoder_forward.4} parent=11 // pred_region
          _
        $region44: #{temperal_encoder_forward.4} parent=11 // pred_fallthru
          _
        // Predicated region
        $region45: #{temperal_encoder_forward.4} parent=11 // pred_check
          %p343 = pneg %p234
        $region46: #{temperal_encoder_forward.4} parent=11 // pred_check_branch
          %345 = sbr.rel (%p343) target = $region48
        $region47: #{temperal_encoder_forward.4} parent=11 // pred_region
          _
        $region48: #{temperal_encoder_forward.4} parent=11 // pred_fallthru
          _
      $region12: #{temperal_encoder_forward.4} parent=5 // pred_fallthru
        _
      %p346 = scmp.lt.s32.totalorder %s19, 2
      // Predicated region
      $region49: #{temperal_encoder_forward.4} parent=5 // pred_check
        %p347 = pneg %p346
      $region50: #{temperal_encoder_forward.4} parent=5 // pred_check_branch
        %349 = sbr.rel (%p347) target = $region52
      $region51: #{temperal_encoder_forward.4} parent=5 // pred_region
        // Predicated region
        $region53: #{temperal_encoder_forward.4} parent=51 // pred_check
          %p350 = pneg %p39
        $region54: #{temperal_encoder_forward.4} parent=51 // pred_check_branch
          %352 = sbr.rel (%p350) target = $region56
        $region55: #{temperal_encoder_forward.4} parent=51 // pred_region
          %p353 = scmp.lt.s32.totalorder %s19, 1
          %s354 = scalar_select %p353, %s19, 1
          %s355 = smul.addr %s354, 8
          %s356 = scalar_lea.vmem %s0, %s355
        $region56: #{temperal_encoder_forward.4} parent=51 // pred_fallthru
          _
      $region52: #{temperal_encoder_forward.4} parent=5 // pred_fallthru
        _
      %p357 = scmp.le.s32.totalorder 1, %s19
      %p358 = scmp.lt.s32.totalorder %s19, 3
      %p359 = pnand %p357, %p358
      %p360 = pneg %p359
      // Predicated region
      $region57: #{temperal_encoder_forward.4} parent=5 // pred_check
        _
      $region58: #{temperal_encoder_forward.4} parent=5 // pred_check_branch
        %362 = sbr.rel (%p359) target = $region60
      $region59: #{temperal_encoder_forward.4} parent=5 // pred_region
        %s363 = ssub.s32 %s19, 1
        // Predicated region
        $region61: #{temperal_encoder_forward.4} parent=59 // pred_check
          %p364 = pneg %p66
        $region62: #{temperal_encoder_forward.4} parent=59 // pred_check_branch
          %366 = sbr.rel (%p364) target = $region64
        $region63: #{temperal_encoder_forward.4} parent=59 // pred_region
          %368 = dma.done [#allocation3], 512
        $region64: #{temperal_encoder_forward.4} parent=59 // pred_fallthru
          _
        // Predicated region
        $region65: #{temperal_encoder_forward.4} parent=59 // pred_check
          %p369 = pneg %p108
        $region66: #{temperal_encoder_forward.4} parent=59 // pred_check_branch
          %371 = sbr.rel (%p369) target = $region68
        $region67: #{temperal_encoder_forward.4} parent=59 // pred_region
          %373 = dma.done [#allocation5], 512
        $region68: #{temperal_encoder_forward.4} parent=59 // pred_fallthru
          _
        // Predicated region
        $region69: #{temperal_encoder_forward.4} parent=59 // pred_check
          %p374 = pneg %p150
        $region70: #{temperal_encoder_forward.4} parent=59 // pred_check_branch
          %376 = sbr.rel (%p374) target = $region72
        $region71: #{temperal_encoder_forward.4} parent=59 // pred_region
          %378 = dma.done [#allocation5], 512
        $region72: #{temperal_encoder_forward.4} parent=59 // pred_fallthru
          _
        // Predicated region
        $region73: #{temperal_encoder_forward.4} parent=59 // pred_check
          %p379 = pneg %p192
        $region74: #{temperal_encoder_forward.4} parent=59 // pred_check_branch
          %381 = sbr.rel (%p379) target = $region76
        $region75: #{temperal_encoder_forward.4} parent=59 // pred_region
          %383 = dma.done [#allocation8], 512
        $region76: #{temperal_encoder_forward.4} parent=59 // pred_fallthru
          _
        %p384 = scmp.lt.s32.totalorder %s24, 1
        %s385 = scalar_select %p384, %s24, 1
        %s386 = smul.addr %s385, 8
        %s387 = scalar_lea.vmem %s0, %s386
        %p388 = pneg %p45
        %p389 = pneg %p42
        %p390 = pneg %p66
        %p391 = pneg %p63
        %p392 = pneg %p87
        %p393 = pneg %p84
        %p394 = pneg %p108
        %p395 = pneg %p105
        %p396 = pneg %p129
        %p397 = pneg %p126
        %p398 = pneg %p150
        %p399 = pneg %p147
        %p400 = pneg %p171
        %p401 = pneg %p168
        %p402 = pneg %p192
        %p403 = pneg %p189
        %p404 = pneg %p213
        %p405 = pneg %p210
        %p406 = pneg %p234
        %p407 = pneg %p231
        %p408 = pneg %p260
        %p409 = pneg %p257
        %p410 = scmp.lt.s32.totalorder %s24, 1
        %s411 = scalar_select %p410, %s24, 1
        %s412 = smul.addr %s411, 8
        %s413 = scalar_lea.vmem %s10, %s412
        %p414 = scmp.lt.s32.totalorder %s24, 1
        %s415 = scalar_select %p414, %s24, 1
        %s416 = smul.addr %s415, 8
        %s417 = scalar_lea.vmem %s0, %s416
        %p418 = scmp.lt.s32.totalorder %s24, 1
        %s419 = scalar_select %p418, %s24, 1
        %s420 = smul.addr %s419, 8
        %s421 = scalar_lea.vmem %s10, %s420
        %v422 = vld [vmem:[%s417] sm:$0xff]
        %v423 = vld [vmem:[#allocation2] sm:$0xff]
        %v424 = vld [vmem:[#allocation2 + $0x8] sm:$0xff]
        %v425 = vld [vmem:[#allocation2 + $0x10] sm:$0xff]
        %v426 = vld [vmem:[#allocation2 + $0x18] sm:$0xff]
        %v427 = vld [vmem:[%s2] sm:$0x1]
        %v429 = vperm.slane %v427, 0
        %vm431 = vcmask 261120
        %v433 = vsel %vm431, %v422, 0
        %435 = vmatpush.msra.mxu0 0.0
        %436 = vmatpush.msra.mxu0 0.0
        %437 = vmatpush.msra.mxu0 0.0
        %438 = vmatpush.msra.mxu0 0.0
        %439 = vmatpush.msra.mxu0 0.0
        %440 = vmatpush.msra.mxu0 0.0
        %441 = vmatpush.msra.mxu0 0.0
        %442 = vmatpush.msra.mxu0 0.0
        %443 = vmatpush.msra.mxu0 0.0
        %444 = vmatpush.msra.mxu0 0.0
        %445 = vmatpush.msra.mxu0 0.0
        %446 = vmatpush.msra.mxu0 0.0
        %447 = vmatpush.msra.mxu0 %v426
        %448 = vmatpush.msra.mxu0 %v425
        %449 = vmatpush.msra.mxu0 %v424
        %450 = vmatpush.msra.mxu0 %v423
        %451 = vmatmul.f32.gmra.mxu0 %v433
        %v452 = vpop.f32.mrf.mxu0
        %v453 = vadd.f32 %v429, %v452
        %454 = vdwg.mxu0
        %v455 = vld [vmem:[#allocation4] sm:$0xff]
        %v456 = vld [vmem:[#allocation4 + $0x8] sm:$0xff]
        %v457 = vld [vmem:[#allocation4 + $0x10] sm:$0xff]
        %v458 = vld [vmem:[#allocation4 + $0x18] sm:$0xff]
        %v459 = vld [vmem:[%s4] sm:$0x1]
        %461 = vrot.lane.b32.xlu0 %v453, 96
        %v462 = vpop.permute.xlu0 %461
        %vm463 = vcmask 130048
        %v464 = vsel %vm463, %v453, 0
        %v466 = vsel %vm463, %v462, 0
        %468 = vmatpush.xpose.msra.mxu0 0.0
        %469 = vmatpush.xpose.msra.mxu0 0.0
        %470 = vmatpush.xpose.msra.mxu0 0.0
        %471 = vmatpush.xpose.msra.mxu0 0.0
        %472 = vmatpush.xpose.msra.mxu0 0.0
        %473 = vmatpush.xpose.msra.mxu0 0.0
        %474 = vmatpush.xpose.msra.mxu0 0.0
        %475 = vmatpush.xpose.msra.mxu0 0.0
        %476 = vmatpush.xpose.msra.mxu0 0.0
        %477 = vmatpush.xpose.msra.mxu0 0.0
        %478 = vmatpush.xpose.msra.mxu0 0.0
        %479 = vmatpush.xpose.msra.mxu0 0.0
        %480 = vmatpush.xpose.msra.mxu0 0.0
        %481 = vmatpush.xpose.msra.mxu0 0.0
        %482 = vmatpush.xpose.msra.mxu0 0.0
        %483 = vmatpush.xpose.msra.mxu0 %v466
        %484 = vmatmul.f32.gmra.mxu0 %v464
        %v485 = vpop.f32.mrf.mxu0
        %v486 = vadd.f32 0.0, %v485
        %487 = vdwg.mxu0
        %v488 = vmul.f32 %v486, 0.25
        %vm489 = vcmask 64512
        %v490 = vsel %vm489, %v488, -inf
        %491 = vmax.xlane.f32.xlu0 %v490
        %v492 = vpop.xlane.xlu0 %491
        %v493 = vsub.f32 %v488, %v492
        %v494 = vmul.f32 %v493, 1.442695
        %v495 = vpow.pop %v494
        %v496 = vsel %vm489, %v495, 0.0
        %497 = vadd.xlane.f32.xlu0 %v496
        %v498 = vpop.xlane.xlu0 %497
        %v499 = vrcp.pop %v498
        %v500 = vmul.f32 %v498, %v499
        %v501 = vsub.f32 1.0, %v500
        %v502 = vmul.f32 %v499, %v501
        %v503 = vadd.f32 %v499, %v502
        %vm504 = vweird.f32 %v498
        %vm505 = vweird.f32 %v499
        %vm506 = vmor %vm504, %vm505
        %v507 = vsel %vm506, %v499, %v503
        %v508 = vand.u32 2147483647, %v498
        %vm509 = vcmp.eq.f32.partialorder %v508, 8.507059e+37
        %v510 = vand.u32 %v498, 2147483648
        %v511 = vor.u32 1.1754944e-38, %v510
        %v512 = vsel %vm509, %v511, %v507
        %v513 = vmul.f32 %v495, %v512
        %514 = vrot.lane.b32.xlu0 %v453, 64
        %v515 = vpop.permute.xlu0 %514
        %v518 = vsel %vm489, %v513, 0
        %520 = vmatpush.msra.mxu0 0.0
        %521 = vmatpush.msra.mxu0 0.0
        %522 = vmatpush.msra.mxu0 0.0
        %523 = vmatpush.msra.mxu0 0.0
        %524 = vmatpush.msra.mxu0 0.0
        %525 = vmatpush.msra.mxu0 0.0
        %526 = vmatpush.msra.mxu0 0.0
        %527 = vmatpush.msra.mxu0 0.0
        %528 = vmatpush.msra.mxu0 0.0
        %529 = vmatpush.msra.mxu0 0.0
        %530 = vmatpush.msra.mxu0 0.0
        %531 = vmatpush.msra.mxu0 0.0
        %532 = vmatpush.msra.mxu0 0.0
        %533 = vmatpush.msra.mxu0 0.0
        %534 = vmatpush.msra.mxu0 0.0
        %535 = vmatpush.msra.mxu0 %v515
        %536 = vmatmul.f32.gmra.mxu0 %v518
        %v537 = vpop.f32.mrf.mxu0
        %v538 = vadd.f32 0.0, %v537
        %539 = vdwg.mxu0
        %v541 = vsel %vm463, %v538, 0
        %543 = vmatpush.msra.mxu0 0.0
        %544 = vmatpush.msra.mxu0 0.0
        %545 = vmatpush.msra.mxu0 0.0
        %546 = vmatpush.msra.mxu0 0.0
        %547 = vmatpush.msra.mxu0 0.0
        %548 = vmatpush.msra.mxu0 0.0
        %549 = vmatpush.msra.mxu0 0.0
        %550 = vmatpush.msra.mxu0 0.0
        %551 = vmatpush.msra.mxu0 0.0
        %552 = vmatpush.msra.mxu0 0.0
        %553 = vmatpush.msra.mxu0 0.0
        %554 = vmatpush.msra.mxu0 0.0
        %555 = vmatpush.msra.mxu0 0.0
        %556 = vmatpush.msra.mxu0 0.0
        %557 = vmatpush.msra.mxu0 %v456
        %558 = vmatpush.msra.mxu0 %v455
        %559 = vmatmul.f32.gmra.mxu0 %v541
        %v560 = vpop.f32.mrf.mxu0
        %v561 = vadd.f32 0.0, %v560
        %562 = vdwg.mxu0
        %v564 = vperm.slane %v459, 0
        %v566 = vadd.f32 %v564, %v561
        %567 = vrot.lane.b32.xlu0 %v453, 112
        %v568 = vpop.permute.xlu0 %567
        %569 = vrot.lane.b32.xlu0 %v453, 80
        %v570 = vpop.permute.xlu0 %569
        %v571 = vsel %vm463, %v568, 0
        %v573 = vsel %vm463, %v570, 0
        %575 = vmatpush.xpose.msra.mxu0 0.0
        %576 = vmatpush.xpose.msra.mxu0 0.0
        %577 = vmatpush.xpose.msra.mxu0 0.0
        %578 = vmatpush.xpose.msra.mxu0 0.0
        %579 = vmatpush.xpose.msra.mxu0 0.0
        %580 = vmatpush.xpose.msra.mxu0 0.0
        %581 = vmatpush.xpose.msra.mxu0 0.0
        %582 = vmatpush.xpose.msra.mxu0 0.0
        %583 = vmatpush.xpose.msra.mxu0 0.0
        %584 = vmatpush.xpose.msra.mxu0 0.0
        %585 = vmatpush.xpose.msra.mxu0 0.0
        %586 = vmatpush.xpose.msra.mxu0 0.0
        %587 = vmatpush.xpose.msra.mxu0 0.0
        %588 = vmatpush.xpose.msra.mxu0 0.0
        %589 = vmatpush.xpose.msra.mxu0 0.0
        %590 = vmatpush.xpose.msra.mxu0 %v573
        %591 = vmatmul.f32.gmra.mxu0 %v571
        %v592 = vpop.f32.mrf.mxu0
        %v593 = vadd.f32 0.0, %v592
        %594 = vdwg.mxu0
        %v595 = vmul.f32 %v593, 0.25
        %v596 = vsel %vm489, %v595, -inf
        %597 = vmax.xlane.f32.xlu0 %v596
        %v598 = vpop.xlane.xlu0 %597
        %v599 = vsub.f32 %v595, %v598
        %v600 = vmul.f32 %v599, 1.442695
        %v601 = vpow.pop %v600
        %v602 = vsel %vm489, %v601, 0.0
        %603 = vadd.xlane.f32.xlu0 %v602
        %v604 = vpop.xlane.xlu0 %603
        %v605 = vrcp.pop %v604
        %v606 = vmul.f32 %v604, %v605
        %v607 = vsub.f32 1.0, %v606
        %v608 = vmul.f32 %v605, %v607
        %v609 = vadd.f32 %v605, %v608
        %vm610 = vweird.f32 %v604
        %vm611 = vweird.f32 %v605
        %vm612 = vmor %vm610, %vm611
        %v613 = vsel %vm612, %v605, %v609
        %v614 = vand.u32 2147483647, %v604
        %vm615 = vcmp.eq.f32.partialorder %v614, 8.507059e+37
        %v616 = vand.u32 %v604, 2147483648
        %v617 = vor.u32 1.1754944e-38, %v616
        %v618 = vsel %vm615, %v617, %v613
        %v619 = vmul.f32 %v601, %v618
        %620 = vrot.lane.b32.xlu0 %v453, 48
        %v621 = vpop.permute.xlu0 %620
        %v624 = vsel %vm489, %v619, 0
        %626 = vmatpush.msra.mxu0 0.0
        %627 = vmatpush.msra.mxu0 0.0
        %628 = vmatpush.msra.mxu0 0.0
        %629 = vmatpush.msra.mxu0 0.0
        %630 = vmatpush.msra.mxu0 0.0
        %631 = vmatpush.msra.mxu0 0.0
        %632 = vmatpush.msra.mxu0 0.0
        %633 = vmatpush.msra.mxu0 0.0
        %634 = vmatpush.msra.mxu0 0.0
        %635 = vmatpush.msra.mxu0 0.0
        %636 = vmatpush.msra.mxu0 0.0
        %637 = vmatpush.msra.mxu0 0.0
        %638 = vmatpush.msra.mxu0 0.0
        %639 = vmatpush.msra.mxu0 0.0
        %640 = vmatpush.msra.mxu0 0.0
        %641 = vmatpush.msra.mxu0 %v621
        %642 = vmatmul.f32.gmra.mxu0 %v624
        %v643 = vpop.f32.mrf.mxu0
        %v644 = vadd.f32 0.0, %v643
        %645 = vdwg.mxu0
        %v647 = vsel %vm463, %v644, 0
        %649 = vmatpush.msra.mxu0 0.0
        %650 = vmatpush.msra.mxu0 0.0
        %651 = vmatpush.msra.mxu0 0.0
        %652 = vmatpush.msra.mxu0 0.0
        %653 = vmatpush.msra.mxu0 0.0
        %654 = vmatpush.msra.mxu0 0.0
        %655 = vmatpush.msra.mxu0 0.0
        %656 = vmatpush.msra.mxu0 0.0
        %657 = vmatpush.msra.mxu0 0.0
        %658 = vmatpush.msra.mxu0 0.0
        %659 = vmatpush.msra.mxu0 0.0
        %660 = vmatpush.msra.mxu0 0.0
        %661 = vmatpush.msra.mxu0 0.0
        %662 = vmatpush.msra.mxu0 0.0
        %663 = vmatpush.msra.mxu0 %v458
        %664 = vmatpush.msra.mxu0 %v457
        %665 = vmatmul.f32.gmra.mxu0 %v647
        %v666 = vpop.f32.mrf.mxu0
        %v667 = vadd.f32 0.0, %v666
        %668 = vdwg.mxu0
        %v669 = vadd.f32 %v566, %v667
        %v670 = vld [vmem:[%s9] sm:$0xf]
        %v671 = vadd.f32 %v422, %v669
        %v672 = vsel %vm431, %v671, 0.0
        %673 = vadd.xlane.f32.xlu0 %v672
        %v674 = vpop.xlane.xlu0 %673
        %v675 = vrcp.pop 32.0
        %v676 = vmul.f32 32.0, %v675
        %v677 = vsub.f32 1.0, %v676
        %v678 = vmul.f32 %v675, %v677
        %v679 = vadd.f32 %v675, %v678
        %vm680 = vweird.f32 %v675
        %v681 = vsel %vm680, %v675, %v679
        %v682 = vmul.f32 %v674, %v681
        %v683 = vsub.f32 %v671, %v682
        %v684 = vmul.f32 %v683, %v683
        %v685 = vsel %vm431, %v684, 0.0
        %686 = vadd.xlane.f32.xlu0 %v685
        %v687 = vpop.xlane.xlu0 %686
        %v688 = vmul.f32 %v687, %v681
        %v689 = vadd.f32 %v688, 1e-05
        %v690 = vrsqrt.pop %v689
        %v691 = vmul.f32 %v690, %v689
        %v692 = vmul.f32 %v691, %v690
        %v693 = vmul.f32 0.5, %v692
        %v694 = vsub.f32 1.5, %v693
        %v695 = vmul.f32 %v690, %v694
        %vm696 = vweird.f32 %v689
        %vm697 = vweird.f32 %v690
        %vm698 = vmor %vm696, %vm697
        %v699 = vsel %vm698, %v690, %v695
        %v700 = vmul.f32 %v683, %v699
        %v701 = vperm.slane %v670, 0
        %v702 = vmul.f32 %v700, %v701
        %v703 = vperm.slane %v670, 1
        %v704 = vadd.f32 %v702, %v703
        %v705 = vld [vmem:[#allocation6] sm:$0xff]
        %v706 = vld [vmem:[#allocation6 + $0x8] sm:$0xff]
        %v707 = vld [vmem:[#allocation6 + $0x10] sm:$0xff]
        %v708 = vld [vmem:[#allocation6 + $0x18] sm:$0xff]
        %v709 = vld [vmem:[%s6] sm:$0x1]
        %v711 = vperm.slane %v709, 0
        %v714 = vsel %vm431, %v704, 0
        %716 = vmatpush.msra.mxu0 0.0
        %717 = vmatpush.msra.mxu0 0.0
        %718 = vmatpush.msra.mxu0 0.0
        %719 = vmatpush.msra.mxu0 0.0
        %720 = vmatpush.msra.mxu0 0.0
        %721 = vmatpush.msra.mxu0 0.0
        %722 = vmatpush.msra.mxu0 0.0
        %723 = vmatpush.msra.mxu0 0.0
        %724 = vmatpush.msra.mxu0 0.0
        %725 = vmatpush.msra.mxu0 0.0
        %726 = vmatpush.msra.mxu0 0.0
        %727 = vmatpush.msra.mxu0 0.0
        %728 = vmatpush.msra.mxu0 %v708
        %729 = vmatpush.msra.mxu0 %v707
        %730 = vmatpush.msra.mxu0 %v706
        %731 = vmatpush.msra.mxu0 %v705
        %732 = vmatmul.f32.gmra.mxu0 %v714
        %v733 = vpop.f32.mrf.mxu0
        %v734 = vadd.f32 %v711, %v733
        %735 = vdwg.mxu0
        %v736 = vmax.f32 %v734, 0.0
        %v737 = vld [vmem:[#allocation7] sm:$0xff]
        %v738 = vld [vmem:[#allocation7 + $0x8] sm:$0xff]
        %v739 = vld [vmem:[#allocation7 + $0x10] sm:$0xff]
        %v740 = vld [vmem:[#allocation7 + $0x18] sm:$0xff]
        %v741 = vld [vmem:[%s8] sm:$0x1]
        %v743 = vperm.slane %v741, 0
        %v746 = vsel %vm431, %v736, 0
        %748 = vmatpush.msra.mxu0 0.0
        %749 = vmatpush.msra.mxu0 0.0
        %750 = vmatpush.msra.mxu0 0.0
        %751 = vmatpush.msra.mxu0 0.0
        %752 = vmatpush.msra.mxu0 0.0
        %753 = vmatpush.msra.mxu0 0.0
        %754 = vmatpush.msra.mxu0 0.0
        %755 = vmatpush.msra.mxu0 0.0
        %756 = vmatpush.msra.mxu0 0.0
        %757 = vmatpush.msra.mxu0 0.0
        %758 = vmatpush.msra.mxu0 0.0
        %759 = vmatpush.msra.mxu0 0.0
        %760 = vmatpush.msra.mxu0 %v740
        %761 = vmatpush.msra.mxu0 %v739
        %762 = vmatpush.msra.mxu0 %v738
        %763 = vmatpush.msra.mxu0 %v737
        %764 = vmatmul.f32.gmra.mxu0 %v746
        %v765 = vpop.f32.mrf.mxu0
        %v766 = vadd.f32 %v743, %v765
        %767 = vdwg.mxu0
        %v768 = vadd.f32 %v704, %v766
        %v769 = vsel %vm431, %v768, 0.0
        %770 = vadd.xlane.f32.xlu0 %v769
        %v771 = vpop.xlane.xlu0 %770
        %v772 = vmul.f32 %v771, %v681
        %v773 = vsub.f32 %v768, %v772
        %v774 = vmul.f32 %v773, %v773
        %v775 = vsel %vm431, %v774, 0.0
        %776 = vadd.xlane.f32.xlu0 %v775
        %v777 = vpop.xlane.xlu0 %776
        %v778 = vmul.f32 %v777, %v681
        %v779 = vadd.f32 %v778, 1e-05
        %v780 = vrsqrt.pop %v779
        %v781 = vmul.f32 %v780, %v779
        %v782 = vmul.f32 %v781, %v780
        %v783 = vmul.f32 0.5, %v782
        %v784 = vsub.f32 1.5, %v783
        %v785 = vmul.f32 %v780, %v784
        %vm786 = vweird.f32 %v779
        %vm787 = vweird.f32 %v780
        %vm788 = vmor %vm786, %vm787
        %v789 = vsel %vm788, %v780, %v785
        %v790 = vmul.f32 %v773, %v789
        %v791 = vperm.slane %v670, 2
        %v792 = vmul.f32 %v790, %v791
        %v793 = vperm.slane %v670, 3
        %v794 = vadd.f32 %v792, %v793
        %795 = vst.msk [vmem:[%s421] sm:$0xff] %vm431, %v794
        %p796 = scmp.lt.s32.totalorder %s24, 1
        %s797 = scalar_select %p796, %s24, 1
        %s798 = smul.addr %s797, 8
        %s799 = scalar_lea.vmem %s10, %s798
        // Predicated region
        $region77: #{temperal_encoder_forward.4} parent=59 // pred_check
          %p800 = pneg %p257
        $region78: #{temperal_encoder_forward.4} parent=59 // pred_check_branch
          %802 = sbr.rel (%p800) target = $region80
        $region79: #{temperal_encoder_forward.4} parent=59 // pred_region
          _
        $region80: #{temperal_encoder_forward.4} parent=59 // pred_fallthru
          _
      $region60: #{temperal_encoder_forward.4} parent=5 // pred_fallthru
        _
      %p803 = scmp.le.s32.totalorder 2, %s19
      // Predicated region
      $region81: #{temperal_encoder_forward.4} parent=5 // pred_check
        %p804 = pneg %p803
      $region82: #{temperal_encoder_forward.4} parent=5 // pred_check_branch
        %806 = sbr.rel (%p804) target = $region84
      $region83: #{temperal_encoder_forward.4} parent=5 // pred_region
        %s807 = ssub.s32 %s19, 2
        // Predicated region
        $region85: #{temperal_encoder_forward.4} parent=83 // pred_check
          %p808 = pneg %p263
        $region86: #{temperal_encoder_forward.4} parent=83 // pred_check_branch
          %810 = sbr.rel (%p808) target = $region88
        $region87: #{temperal_encoder_forward.4} parent=83 // pred_region
          %p811 = scmp.lt.s32.totalorder %s25, 1
          %s812 = scalar_select %p811, %s25, 1
          %s813 = smul.addr %s812, 8
          %s814 = scalar_lea.vmem %s10, %s813
        $region88: #{temperal_encoder_forward.4} parent=83 // pred_fallthru
          _
      $region84: #{temperal_encoder_forward.4} parent=5 // pred_fallthru
        _
    $region6: #{temperal_encoder_forward.4} parent=1 // loop_footer
      %s23 = sadd.s32 1, %s19
    $region7: #{temperal_encoder_forward.4} parent=1 // loop_footer_branch
      %18 = sbr.rel target = $region3
    $region8: #{temperal_encoder_forward.4} parent=1 // loop_exit
      _
    %815 = vsyncpa [#allocation3], 1
    %s816 = scalar_lea.sflag [#allocation3], 1
    %817 = vsyncpa %s816, 1
    %818 = vsyncpa [#allocation5], 1
    %819 = vsyncpa [#allocation8], 1

// kernel: temperal_encoder_forward.5
$region0: #{temperal_encoder_forward.5}
  #allocation0 [shape = 'u32[]', space=smem, size = 0x4, offset = 0x4, fixed_abs, tag = 'smem constant byte address 0x4 - core index']
  #allocation1 [shape = 'u32[72,128]{1,0:T(1,128)}', space=vmem, size = 0x9000, scoped, tag = 'internal scratch']
  #allocation2 [shape = 'f32[8,96]{1,0:T(8,128)}', space=vmem, size = 0x1000, scoped, tag = 'scratch operand']
  #allocation3 [shape = 'f32[8,32]{1,0:T(8,128)}', space=vmem, size = 0x1000, scoped, tag = 'scratch operand']
  %s0 = inlined_call_operand.vmem [shape: f32[2,8,32], index: 0, kind: input, shape index: {}]
  %s1 = inlined_call_operand.vmem [shape: f32[2,8,32], index: 1, kind: input, shape index: {}]
  %s2 = inlined_call_operand.hbm [shape: f32[32,96], index: 2, kind: input, shape index: {}]
  %s3 = inlined_call_operand.hbm [shape: f32[32,96], index: 3, kind: input, shape index: {}]
  %s4 = inlined_call_operand.vmem [shape: f32[2,96], index: 4, kind: input, shape index: {}]
  %s5 = inlined_call_operand.hbm [shape: f32[32,32], index: 5, kind: input, shape index: {}]
  %s6 = inlined_call_operand.vmem [shape: f32[3,32], index: 6, kind: input, shape index: {}]
  %s7 = inlined_call_operand.hbm [shape: f32[2,8,32], index: 7, kind: output, shape index: {0}]
  %s8 = inlined_call_operand.hbm [shape: f32[2,1,32], index: 8, kind: output, shape index: {1}]
  %9 = xla_tuple %s7, %s8
  %s10 = sld [smem:[#allocation0]]
  $region81: #{temperal_encoder_forward.5} parent=0
    _
  %s12 = ssub.s32 1, %s10
  %s13 = scalar_select 0, %s12, %s10
  $region1: #{temperal_encoder_forward.5} parent=0
    #allocation4 [shape = 'u8[16384]{0}', space=vmem, size = 0x4000, scoped, tag = 'input window, operand 2, single buffered']
    #allocation5 [shape = 's32[2]{0}', space=sflag, size = 0x8, scoped, tag = 'scoped memory for temperal_encoder_forward.5']
    #allocation6 [shape = 's32[2]{0}', space=sflag, size = 0x8, scoped, tag = 'scoped memory for temperal_encoder_forward.5']
    #allocation7 [shape = 'u8[16384]{0}', space=vmem, size = 0x4000, scoped, tag = 'input window, operand 3, single buffered']
    #allocation8 [shape = 's32[1]{0}', space=sflag, size = 0x4, scoped, tag = 'scoped memory for temperal_encoder_forward.5']
    #allocation9 [shape = 'u8[16384]{0}', space=vmem, size = 0x4000, scoped, tag = 'input window, operand 5, single buffered']
    #allocation10 [shape = 'u8[8192]{0}', space=vmem, size = 0x2000, scoped, tag = 'output window, operand 0']
    #allocation11 [shape = 'u8[1024]{0}', space=vmem, size = 0x400, scoped, tag = 'output window, operand 1']
    #allocation12 [shape = 's32[2]{0}', space=sflag, size = 0x8, scoped, tag = 'scoped memory for temperal_encoder_forward.5']
    %14 = vsyncpa [#allocation5], 0
    %15 = vsyncpa [#allocation8], 0
    %16 = vsyncpa [#allocation6], 0
    %s17 = scalar_lea.sflag [#allocation6], 1
    %18 = vsyncpa %s17, 0
    %19 = vsyncpa [#allocation12], 0
    %s20 = scalar_lea.sflag [#allocation12], 1
    %21 = vsyncpa %s20, 0
    loop: start=0, step=1, limit=4
    $region2: #{temperal_encoder_forward.5} parent=1 // loop_pre_header
      _
    $region3: #{temperal_encoder_forward.5} parent=1 // loop_header
      %s23 = sphi 0, %s27
      %p24 = scmp.ge.s32.totalorder %s23, 4
      %s33 = sphi 0, %s35
      %s36 = sphi 0, %s33
      %s37 = sphi 0, %s36
      %s53 = sphi 0, %s37
      %s59 = sphi 0, %s61
      %s62 = sphi 0, %s59
      %s63 = sphi 0, %s62
      %s79 = sphi 0, %s63
      %s83 = sphi 0, %s83
      %s85 = sphi 0, %s83
      %s86 = sphi 0, %s85
      %s100 = sphi 0, %s86
      %s104 = sphi 0, %s104
      %s106 = sphi 0, %s104
      %s107 = sphi 0, %s106
      %s121 = sphi 0, %s107
      %s125 = sphi 0, %s125
      %s127 = sphi 0, %s125
      %s128 = sphi 0, %s127
      %s142 = sphi 0, %s128
      %s146 = sphi 0, %s146
      %s148 = sphi 0, %s146
      %s149 = sphi 0, %s148
      %s163 = sphi 0, %s149
      %s167 = sphi 0, %s167
      %s169 = sphi 0, %s167
      %s170 = sphi 0, %s169
      %s184 = sphi 0, %s170
      %s190 = sphi 0, %s192
      %s193 = sphi 0, %s190
      %s194 = sphi 0, %s193
      %s210 = sphi 0, %s194
      %s216 = sphi 0, %s218
      %s219 = sphi 0, %s216
      %s220 = sphi 0, %s219
      %s236 = sphi 0, %s220
    $region4: #{temperal_encoder_forward.5} parent=1 // loop_header_branch
      %26 = sbr.rel (%p24) target = $region8
    $region5: #{temperal_encoder_forward.5} parent=1 // loop_body
      %s28 = ssub.s32 %s23, 1
      %s29 = ssub.s32 %s23, 2
      %s30 = sadd.s32 %s23, 1
      %s31 = ssub.s32 %s23, %s30
      %p32 = scmp.eq.s32.totalorder %s31, 0
      %s34 = sadd.s32 %s33, 1
      %s35 = scalar_select %p32, %s33, %s34
      %p38 = pneg %p32
      %p39 = scmp.eq.s32.totalorder %s23, 1
      %p40 = por %p38, %p39
      %p41 = scmp.ne.s32.totalorder %s33, %s36
      %p42 = scmp.eq.s32.totalorder %s23, 0
      %p43 = por %p41, %p42
      %p44 = scmp.ne.s32.totalorder %s33, %s36
      %p45 = scmp.eq.s32.totalorder %s28, 1
      %p46 = por %p44, %p45
      %p47 = scmp.ne.s32.totalorder %s36, %s37
      %p48 = scmp.eq.s32.totalorder %s28, 0
      %p49 = por %p47, %p48
      %p50 = scmp.ne.s32.totalorder %s36, %s37
      %p51 = scmp.eq.s32.totalorder %s29, 1
      %p52 = por %p50, %p51
      %p54 = scmp.ne.s32.totalorder %s37, %s53
      %p55 = scmp.eq.s32.totalorder %s29, 0
      %p56 = por %p54, %p55
      %s57 = ssub.s32 %s23, %s30
      %p58 = scmp.eq.s32.totalorder %s57, 0
      %s60 = sadd.s32 %s59, 1
      %s61 = scalar_select %p58, %s59, %s60
      %p64 = pneg %p58
      %p65 = scmp.eq.s32.totalorder %s23, 1
      %p66 = por %p64, %p65
      %p67 = scmp.ne.s32.totalorder %s59, %s62
      %p68 = scmp.eq.s32.totalorder %s23, 0
      %p69 = por %p67, %p68
      %p70 = scmp.ne.s32.totalorder %s59, %s62
      %p71 = scmp.eq.s32.totalorder %s28, 1
      %p72 = por %p70, %p71
      %p73 = scmp.ne.s32.totalorder %s62, %s63
      %p74 = scmp.eq.s32.totalorder %s28, 0
      %p75 = por %p73, %p74
      %p76 = scmp.ne.s32.totalorder %s62, %s63
      %p77 = scmp.eq.s32.totalorder %s29, 1
      %p78 = por %p76, %p77
      %p80 = scmp.ne.s32.totalorder %s63, %s79
      %p81 = scmp.eq.s32.totalorder %s29, 0
      %p82 = por %p80, %p81
      %s84 = sadd.s32 %s83, 1
      %p87 = scmp.eq.s32.totalorder %s23, 1
      %p88 = scmp.ne.s32.totalorder %s83, %s85
      %p89 = scmp.eq.s32.totalorder %s23, 0
      %p90 = por %p88, %p89
      %p91 = scmp.ne.s32.totalorder %s83, %s85
      %p92 = scmp.eq.s32.totalorder %s28, 1
      %p93 = por %p91, %p92
      %p94 = scmp.ne.s32.totalorder %s85, %s86
      %p95 = scmp.eq.s32.totalorder %s28, 0
      %p96 = por %p94, %p95
      %p97 = scmp.ne.s32.totalorder %s85, %s86
      %p98 = scmp.eq.s32.totalorder %s29, 1
      %p99 = por %p97, %p98
      %p101 = scmp.ne.s32.totalorder %s86, %s100
      %p102 = scmp.eq.s32.totalorder %s29, 0
      %p103 = por %p101, %p102
      %s105 = sadd.s32 %s104, 1
      %p108 = scmp.eq.s32.totalorder %s23, 1
      %p109 = scmp.ne.s32.totalorder %s104, %s106
      %p110 = scmp.eq.s32.totalorder %s23, 0
      %p111 = por %p109, %p110
      %p112 = scmp.ne.s32.totalorder %s104, %s106
      %p113 = scmp.eq.s32.totalorder %s28, 1
      %p114 = por %p112, %p113
      %p115 = scmp.ne.s32.totalorder %s106, %s107
      %p116 = scmp.eq.s32.totalorder %s28, 0
      %p117 = por %p115, %p116
      %p118 = scmp.ne.s32.totalorder %s106, %s107
      %p119 = scmp.eq.s32.totalorder %s29, 1
      %p120 = por %p118, %p119
      %p122 = scmp.ne.s32.totalorder %s107, %s121
      %p123 = scmp.eq.s32.totalorder %s29, 0
      %p124 = por %p122, %p123
      %s126 = sadd.s32 %s125, 1
      %p129 = scmp.eq.s32.totalorder %s23, 1
      %p130 = scmp.ne.s32.totalorder %s125, %s127
      %p131 = scmp.eq.s32.totalorder %s23, 0
      %p132 = por %p130, %p131
      %p133 = scmp.ne.s32.totalorder %s125, %s127
      %p134 = scmp.eq.s32.totalorder %s28, 1
      %p135 = por %p133, %p134
      %p136 = scmp.ne.s32.totalorder %s127, %s128
      %p137 = scmp.eq.s32.totalorder %s28, 0
      %p138 = por %p136, %p137
      %p139 = scmp.ne.s32.totalorder %s127, %s128
      %p140 = scmp.eq.s32.totalorder %s29, 1
      %p141 = por %p139, %p140
      %p143 = scmp.ne.s32.totalorder %s128, %s142
      %p144 = scmp.eq.s32.totalorder %s29, 0
      %p145 = por %p143, %p144
      %s147 = sadd.s32 %s146, 1
      %p150 = scmp.eq.s32.totalorder %s23, 1
      %p151 = scmp.ne.s32.totalorder %s146, %s148
      %p152 = scmp.eq.s32.totalorder %s23, 0
      %p153 = por %p151, %p152
      %p154 = scmp.ne.s32.totalorder %s146, %s148
      %p155 = scmp.eq.s32.totalorder %s28, 1
      %p156 = por %p154, %p155
      %p157 = scmp.ne.s32.totalorder %s148, %s149
      %p158 = scmp.eq.s32.totalorder %s28, 0
      %p159 = por %p157, %p158
      %p160 = scmp.ne.s32.totalorder %s148, %s149
      %p161 = scmp.eq.s32.totalorder %s29, 1
      %p162 = por %p160, %p161
      %p164 = scmp.ne.s32.totalorder %s149, %s163
      %p165 = scmp.eq.s32.totalorder %s29, 0
      %p166 = por %p164, %p165
      %s168 = sadd.s32 %s167, 1
      %p171 = scmp.eq.s32.totalorder %s23, 1
      %p172 = scmp.ne.s32.totalorder %s167, %s169
      %p173 = scmp.eq.s32.totalorder %s23, 0
      %p174 = por %p172, %p173
      %p175 = scmp.ne.s32.totalorder %s167, %s169
      %p176 = scmp.eq.s32.totalorder %s28, 1
      %p177 = por %p175, %p176
      %p178 = scmp.ne.s32.totalorder %s169, %s170
      %p179 = scmp.eq.s32.totalorder %s28, 0
      %p180 = por %p178, %p179
      %p181 = scmp.ne.s32.totalorder %s169, %s170
      %p182 = scmp.eq.s32.totalorder %s29, 1
      %p183 = por %p181, %p182
      %p185 = scmp.ne.s32.totalorder %s170, %s184
      %p186 = scmp.eq.s32.totalorder %s29, 0
      %p187 = por %p185, %p186
      %s188 = ssub.s32 %s23, %s30
      %p189 = scmp.eq.s32.totalorder %s188, 0
      %s191 = sadd.s32 %s190, 1
      %s192 = scalar_select %p189, %s190, %s191
      %p195 = pneg %p189
      %p196 = scmp.eq.s32.totalorder %s23, 1
      %p197 = por %p195, %p196
      %p198 = scmp.ne.s32.totalorder %s190, %s193
      %p199 = scmp.eq.s32.totalorder %s23, 0
      %p200 = por %p198, %p199
      %p201 = scmp.ne.s32.totalorder %s190, %s193
      %p202 = scmp.eq.s32.totalorder %s28, 1
      %p203 = por %p201, %p202
      %p204 = scmp.ne.s32.totalorder %s193, %s194
      %p205 = scmp.eq.s32.totalorder %s28, 0
      %p206 = por %p204, %p205
      %p207 = scmp.ne.s32.totalorder %s193, %s194
      %p208 = scmp.eq.s32.totalorder %s29, 1
      %p209 = por %p207, %p208
      %p211 = scmp.ne.s32.totalorder %s194, %s210
      %p212 = scmp.eq.s32.totalorder %s29, 0
      %p213 = por %p211, %p212
      %s214 = ssub.s32 %s23, %s30
      %p215 = scmp.eq.s32.totalorder %s214, 0
      %s217 = sadd.s32 %s216, 1
      %s218 = scalar_select %p215, %s216, %s217
      %p221 = pneg %p215
      %p222 = scmp.eq.s32.totalorder %s23, 1
      %p223 = por %p221, %p222
      %p224 = scmp.ne.s32.totalorder %s216, %s219
      %p225 = scmp.eq.s32.totalorder %s23, 0
      %p226 = por %p224, %p225
      %p227 = scmp.ne.s32.totalorder %s216, %s219
      %p228 = scmp.eq.s32.totalorder %s28, 1
      %p229 = por %p227, %p228
      %p230 = scmp.ne.s32.totalorder %s219, %s220
      %p231 = scmp.eq.s32.totalorder %s28, 0
      %p232 = por %p230, %p231
      %p233 = scmp.ne.s32.totalorder %s219, %s220
      %p234 = scmp.eq.s32.totalorder %s29, 1
      %p235 = por %p233, %p234
      %p237 = scmp.ne.s32.totalorder %s220, %s236
      %p238 = scmp.eq.s32.totalorder %s29, 0
      %p239 = por %p237, %p238
      %p240 = scmp.le.s32.totalorder 1, %s23
      %p241 = scmp.lt.s32.totalorder %s23, 3
      %p242 = pnand %p240, %p241
      %p243 = pneg %p242
      // Predicated region
      $region9: #{temperal_encoder_forward.5} parent=5 // pred_check
        _
      $region10: #{temperal_encoder_forward.5} parent=5 // pred_check_branch
        %245 = sbr.rel (%p242) target = $region12
      $region11: #{temperal_encoder_forward.5} parent=5 // pred_region
        %s246 = ssub.s32 %s23, 1
        // Predicated region
        $region13: #{temperal_encoder_forward.5} parent=11 // pred_check
          %p247 = pneg %p96
        $region14: #{temperal_encoder_forward.5} parent=11 // pred_check_branch
          %249 = sbr.rel (%p247) target = $region16
        $region15: #{temperal_encoder_forward.5} parent=11 // pred_region
          %251 = vsyncadd [#allocation5], 0
          %s252 = sshll.u32 %s2, 4
          %s253 = int_to_ptr.hbm [resolvable:$true] %s252
          %s254 = sshll.u32 [#allocation4], 4
          %s255 = int_to_ptr.vmem [resolvable:$true] %s254
          %260 = dma.hbm_to_vmem [thread:$0]  %s253, 512, %s255, [#allocation5], 128, 128, 8
        $region16: #{temperal_encoder_forward.5} parent=11 // pred_fallthru
          _
        // Predicated region
        $region17: #{temperal_encoder_forward.5} parent=11 // pred_check
          %p261 = pneg %p117
        $region18: #{temperal_encoder_forward.5} parent=11 // pred_check_branch
          %263 = sbr.rel (%p261) target = $region20
        $region19: #{temperal_encoder_forward.5} parent=11 // pred_region
          %265 = vsyncadd [#allocation8], 0
          %s266 = sshll.u32 %s3, 4
          %s267 = int_to_ptr.hbm [resolvable:$true] %s266
          %s268 = sshll.u32 [#allocation7], 4
          %s269 = int_to_ptr.vmem [resolvable:$true] %s268
          %274 = dma.hbm_to_vmem [thread:$0]  %s267, 512, %s269, [#allocation8], 128, 128, 8
        $region20: #{temperal_encoder_forward.5} parent=11 // pred_fallthru
          _
        // Predicated region
        $region21: #{temperal_encoder_forward.5} parent=11 // pred_check
          %p275 = pneg %p138
        $region22: #{temperal_encoder_forward.5} parent=11 // pred_check_branch
          %277 = sbr.rel (%p275) target = $region24
        $region23: #{temperal_encoder_forward.5} parent=11 // pred_region
          _
        $region24: #{temperal_encoder_forward.5} parent=11 // pred_fallthru
          _
        // Predicated region
        $region25: #{temperal_encoder_forward.5} parent=11 // pred_check
          %p278 = pneg %p159
        $region26: #{temperal_encoder_forward.5} parent=11 // pred_check_branch
          %280 = sbr.rel (%p278) target = $region28
        $region27: #{temperal_encoder_forward.5} parent=11 // pred_region
          %282 = vsyncadd [#allocation8], 0
          %s283 = sshll.u32 %s5, 4
          %s284 = int_to_ptr.hbm [resolvable:$true] %s283
          %s285 = sshll.u32 [#allocation9], 4
          %s286 = int_to_ptr.vmem [resolvable:$true] %s285
          %291 = dma.hbm_to_vmem [thread:$0]  %s284, 512, %s286, [#allocation8], 128, 128, 8
        $region28: #{temperal_encoder_forward.5} parent=11 // pred_fallthru
          _
        // Predicated region
        $region29: #{temperal_encoder_forward.5} parent=11 // pred_check
          %p292 = pneg %p180
        $region30: #{temperal_encoder_forward.5} parent=11 // pred_check_branch
          %294 = sbr.rel (%p292) target = $region32
        $region31: #{temperal_encoder_forward.5} parent=11 // pred_region
          _
        $region32: #{temperal_encoder_forward.5} parent=11 // pred_fallthru
          _
      $region12: #{temperal_encoder_forward.5} parent=5 // pred_fallthru
        _
      %p295 = scmp.lt.s32.totalorder %s23, 2
      // Predicated region
      $region33: #{temperal_encoder_forward.5} parent=5 // pred_check
        %p296 = pneg %p295
      $region34: #{temperal_encoder_forward.5} parent=5 // pred_check_branch
        %298 = sbr.rel (%p296) target = $region36
      $region35: #{temperal_encoder_forward.5} parent=5 // pred_region
        // Predicated region
        $region37: #{temperal_encoder_forward.5} parent=35 // pred_check
          %p299 = pneg %p43
        $region38: #{temperal_encoder_forward.5} parent=35 // pred_check_branch
          %301 = sbr.rel (%p299) target = $region40
        $region39: #{temperal_encoder_forward.5} parent=35 // pred_region
          %p302 = scmp.lt.s32.totalorder %s23, 1
          %s303 = scalar_select %p302, %s23, 1
          %s304 = smul.addr %s303, 8
          %s305 = scalar_lea.vmem %s0, %s304
        $region40: #{temperal_encoder_forward.5} parent=35 // pred_fallthru
          _
        // Predicated region
        $region41: #{temperal_encoder_forward.5} parent=35 // pred_check
          %p306 = pneg %p69
        $region42: #{temperal_encoder_forward.5} parent=35 // pred_check_branch
          %308 = sbr.rel (%p306) target = $region44
        $region43: #{temperal_encoder_forward.5} parent=35 // pred_region
          %p309 = scmp.lt.s32.totalorder %s23, 1
          %s310 = scalar_select %p309, %s23, 1
          %s311 = smul.addr %s310, 8
          %s312 = scalar_lea.vmem %s1, %s311
        $region44: #{temperal_encoder_forward.5} parent=35 // pred_fallthru
          _
      $region36: #{temperal_encoder_forward.5} parent=5 // pred_fallthru
        _
      %p313 = scmp.le.s32.totalorder 1, %s23
      %p314 = scmp.lt.s32.totalorder %s23, 3
      %p315 = pnand %p313, %p314
      %p316 = pneg %p315
      // Predicated region
      $region45: #{temperal_encoder_forward.5} parent=5 // pred_check
        _
      $region46: #{temperal_encoder_forward.5} parent=5 // pred_check_branch
        %318 = sbr.rel (%p315) target = $region48
      $region47: #{temperal_encoder_forward.5} parent=5 // pred_region
        %s319 = ssub.s32 %s23, 1
        // Predicated region
        $region49: #{temperal_encoder_forward.5} parent=47 // pred_check
          %p320 = pneg %p96
        $region50: #{temperal_encoder_forward.5} parent=47 // pred_check_branch
          %322 = sbr.rel (%p320) target = $region52
        $region51: #{temperal_encoder_forward.5} parent=47 // pred_region
          %324 = dma.done [#allocation5], 512
        $region52: #{temperal_encoder_forward.5} parent=47 // pred_fallthru
          _
        // Predicated region
        $region53: #{temperal_encoder_forward.5} parent=47 // pred_check
          %p325 = pneg %p117
        $region54: #{temperal_encoder_forward.5} parent=47 // pred_check_branch
          %327 = sbr.rel (%p325) target = $region56
        $region55: #{temperal_encoder_forward.5} parent=47 // pred_region
          %329 = dma.done [#allocation8], 512
        $region56: #{temperal_encoder_forward.5} parent=47 // pred_fallthru
          _
        // Predicated region
        $region57: #{temperal_encoder_forward.5} parent=47 // pred_check
          %p330 = pneg %p159
        $region58: #{temperal_encoder_forward.5} parent=47 // pred_check_branch
          %332 = sbr.rel (%p330) target = $region60
        $region59: #{temperal_encoder_forward.5} parent=47 // pred_region
          %334 = dma.done [#allocation8], 512
        $region60: #{temperal_encoder_forward.5} parent=47 // pred_fallthru
          _
        %p335 = scmp.lt.s32.totalorder %s28, 1
        %s336 = scalar_select %p335, %s28, 1
        %s337 = smul.addr %s336, 8
        %s338 = scalar_lea.vmem %s0, %s337
        %p339 = pneg %p49
        %p340 = pneg %p46
        %p341 = scmp.lt.s32.totalorder %s28, 1
        %s342 = scalar_select %p341, %s28, 1
        %s343 = smul.addr %s342, 8
        %s344 = scalar_lea.vmem %s1, %s343
        %p345 = pneg %p75
        %p346 = pneg %p72
        %p347 = pneg %p96
        %p348 = pneg %p93
        %p349 = pneg %p117
        %p350 = pneg %p114
        %p351 = pneg %p138
        %p352 = pneg %p135
        %p353 = pneg %p159
        %p354 = pneg %p156
        %p355 = pneg %p180
        %p356 = pneg %p177
        %p357 = pneg %p206
        %p358 = pneg %p203
        %s359 = sand.u32 %s193, 1
        %s360 = scalar_lea.sflag [#allocation6], %s359
        %s361 = sand.u32 %s193, 1
        %s362 = smul.addr %s361, 8
        %s363 = scalar_lea.vmem [#allocation10], %s362
        %p364 = pneg %p232
        %p365 = pneg %p229
        %s366 = sand.u32 %s219, 1
        %s367 = scalar_lea.sflag [#allocation12], %s366
        %s368 = sand.u32 %s219, 1
        %s369 = scalar_lea.vmem [#allocation11], %s368
        %p370 = scmp.lt.s32.totalorder %s28, 1
        %s371 = scalar_select %p370, %s28, 1
        %s372 = smul.addr %s371, 8
        %s373 = scalar_lea.vmem %s0, %s372
        %p374 = scmp.lt.s32.totalorder %s28, 1
        %s375 = scalar_select %p374, %s28, 1
        %s376 = smul.addr %s375, 8
        %s377 = scalar_lea.vmem %s1, %s376
        %v378 = vld [vmem:[%s373] sm:$0xff]
        %v379 = vld [vmem:[%s377] sm:$0xff]
        %v380 = vadd.f32 %v378, %v379
        %v381 = vld [vmem:[#allocation4] sm:$0xff]
        %v382 = vld [vmem:[#allocation4 + $0x8] sm:$0xff]
        %v383 = vld [vmem:[#allocation4 + $0x10] sm:$0xff]
        %v384 = vld [vmem:[#allocation4 + $0x18] sm:$0xff]
        %v385 = vld [vmem:[#allocation7] sm:$0xff]
        %v386 = vld [vmem:[#allocation7 + $0x8] sm:$0xff]
        %v387 = vld [vmem:[#allocation7 + $0x10] sm:$0xff]
        %v388 = vld [vmem:[#allocation7 + $0x18] sm:$0xff]
        %v389 = vld [vmem:[%s4] sm:$0x1]
        %v390 = vld [vmem:[%s4 + $0x1] sm:$0x1]
        %v391 = vperm.slane %v389, 0
        %vm392 = vcmask 261120
        %v394 = vsel %vm392, %v380, 0
        %396 = vmatpush.msra.mxu0 0.0
        %397 = vmatpush.msra.mxu0 0.0
        %398 = vmatpush.msra.mxu0 0.0
        %399 = vmatpush.msra.mxu0 0.0
        %400 = vmatpush.msra.mxu0 0.0
        %401 = vmatpush.msra.mxu0 0.0
        %402 = vmatpush.msra.mxu0 0.0
        %403 = vmatpush.msra.mxu0 0.0
        %404 = vmatpush.msra.mxu0 0.0
        %405 = vmatpush.msra.mxu0 0.0
        %406 = vmatpush.msra.mxu0 0.0
        %407 = vmatpush.msra.mxu0 0.0
        %408 = vmatpush.msra.mxu0 %v384
        %409 = vmatpush.msra.mxu0 %v383
        %410 = vmatpush.msra.mxu0 %v382
        %411 = vmatpush.msra.mxu0 %v381
        %412 = vmatmul.f32.gmra.mxu0 %v394
        %v413 = vpop.f32.mrf.mxu0
        %v414 = vadd.f32 %v391, %v413
        %415 = vdwg.mxu0
        %vm416 = vcmask 785408
        %417 = vst.msk [vmem:[#allocation2] sm:$0xff] %vm416, %v414
        %v418 = vld [vmem:[#allocation2] sm:$0x1]
        %v420 = vsel %vm392, 0.0, 0
        %422 = vmatpush.msra.mxu0 0.0
        %423 = vmatpush.msra.mxu0 0.0
        %424 = vmatpush.msra.mxu0 0.0
        %425 = vmatpush.msra.mxu0 0.0
        %426 = vmatpush.msra.mxu0 0.0
        %427 = vmatpush.msra.mxu0 0.0
        %428 = vmatpush.msra.mxu0 0.0
        %429 = vmatpush.msra.mxu0 0.0
        %430 = vmatpush.msra.mxu0 0.0
        %431 = vmatpush.msra.mxu0 0.0
        %432 = vmatpush.msra.mxu0 0.0
        %433 = vmatpush.msra.mxu0 0.0
        %434 = vmatpush.msra.mxu0 %v388
        %435 = vmatpush.msra.mxu0 %v387
        %436 = vmatpush.msra.mxu0 %v386
        %437 = vmatpush.msra.mxu0 %v385
        %438 = vmatmul.f32.gmra.mxu0 %v420
        %v439 = vpop.f32.mrf.mxu0
        %v440 = vadd.f32 %v390, %v439
        %441 = vdwg.mxu0
        %v442 = vadd.f32 %v418, %v440
        %v443 = vxor.u32 %v442, 2147483648
        %v444 = vmul.f32 %v443, 1.442695
        %v445 = vpow.pop %v444
        %v446 = vadd.f32 %v445, 1.0
        %v447 = vrcp.pop %v446
        %v448 = vmul.f32 %v446, %v447
        %v449 = vsub.f32 1.0, %v448
        %v450 = vmul.f32 %v447, %v449
        %v451 = vadd.f32 %v447, %v450
        %vm452 = vweird.f32 %v446
        %vm453 = vweird.f32 %v447
        %vm454 = vmor %vm452, %vm453
        %v455 = vsel %vm454, %v447, %v451
        %v456 = vand.u32 2147483647, %v446
        %vm457 = vcmp.eq.f32.partialorder %v456, 8.507059e+37
        %v458 = vand.u32 %v446, 2147483648
        %v459 = vor.u32 1.1754944e-38, %v458
        %v460 = vsel %vm457, %v459, %v455
        %v461 = vmul.f32 1.0, %v460
        %463 = vrot.lane.b32.xlu0 %v440, 64
        %v464 = vpop.permute.xlu0 %463
        %v466 = vmul.f32 %v461, %v464
        %468 = vrot.lane.b32.xlu0 %v466, 64
        %v469 = vpop.permute.xlu0 %468
        %v471 = vadd.f32 %v418, %v469
        %v472 = vtanh.pop %v471
        %v473 = vsub.f32 1.0, %v461
        %475 = vrot.lane.b32.xlu0 %v472, 96
        %v476 = vpop.permute.xlu0 %475
        %v478 = vmul.f32 %v473, %v476
        %v479 = vmul.f32 %v461, 0.0
        %v480 = vadd.f32 %v478, %v479
        %482 = vrot.lane.b32.xlu0 %v480, 96
        %v483 = vpop.permute.xlu0 %482
        %vm485 = vcmask 253952
        %486 = vst.msk [vmem:[#allocation3] sm:$0x1] %vm485, %v483
        %v487 = vld [vmem:[#allocation2 + $0x1] sm:$0x1]
        %v488 = vsel %vm392, %v483, 0
        %490 = vmatpush.msra.mxu0 0.0
        %491 = vmatpush.msra.mxu0 0.0
        %492 = vmatpush.msra.mxu0 0.0
        %493 = vmatpush.msra.mxu0 0.0
        %494 = vmatpush.msra.mxu0 0.0
        %495 = vmatpush.msra.mxu0 0.0
        %496 = vmatpush.msra.mxu0 0.0
        %497 = vmatpush.msra.mxu0 0.0
        %498 = vmatpush.msra.mxu0 0.0
        %499 = vmatpush.msra.mxu0 0.0
        %500 = vmatpush.msra.mxu0 0.0
        %501 = vmatpush.msra.mxu0 0.0
        %502 = vmatpush.msra.mxu0 %v388
        %503 = vmatpush.msra.mxu0 %v387
        %504 = vmatpush.msra.mxu0 %v386
        %505 = vmatpush.msra.mxu0 %v385
        %506 = vmatmul.f32.gmra.mxu0 %v488
        %v507 = vpop.f32.mrf.mxu0
        %v508 = vadd.f32 %v390, %v507
        %509 = vdwg.mxu0
        %v510 = vadd.f32 %v487, %v508
        %v511 = vxor.u32 %v510, 2147483648
        %v512 = vmul.f32 %v511, 1.442695
        %v513 = vpow.pop %v512
        %v514 = vadd.f32 %v513, 1.0
        %v515 = vrcp.pop %v514
        %v516 = vmul.f32 %v514, %v515
        %v517 = vsub.f32 1.0, %v516
        %v518 = vmul.f32 %v515, %v517
        %v519 = vadd.f32 %v515, %v518
        %vm520 = vweird.f32 %v514
        %vm521 = vweird.f32 %v515
        %vm522 = vmor %vm520, %vm521
        %v523 = vsel %vm522, %v515, %v519
        %v524 = vand.u32 2147483647, %v514
        %vm525 = vcmp.eq.f32.partialorder %v524, 8.507059e+37
        %v526 = vand.u32 %v514, 2147483648
        %v527 = vor.u32 1.1754944e-38, %v526
        %v528 = vsel %vm525, %v527, %v523
        %v529 = vmul.f32 1.0, %v528
        %531 = vrot.lane.b32.xlu0 %v508, 64
        %v532 = vpop.permute.xlu0 %531
        %v534 = vmul.f32 %v529, %v532
        %536 = vrot.lane.b32.xlu0 %v534, 64
        %v537 = vpop.permute.xlu0 %536
        %v539 = vadd.f32 %v487, %v537
        %v540 = vtanh.pop %v539
        %v541 = vsub.f32 1.0, %v529
        %543 = vrot.lane.b32.xlu0 %v540, 96
        %v544 = vpop.permute.xlu0 %543
        %v546 = vmul.f32 %v541, %v544
        %v547 = vmul.f32 %v529, %v480
        %v548 = vadd.f32 %v546, %v547
        %550 = vrot.lane.b32.xlu0 %v548, 96
        %v551 = vpop.permute.xlu0 %550
        %553 = vst.msk [vmem:[#allocation3 + $0x1] sm:$0x1] %vm485, %v551
        %v554 = vld [vmem:[#allocation2 + $0x2] sm:$0x1]
        %v555 = vsel %vm392, %v551, 0
        %557 = vmatpush.msra.mxu0 0.0
        %558 = vmatpush.msra.mxu0 0.0
        %559 = vmatpush.msra.mxu0 0.0
        %560 = vmatpush.msra.mxu0 0.0
        %561 = vmatpush.msra.mxu0 0.0
        %562 = vmatpush.msra.mxu0 0.0
        %563 = vmatpush.msra.mxu0 0.0
        %564 = vmatpush.msra.mxu0 0.0
        %565 = vmatpush.msra.mxu0 0.0
        %566 = vmatpush.msra.mxu0 0.0
        %567 = vmatpush.msra.mxu0 0.0
        %568 = vmatpush.msra.mxu0 0.0
        %569 = vmatpush.msra.mxu0 %v388
        %570 = vmatpush.msra.mxu0 %v387
        %571 = vmatpush.msra.mxu0 %v386
        %572 = vmatpush.msra.mxu0 %v385
        %573 = vmatmul.f32.gmra.mxu0 %v555
        %v574 = vpop.f32.mrf.mxu0
        %v575 = vadd.f32 %v390, %v574
        %576 = vdwg.mxu0
        %v577 = vadd.f32 %v554, %v575
        %v578 = vxor.u32 %v577, 2147483648
        %v579 = vmul.f32 %v578, 1.442695
        %v580 = vpow.pop %v579
        %v581 = vadd.f32 %v580, 1.0
        %v582 = vrcp.pop %v581
        %v583 = vmul.f32 %v581, %v582
        %v584 = vsub.f32 1.0, %v583
        %v585 = vmul.f32 %v582, %v584
        %v586 = vadd.f32 %v582, %v585
        %vm587 = vweird.f32 %v581
        %vm588 = vweird.f32 %v582
        %vm589 = vmor %vm587, %vm588
        %v590 = vsel %vm589, %v582, %v586
        %v591 = vand.u32 2147483647, %v581
        %vm592 = vcmp.eq.f32.partialorder %v591, 8.507059e+37
        %v593 = vand.u32 %v581, 2147483648
        %v594 = vor.u32 1.1754944e-38, %v593
        %v595 = vsel %vm592, %v594, %v590
        %v596 = vmul.f32 1.0, %v595
        %598 = vrot.lane.b32.xlu0 %v575, 64
        %v599 = vpop.permute.xlu0 %598
        %v601 = vmul.f32 %v596, %v599
        %603 = vrot.lane.b32.xlu0 %v601, 64
        %v604 = vpop.permute.xlu0 %603
        %v606 = vadd.f32 %v554, %v604
        %v607 = vtanh.pop %v606
        %v608 = vsub.f32 1.0, %v596
        %610 = vrot.lane.b32.xlu0 %v607, 96
        %v611 = vpop.permute.xlu0 %610
        %v613 = vmul.f32 %v608, %v611
        %v614 = vmul.f32 %v596, %v548
        %v615 = vadd.f32 %v613, %v614
        %617 = vrot.lane.b32.xlu0 %v615, 96
        %v618 = vpop.permute.xlu0 %617
        %620 = vst.msk [vmem:[#allocation3 + $0x2] sm:$0x1] %vm485, %v618
        %v621 = vld [vmem:[#allocation2 + $0x3] sm:$0x1]
        %v622 = vsel %vm392, %v618, 0
        %624 = vmatpush.msra.mxu0 0.0
        %625 = vmatpush.msra.mxu0 0.0
        %626 = vmatpush.msra.mxu0 0.0
        %627 = vmatpush.msra.mxu0 0.0
        %628 = vmatpush.msra.mxu0 0.0
        %629 = vmatpush.msra.mxu0 0.0
        %630 = vmatpush.msra.mxu0 0.0
        %631 = vmatpush.msra.mxu0 0.0
        %632 = vmatpush.msra.mxu0 0.0
        %633 = vmatpush.msra.mxu0 0.0
        %634 = vmatpush.msra.mxu0 0.0
        %635 = vmatpush.msra.mxu0 0.0
        %636 = vmatpush.msra.mxu0 %v388
        %637 = vmatpush.msra.mxu0 %v387
        %638 = vmatpush.msra.mxu0 %v386
        %639 = vmatpush.msra.mxu0 %v385
        %640 = vmatmul.f32.gmra.mxu0 %v622
        %v641 = vpop.f32.mrf.mxu0
        %v642 = vadd.f32 %v390, %v641
        %643 = vdwg.mxu0
        %v644 = vadd.f32 %v621, %v642
        %v645 = vxor.u32 %v644, 2147483648
        %v646 = vmul.f32 %v645, 1.442695
        %v647 = vpow.pop %v646
        %v648 = vadd.f32 %v647, 1.0
        %v649 = vrcp.pop %v648
        %v650 = vmul.f32 %v648, %v649
        %v651 = vsub.f32 1.0, %v650
        %v652 = vmul.f32 %v649, %v651
        %v653 = vadd.f32 %v649, %v652
        %vm654 = vweird.f32 %v648
        %vm655 = vweird.f32 %v649
        %vm656 = vmor %vm654, %vm655
        %v657 = vsel %vm656, %v649, %v653
        %v658 = vand.u32 2147483647, %v648
        %vm659 = vcmp.eq.f32.partialorder %v658, 8.507059e+37
        %v660 = vand.u32 %v648, 2147483648
        %v661 = vor.u32 1.1754944e-38, %v660
        %v662 = vsel %vm659, %v661, %v657
        %v663 = vmul.f32 1.0, %v662
        %665 = vrot.lane.b32.xlu0 %v642, 64
        %v666 = vpop.permute.xlu0 %665
        %v668 = vmul.f32 %v663, %v666
        %670 = vrot.lane.b32.xlu0 %v668, 64
        %v671 = vpop.permute.xlu0 %670
        %v673 = vadd.f32 %v621, %v671
        %v674 = vtanh.pop %v673
        %v675 = vsub.f32 1.0, %v663
        %677 = vrot.lane.b32.xlu0 %v674, 96
        %v678 = vpop.permute.xlu0 %677
        %v680 = vmul.f32 %v675, %v678
        %v681 = vmul.f32 %v663, %v615
        %v682 = vadd.f32 %v680, %v681
        %684 = vrot.lane.b32.xlu0 %v682, 96
        %v685 = vpop.permute.xlu0 %684
        %687 = vst.msk [vmem:[#allocation3 + $0x3] sm:$0x1] %vm485, %v685
        %v688 = vld [vmem:[#allocation2 + $0x4] sm:$0x1]
        %v689 = vsel %vm392, %v685, 0
        %691 = vmatpush.msra.mxu0 0.0
        %692 = vmatpush.msra.mxu0 0.0
        %693 = vmatpush.msra.mxu0 0.0
        %694 = vmatpush.msra.mxu0 0.0
        %695 = vmatpush.msra.mxu0 0.0
        %696 = vmatpush.msra.mxu0 0.0
        %697 = vmatpush.msra.mxu0 0.0
        %698 = vmatpush.msra.mxu0 0.0
        %699 = vmatpush.msra.mxu0 0.0
        %700 = vmatpush.msra.mxu0 0.0
        %701 = vmatpush.msra.mxu0 0.0
        %702 = vmatpush.msra.mxu0 0.0
        %703 = vmatpush.msra.mxu0 %v388
        %704 = vmatpush.msra.mxu0 %v387
        %705 = vmatpush.msra.mxu0 %v386
        %706 = vmatpush.msra.mxu0 %v385
        %707 = vmatmul.f32.gmra.mxu0 %v689
        %v708 = vpop.f32.mrf.mxu0
        %v709 = vadd.f32 %v390, %v708
        %710 = vdwg.mxu0
        %v711 = vadd.f32 %v688, %v709
        %v712 = vxor.u32 %v711, 2147483648
        %v713 = vmul.f32 %v712, 1.442695
        %v714 = vpow.pop %v713
        %v715 = vadd.f32 %v714, 1.0
        %v716 = vrcp.pop %v715
        %v717 = vmul.f32 %v715, %v716
        %v718 = vsub.f32 1.0, %v717
        %v719 = vmul.f32 %v716, %v718
        %v720 = vadd.f32 %v716, %v719
        %vm721 = vweird.f32 %v715
        %vm722 = vweird.f32 %v716
        %vm723 = vmor %vm721, %vm722
        %v724 = vsel %vm723, %v716, %v720
        %v725 = vand.u32 2147483647, %v715
        %vm726 = vcmp.eq.f32.partialorder %v725, 8.507059e+37
        %v727 = vand.u32 %v715, 2147483648
        %v728 = vor.u32 1.1754944e-38, %v727
        %v729 = vsel %vm726, %v728, %v724
        %v730 = vmul.f32 1.0, %v729
        %732 = vrot.lane.b32.xlu0 %v709, 64
        %v733 = vpop.permute.xlu0 %732
        %v735 = vmul.f32 %v730, %v733
        %737 = vrot.lane.b32.xlu0 %v735, 64
        %v738 = vpop.permute.xlu0 %737
        %v740 = vadd.f32 %v688, %v738
        %v741 = vtanh.pop %v740
        %v742 = vsub.f32 1.0, %v730
        %744 = vrot.lane.b32.xlu0 %v741, 96
        %v745 = vpop.permute.xlu0 %744
        %v747 = vmul.f32 %v742, %v745
        %v748 = vmul.f32 %v730, %v682
        %v749 = vadd.f32 %v747, %v748
        %751 = vrot.lane.b32.xlu0 %v749, 96
        %v752 = vpop.permute.xlu0 %751
        %754 = vst.msk [vmem:[#allocation3 + $0x4] sm:$0x1] %vm485, %v752
        %v755 = vld [vmem:[#allocation2 + $0x5] sm:$0x1]
        %v756 = vsel %vm392, %v752, 0
        %758 = vmatpush.msra.mxu0 0.0
        %759 = vmatpush.msra.mxu0 0.0
        %760 = vmatpush.msra.mxu0 0.0
        %761 = vmatpush.msra.mxu0 0.0
        %762 = vmatpush.msra.mxu0 0.0
        %763 = vmatpush.msra.mxu0 0.0
        %764 = vmatpush.msra.mxu0 0.0
        %765 = vmatpush.msra.mxu0 0.0
        %766 = vmatpush.msra.mxu0 0.0
        %767 = vmatpush.msra.mxu0 0.0
        %768 = vmatpush.msra.mxu0 0.0
        %769 = vmatpush.msra.mxu0 0.0
        %770 = vmatpush.msra.mxu0 %v388
        %771 = vmatpush.msra.mxu0 %v387
        %772 = vmatpush.msra.mxu0 %v386
        %773 = vmatpush.msra.mxu0 %v385
        %774 = vmatmul.f32.gmra.mxu0 %v756
        %v775 = vpop.f32.mrf.mxu0
        %v776 = vadd.f32 %v390, %v775
        %777 = vdwg.mxu0
        %v778 = vadd.f32 %v755, %v776
        %v779 = vxor.u32 %v778, 2147483648
        %v780 = vmul.f32 %v779, 1.442695
        %v781 = vpow.pop %v780
        %v782 = vadd.f32 %v781, 1.0
        %v783 = vrcp.pop %v782
        %v784 = vmul.f32 %v782, %v783
        %v785 = vsub.f32 1.0, %v784
        %v786 = vmul.f32 %v783, %v785
        %v787 = vadd.f32 %v783, %v786
        %vm788 = vweird.f32 %v782
        %vm789 = vweird.f32 %v783
        %vm790 = vmor %vm788, %vm789
        %v791 = vsel %vm790, %v783, %v787
        %v792 = vand.u32 2147483647, %v782
        %vm793 = vcmp.eq.f32.partialorder %v792, 8.507059e+37
        %v794 = vand.u32 %v782, 2147483648
        %v795 = vor.u32 1.1754944e-38, %v794
        %v796 = vsel %vm793, %v795, %v791
        %v797 = vmul.f32 1.0, %v796
        %799 = vrot.lane.b32.xlu0 %v776, 64
        %v800 = vpop.permute.xlu0 %799
        %v802 = vmul.f32 %v797, %v800
        %804 = vrot.lane.b32.xlu0 %v802, 64
        %v805 = vpop.permute.xlu0 %804
        %v807 = vadd.f32 %v755, %v805
        %v808 = vtanh.pop %v807
        %v809 = vsub.f32 1.0, %v797
        %811 = vrot.lane.b32.xlu0 %v808, 96
        %v812 = vpop.permute.xlu0 %811
        %v814 = vmul.f32 %v809, %v812
        %v815 = vmul.f32 %v797, %v749
        %v816 = vadd.f32 %v814, %v815
        %818 = vrot.lane.b32.xlu0 %v816, 96
        %v819 = vpop.permute.xlu0 %818
        %821 = vst.msk [vmem:[#allocation3 + $0x5] sm:$0x1] %vm485, %v819
        %v822 = vld [vmem:[#allocation2 + $0x6] sm:$0x1]
        %v823 = vsel %vm392, %v819, 0
        %825 = vmatpush.msra.mxu0 0.0
        %826 = vmatpush.msra.mxu0 0.0
        %827 = vmatpush.msra.mxu0 0.0
        %828 = vmatpush.msra.mxu0 0.0
        %829 = vmatpush.msra.mxu0 0.0
        %830 = vmatpush.msra.mxu0 0.0
        %831 = vmatpush.msra.mxu0 0.0
        %832 = vmatpush.msra.mxu0 0.0
        %833 = vmatpush.msra.mxu0 0.0
        %834 = vmatpush.msra.mxu0 0.0
        %835 = vmatpush.msra.mxu0 0.0
        %836 = vmatpush.msra.mxu0 0.0
        %837 = vmatpush.msra.mxu0 %v388
        %838 = vmatpush.msra.mxu0 %v387
        %839 = vmatpush.msra.mxu0 %v386
        %840 = vmatpush.msra.mxu0 %v385
        %841 = vmatmul.f32.gmra.mxu0 %v823
        %v842 = vpop.f32.mrf.mxu0
        %v843 = vadd.f32 %v390, %v842
        %844 = vdwg.mxu0
        %v845 = vadd.f32 %v822, %v843
        %v846 = vxor.u32 %v845, 2147483648
        %v847 = vmul.f32 %v846, 1.442695
        %v848 = vpow.pop %v847
        %v849 = vadd.f32 %v848, 1.0
        %v850 = vrcp.pop %v849
        %v851 = vmul.f32 %v849, %v850
        %v852 = vsub.f32 1.0, %v851
        %v853 = vmul.f32 %v850, %v852
        %v854 = vadd.f32 %v850, %v853
        %vm855 = vweird.f32 %v849
        %vm856 = vweird.f32 %v850
        %vm857 = vmor %vm855, %vm856
        %v858 = vsel %vm857, %v850, %v854
        %v859 = vand.u32 2147483647, %v849
        %vm860 = vcmp.eq.f32.partialorder %v859, 8.507059e+37
        %v861 = vand.u32 %v849, 2147483648
        %v862 = vor.u32 1.1754944e-38, %v861
        %v863 = vsel %vm860, %v862, %v858
        %v864 = vmul.f32 1.0, %v863
        %866 = vrot.lane.b32.xlu0 %v843, 64
        %v867 = vpop.permute.xlu0 %866
        %v869 = vmul.f32 %v864, %v867
        %871 = vrot.lane.b32.xlu0 %v869, 64
        %v872 = vpop.permute.xlu0 %871
        %v874 = vadd.f32 %v822, %v872
        %v875 = vtanh.pop %v874
        %v876 = vsub.f32 1.0, %v864
        %878 = vrot.lane.b32.xlu0 %v875, 96
        %v879 = vpop.permute.xlu0 %878
        %v881 = vmul.f32 %v876, %v879
        %v882 = vmul.f32 %v864, %v816
        %v883 = vadd.f32 %v881, %v882
        %885 = vrot.lane.b32.xlu0 %v883, 96
        %v886 = vpop.permute.xlu0 %885
        %888 = vst.msk [vmem:[#allocation3 + $0x6] sm:$0x1] %vm485, %v886
        %v889 = vld [vmem:[#allocation2 + $0x7] sm:$0x1]
        %v890 = vsel %vm392, %v886, 0
        %892 = vmatpush.msra.mxu0 0.0
        %893 = vmatpush.msra.mxu0 0.0
        %894 = vmatpush.msra.mxu0 0.0
        %895 = vmatpush.msra.mxu0 0.0
        %896 = vmatpush.msra.mxu0 0.0
        %897 = vmatpush.msra.mxu0 0.0
        %898 = vmatpush.msra.mxu0 0.0
        %899 = vmatpush.msra.mxu0 0.0
        %900 = vmatpush.msra.mxu0 0.0
        %901 = vmatpush.msra.mxu0 0.0
        %902 = vmatpush.msra.mxu0 0.0
        %903 = vmatpush.msra.mxu0 0.0
        %904 = vmatpush.msra.mxu0 %v388
        %905 = vmatpush.msra.mxu0 %v387
        %906 = vmatpush.msra.mxu0 %v386
        %907 = vmatpush.msra.mxu0 %v385
        %908 = vmatmul.f32.gmra.mxu0 %v890
        %v909 = vpop.f32.mrf.mxu0
        %v910 = vadd.f32 %v390, %v909
        %911 = vdwg.mxu0
        %v912 = vadd.f32 %v889, %v910
        %v913 = vxor.u32 %v912, 2147483648
        %v914 = vmul.f32 %v913, 1.442695
        %v915 = vpow.pop %v914
        %v916 = vadd.f32 %v915, 1.0
        %v917 = vrcp.pop %v916
        %v918 = vmul.f32 %v916, %v917
        %v919 = vsub.f32 1.0, %v918
        %v920 = vmul.f32 %v917, %v919
        %v921 = vadd.f32 %v917, %v920
        %vm922 = vweird.f32 %v916
        %vm923 = vweird.f32 %v917
        %vm924 = vmor %vm922, %vm923
        %v925 = vsel %vm924, %v917, %v921
        %v926 = vand.u32 2147483647, %v916
        %vm927 = vcmp.eq.f32.partialorder %v926, 8.507059e+37
        %v928 = vand.u32 %v916, 2147483648
        %v929 = vor.u32 1.1754944e-38, %v928
        %v930 = vsel %vm927, %v929, %v925
        %v931 = vmul.f32 1.0, %v930
        %933 = vrot.lane.b32.xlu0 %v910, 64
        %v934 = vpop.permute.xlu0 %933
        %v936 = vmul.f32 %v931, %v934
        %938 = vrot.lane.b32.xlu0 %v936, 64
        %v939 = vpop.permute.xlu0 %938
        %v941 = vadd.f32 %v889, %v939
        %v942 = vtanh.pop %v941
        %v943 = vsub.f32 1.0, %v931
        %945 = vrot.lane.b32.xlu0 %v942, 96
        %v946 = vpop.permute.xlu0 %945
        %v948 = vmul.f32 %v943, %v946
        %v949 = vmul.f32 %v931, %v883
        %v950 = vadd.f32 %v948, %v949
        %952 = vrot.lane.b32.xlu0 %v950, 96
        %v953 = vpop.permute.xlu0 %952
        %955 = vst.msk [vmem:[#allocation3 + $0x7] sm:$0x1] %vm485, %v953
        %956 = vst.msk [vmem:[%s369] sm:$0x1] %vm485, %v953
        %v957 = vld [vmem:[#allocation3] sm:$0xff]
        %v958 = vld [vmem:[%s6] sm:$0x7]
        %v959 = vld [vmem:[#allocation9] sm:$0xff]
        %v960 = vld [vmem:[#allocation9 + $0x8] sm:$0xff]
        %v961 = vld [vmem:[#allocation9 + $0x10] sm:$0xff]
        %v962 = vld [vmem:[#allocation9 + $0x18] sm:$0xff]
        %v963 = vperm.slane %v958, 0
        %v965 = vsel %vm392, %v957, 0
        %967 = vmatpush.msra.mxu0 0.0
        %968 = vmatpush.msra.mxu0 0.0
        %969 = vmatpush.msra.mxu0 0.0
        %970 = vmatpush.msra.mxu0 0.0
        %971 = vmatpush.msra.mxu0 0.0
        %972 = vmatpush.msra.mxu0 0.0
        %973 = vmatpush.msra.mxu0 0.0
        %974 = vmatpush.msra.mxu0 0.0
        %975 = vmatpush.msra.mxu0 0.0
        %976 = vmatpush.msra.mxu0 0.0
        %977 = vmatpush.msra.mxu0 0.0
        %978 = vmatpush.msra.mxu0 0.0
        %979 = vmatpush.msra.mxu0 %v962
        %980 = vmatpush.msra.mxu0 %v961
        %981 = vmatpush.msra.mxu0 %v960
        %982 = vmatpush.msra.mxu0 %v959
        %983 = vmatmul.f32.gmra.mxu0 %v965
        %v984 = vpop.f32.mrf.mxu0
        %v985 = vadd.f32 %v963, %v984
        %986 = vdwg.mxu0
        %v987 = vsel %vm392, %v985, 0.0
        %988 = vadd.xlane.f32.xlu0 %v987
        %v989 = vpop.xlane.xlu0 %988
        %v990 = vrcp.pop 32.0
        %v991 = vmul.f32 32.0, %v990
        %v992 = vsub.f32 1.0, %v991
        %v993 = vmul.f32 %v990, %v992
        %v994 = vadd.f32 %v990, %v993
        %vm995 = vweird.f32 %v990
        %v996 = vsel %vm995, %v990, %v994
        %v997 = vmul.f32 %v989, %v996
        %v998 = vsub.f32 %v985, %v997
        %v999 = vmul.f32 %v998, %v998
        %v1000 = vsel %vm392, %v999, 0.0
        %1001 = vadd.xlane.f32.xlu0 %v1000
        %v1002 = vpop.xlane.xlu0 %1001
        %v1003 = vmul.f32 %v1002, %v996
        %v1004 = vadd.f32 %v1003, 1e-05
        %v1005 = vrsqrt.pop %v1004
        %v1006 = vmul.f32 %v1005, %v1004
        %v1007 = vmul.f32 %v1006, %v1005
        %v1008 = vmul.f32 0.5, %v1007
        %v1009 = vsub.f32 1.5, %v1008
        %v1010 = vmul.f32 %v1005, %v1009
        %vm1011 = vweird.f32 %v1004
        %vm1012 = vweird.f32 %v1005
        %vm1013 = vmor %vm1011, %vm1012
        %v1014 = vsel %vm1013, %v1005, %v1010
        %v1015 = vmul.f32 %v998, %v1014
        %v1016 = vperm.slane %v958, 1
        %v1017 = vmul.f32 %v1015, %v1016
        %v1018 = vperm.slane %v958, 2
        %v1019 = vadd.f32 %v1017, %v1018
        %v1020 = vmax.f32 %v1019, 0.0
        %v1021 = vadd.f32 %v1020, %v957
        %1022 = vst.msk [vmem:[%s363] sm:$0xff] %vm392, %v1021
        %s1023 = sand.u32 %s193, 1
        %s1024 = scalar_lea.sflag [#allocation6], %s1023
        %s1025 = sand.u32 %s193, 1
        %s1026 = smul.addr %s1025, 8
        %s1027 = scalar_lea.vmem [#allocation10], %s1026
        %s1028 = sand.u32 %s219, 1
        %s1029 = scalar_lea.sflag [#allocation12], %s1028
        %s1030 = sand.u32 %s219, 1
        %s1031 = scalar_lea.vmem [#allocation11], %s1030
        // Predicated region
        $region61: #{temperal_encoder_forward.5} parent=47 // pred_check
          %p1032 = pneg %p203
        $region62: #{temperal_encoder_forward.5} parent=47 // pred_check_branch
          %1034 = sbr.rel (%p1032) target = $region64
        $region63: #{temperal_encoder_forward.5} parent=47 // pred_region
          %1036 = vsyncadd %s1024, 0
          %s1037 = smul.addr %s28, 8
          %s1038 = scalar_lea.hbm %s7, %s1037
          %s1040 = sshll.u32 %s1027, 4
          %s1041 = int_to_ptr.vmem [resolvable:$true] %s1040
          %s1042 = sshll.u32 %s1038, 4
          %s1043 = int_to_ptr.hbm [resolvable:$true] %s1042
          %1045 = dma.vmem_to_hbm [thread:$0]  %s1041, 128, %s1043, %s1024
        $region64: #{temperal_encoder_forward.5} parent=47 // pred_fallthru
          _
        // Predicated region
        $region65: #{temperal_encoder_forward.5} parent=47 // pred_check
          %p1046 = pneg %p229
        $region66: #{temperal_encoder_forward.5} parent=47 // pred_check_branch
          %1048 = sbr.rel (%p1046) target = $region68
        $region67: #{temperal_encoder_forward.5} parent=47 // pred_region
          %1050 = vsyncadd %s1029, 0
          %s1051 = scalar_lea.hbm %s8, %s28
          %s1053 = sshll.u32 %s1031, 4
          %s1054 = int_to_ptr.vmem [resolvable:$true] %s1053
          %s1055 = sshll.u32 %s1051, 4
          %s1056 = int_to_ptr.hbm [resolvable:$true] %s1055
          %1058 = dma.vmem_to_hbm [thread:$0]  %s1054, 16, %s1056, %s1029
        $region68: #{temperal_encoder_forward.5} parent=47 // pred_fallthru
          _
      $region48: #{temperal_encoder_forward.5} parent=5 // pred_fallthru
        _
      %p1059 = scmp.le.s32.totalorder 2, %s23
      // Predicated region
      $region69: #{temperal_encoder_forward.5} parent=5 // pred_check
        %p1060 = pneg %p1059
      $region70: #{temperal_encoder_forward.5} parent=5 // pred_check_branch
        %1062 = sbr.rel (%p1060) target = $region72
      $region71: #{temperal_encoder_forward.5} parent=5 // pred_region
        %s1063 = ssub.s32 %s23, 2
        // Predicated region
        $region73: #{temperal_encoder_forward.5} parent=71 // pred_check
          %p1064 = pneg %p209
        $region74: #{temperal_encoder_forward.5} parent=71 // pred_check_branch
          %1066 = sbr.rel (%p1064) target = $region76
        $region75: #{temperal_encoder_forward.5} parent=71 // pred_region
          %s1067 = sand.u32 %s194, 1
          %s1068 = scalar_lea.sflag [#allocation6], %s1067
          %s1069 = sand.u32 %s194, 1
          %s1070 = smul.addr %s1069, 8
          %s1071 = scalar_lea.vmem [#allocation10], %s1070
          %1073 = dma.done %s1068, 128
        $region76: #{temperal_encoder_forward.5} parent=71 // pred_fallthru
          _
        // Predicated region
        $region77: #{temperal_encoder_forward.5} parent=71 // pred_check
          %p1074 = pneg %p235
        $region78: #{temperal_encoder_forward.5} parent=71 // pred_check_branch
          %1076 = sbr.rel (%p1074) target = $region80
        $region79: #{temperal_encoder_forward.5} parent=71 // pred_region
          %s1077 = sand.u32 %s220, 1
          %s1078 = scalar_lea.sflag [#allocation12], %s1077
          %s1079 = sand.u32 %s220, 1
          %s1080 = scalar_lea.vmem [#allocation11], %s1079
          %1082 = dma.done %s1078, 16
        $region80: #{temperal_encoder_forward.5} parent=71 // pred_fallthru
          _
      $region72: #{temperal_encoder_forward.5} parent=5 // pred_fallthru
        _
    $region6: #{temperal_encoder_forward.5} parent=1 // loop_footer
      %s27 = sadd.s32 1, %s23
    $region7: #{temperal_encoder_forward.5} parent=1 // loop_footer_branch
      %22 = sbr.rel target = $region3
    $region8: #{temperal_encoder_forward.5} parent=1 // loop_exit
      _
    %1083 = vsyncpa [#allocation5], 1
    %s1084 = scalar_lea.sflag [#allocation5], 1
    %1085 = vsyncpa %s1084, 1
    %1086 = vsyncpa [#allocation8], 1
    %1087 = vsyncpa [#allocation6], 1
    %s1088 = scalar_lea.sflag [#allocation6], 1
    %1089 = vsyncpa %s1088, 1
    %1090 = vsyncpa [#allocation12], 1
    %s1091 = scalar_lea.sflag [#allocation12], 1
    %1092 = vsyncpa %s1091, 1

</llo_original>
